<compile_context>
chip_gen: v6e
topology: v6e:2x2x1
jax: 0.10.0
libtpu: 0.0.40
codegen_flags: <defaults>
</compile_context>

<pallas_src>
import math

import jax
import jax.numpy as jnp
from jax.experimental import pallas as pl
from jax.experimental.pallas import tpu as pltpu

NUM_HEADS = 8
QK_DIM = 32
V_DIM = 64


def _transformer_block_kernel(xsc_ref, xcs_ref,
                              wq_ref, bq_ref, wk_ref, bk_ref, wv_ref, bv_ref,
                              wp_ref, bp_ref, w1_ref, b1_ref, w2_ref, b2_ref,
                              o_ref, q_scr, k_scr, v_scr, attn_scr):
    """One (batch, query-block) step of SimpleTransformerBlock.forward.

    xsc_ref: [1, SB, Cin]   query-block of the input, sequence-major (Q path)
    xcs_ref: [1, Cin, S]    full input, channel-major (K/V path)
    wq_ref:  [Cin, NH*QK]   pre-squared all-head q weights, bq_ref: [1, NH*QK]
    wk_ref:  [NH*QK, Cin]   pre-squared all-head k weights, bk_ref: [NH*QK, 1]
    wv_ref:  [NH*VD, Cin]   pre-squared all-head v weights, bv_ref: [NH*VD, 1]
    wp_ref:  [out_ch, NH*VD]     pre-squared proj weights,  bp_ref: [out_ch, 1]
    w1_ref:  [4*out_ch, out_ch]  pre-squared ffn1 weights,  b1_ref: [4*out_ch, 1]
    w2_ref:  [out_ch, 4*out_ch]  pre-squared ffn2 weights,  b2_ref: [out_ch, 1]
    o_ref:   [1, out_ch, SB]     output block (channel-major, lane-dense)
    q_scr:   VMEM [NH, SB, QK]   per-head Q (sequence-major)
    k_scr:   VMEM [NH*QK, S]     all-head K (channel-major)
    v_scr:   VMEM [NH*VD, S]     all-head V (channel-major)
    attn_scr: VMEM [NH*VD, SB]   concatenated attention output
    """
    f32 = jnp.float32
    x_sc = xsc_ref[0].astype(f32)            # [SB, Cin]
    x_cs = xcs_ref[0].astype(f32)            # [Cin, S]

    nh, sb, qk = q_scr.shape
    vd = v_scr.shape[0] // nh
    s_keys = x_cs.shape[1]
    scale = qk ** -0.5                       # sdpa default: 1/sqrt(E), E = QK_DIM

    def mm(a, b):            # a @ b            (contract a.-1 with b.0)
        return jax.lax.dot_general(a, b, (((1,), (0,)), ((), ())),
                                   preferred_element_type=f32)

    def mm_t(a, b):          # a @ b.T          (contract last dims)
        return jax.lax.dot_general(a, b, (((1,), (1,)), ((), ())),
                                   preferred_element_type=f32)

    # ---- fused all-head Q/K/V projections (3 matmuls total) ----
    q_all = mm(x_sc, wq_ref[...].astype(f32)) + bq_ref[...].astype(f32)       # [SB, NH*QK]
    k_scr[...] = mm(wk_ref[...].astype(f32), x_cs) + bk_ref[...].astype(f32)  # [NH*QK, S]
    v_scr[...] = mm(wv_ref[...].astype(f32), x_cs) + bv_ref[...].astype(f32)  # [NH*VD, S]

    # Head-major staging of Q so the head loop can index it dynamically.
    for h in range(nh):                                  # static: cheap lane slices
        q_scr[h] = q_all[:, h * qk:(h + 1) * qk]         # [SB, QK]

    ones_row = jnp.ones((1, s_keys), f32)                # loop-invariant

    # ---- multi-head attention: bounded head loop, deferred normalization ----
    @pl.loop(0, nh)
    def _head(h):
        co = pl.multiple_of(h * qk, qk)
        vo = pl.multiple_of(h * vd, vd)
        q_h = q_scr[h]                                   # [SB, QK]
        k_h = k_scr[pl.ds(co, qk), :]                    # [QK, S]
        v_h = v_scr[pl.ds(vo, vd), :]                    # [VD, S]

        s = mm(q_h, k_h) * scale                         # [SB, S]
        m = jnp.max(s, axis=-1, keepdims=True)
        p = jnp.exp(s - m)                               # unnormalized numerator

        pv = mm_t(v_h, p)                                # [VD, SB]
        l = mm_t(ones_row, p)                            # [1, SB] softmax denominator
        attn_scr[pl.ds(vo, vd), :] = pv * pl.reciprocal(l, approx=False)

    attn = attn_scr[...]                                 # [NH*VD, SB]

    # ---- proj (1x1 conv, K = NH*VD = 512) ----
    o1 = mm(wp_ref[...].astype(f32), attn) + bp_ref[...].astype(f32)          # [out_ch, SB]

    # ---- FFN: conv1x1 -> exact GELU -> conv1x1 ----
    h1 = mm(w1_ref[...].astype(f32), o1) + b1_ref[...].astype(f32)            # [4*out_ch, SB]
    inv_sqrt2 = f32(0.7071067811865476)
    h1 = 0.5 * h1 * (1.0 + jax.lax.erf(h1 * inv_sqrt2))                       # nn.GELU() (exact)
    o2 = mm(w2_ref[...].astype(f32), h1) + b2_ref[...].astype(f32)            # [out_ch, SB]

    o_ref[0] = o2.astype(o_ref.dtype)


@jax.jit
def simple_transformer_block(x, wq, bq, wk, bk, wv, bv, wp, bp, wf1, bf1, wf2, bf2):
    """SimpleTransformerBlock.forward.  x: [N, in_ch, H, W] -> [N, out_ch, H, W].

    Conv weights are torch-shaped [Cout, Cin, 1, 1], biases are [Cout].
    """
    N, Cin, H, W = x.shape
    S = H * W
    NH, QK, VD = NUM_HEADS, QK_DIM, V_DIM
    out_ch = wp.shape[0]
    f32 = jnp.float32

    # Split the query rows so both v7x TensorCores get work even when N is 1/odd.
    q_split = 2 if (S % 2 == 0 and (S // 2) % 8 == 0) else 1
    SB = S // q_split

    # Input in both layouts (tiny; avoids any in-kernel transpose).
    x_cs = x.reshape(N, Cin, S)                          # channel-major [N, Cin, S]
    x_sc = jnp.transpose(x_cs, (0, 2, 1))                # sequence-major [N, S, Cin]

    # Pre-squared, pre-laid-out weights (CustomConv2d squares its weight).
    wq2 = jnp.transpose((wq.reshape(NH * QK, Cin).astype(f32)) ** 2, (1, 0))  # [Cin, NH*QK]
    bq2 = bq.reshape(1, NH * QK).astype(f32)
    wk2 = (wk.reshape(NH * QK, Cin).astype(f32)) ** 2                         # [NH*QK, Cin]
    bk2 = bk.reshape(NH * QK, 1).astype(f32)
    wv2 = (wv.reshape(NH * VD, Cin).astype(f32)) ** 2                         # [NH*VD, Cin]
    bv2 = bv.reshape(NH * VD, 1).astype(f32)
    wp2 = (wp.reshape(out_ch, NH * VD).astype(f32)) ** 2
    bp2 = bp.reshape(out_ch, 1).astype(f32)
    w1_2 = (wf1.reshape(4 * out_ch, out_ch).astype(f32)) ** 2
    b1_2 = bf1.reshape(4 * out_ch, 1).astype(f32)
    w2_2 = (wf2.reshape(out_ch, 4 * out_ch).astype(f32)) ** 2
    b2_2 = bf2.reshape(out_ch, 1).astype(f32)

    const2 = lambda n, j: (0, 0)

    out = pl.pallas_call(
        _transformer_block_kernel,
        out_shape=jax.ShapeDtypeStruct((N, out_ch, S), x.dtype),
        grid_spec=pltpu.PrefetchScalarGridSpec(
            num_scalar_prefetch=0,
            grid=(N, q_split),
            in_specs=[
                pl.BlockSpec((1, SB, Cin), lambda n, j: (n, j, 0)),   # query block
                pl.BlockSpec((1, Cin, S), lambda n, j: (n, 0, 0)),    # full keys/values
                pl.BlockSpec(wq2.shape, const2),
                pl.BlockSpec(bq2.shape, const2),
                pl.BlockSpec(wk2.shape, const2),
                pl.BlockSpec(bk2.shape, const2),
                pl.BlockSpec(wv2.shape, const2),
                pl.BlockSpec(bv2.shape, const2),
                pl.BlockSpec(wp2.shape, const2),
                pl.BlockSpec(bp2.shape, const2),
                pl.BlockSpec(w1_2.shape, const2),
                pl.BlockSpec(b1_2.shape, const2),
                pl.BlockSpec(w2_2.shape, const2),
                pl.BlockSpec(b2_2.shape, const2),
            ],
            out_specs=pl.BlockSpec((1, out_ch, SB), lambda n, j: (n, 0, j)),
            scratch_shapes=[
                pltpu.VMEM((NH, SB, QK), jnp.float32),     # Q, head-major
                pltpu.VMEM((NH * QK, S), jnp.float32),     # K, channel-major
                pltpu.VMEM((NH * VD, S), jnp.float32),     # V, channel-major
                pltpu.VMEM((NH * VD, SB), jnp.float32),    # concat attention out
            ],
        ),
        compiler_params=pltpu.CompilerParams(
            dimension_semantics=("parallel", "parallel"),  # batch x query-block -> 2 TCs
        ),
    )(x_sc, x_cs, wq2, bq2, wk2, bk2, wv2, bv2,
      wp2, bp2, w1_2, b1_2, w2_2, b2_2)

    return out.reshape(N, out_ch, H, W)   # channel-major [N, C, S] == NCHW reshape


def _reference(x, wq, bq, wk, bk, wv, bv, wp, bp, wf1, bf1, wf2, bf2):
    """Pure-JAX reference for correctness checking."""
    N, Cin, H, W = x.shape
    S = H * W
    NH, QK, VD = NUM_HEADS, QK_DIM, V_DIM
    hi = jax.lax.Precision.HIGHEST

    def conv1x1(t, w, b):  # CustomConv2d(kernel_size=1): weight ** 2 then conv
        w2 = (w.reshape(w.shape[0], -1)) ** 2
        y = jnp.einsum('nchw,oc->nohw', t, w2, precision=hi)
        return y + b.reshape(1, -1, 1, 1)

    q = conv1x1(x, wq, bq).reshape(N, NH, QK, S)
    k = conv1x1(x, wk, bk).reshape(N, NH, QK, S)
    v = conv1x1(x, wv, bv).reshape(N, NH, VD, S)
    qt = jnp.transpose(q, (0, 1, 3, 2))
    kt = jnp.transpose(k, (0, 1, 3, 2))
    vt = jnp.transpose(v, (0, 1, 3, 2))
    scores = jnp.einsum('nhsd,nhtd->nhst', qt, kt, precision=hi) / math.sqrt(QK)
    p = jax.nn.softmax(scores, axis=-1)
    o = jnp.einsum('nhst,nhtd->nhsd', p, vt, precision=hi)
    o = jnp.transpose(o, (0, 1, 3, 2)).reshape(N, NH * VD, H, W)
    o = conv1x1(o, wp, bp)
    h1 = conv1x1(o, wf1, bf1)
    h1 = jax.nn.gelu(h1, approximate=False)
    return conv1x1(h1, wf2, bf2)


if __name__ == "__main__":
    key = jax.random.PRNGKey(0)
    ks = jax.random.split(key, 13)

    N, in_ch, H, W = 2, 4, 16, 16
    out_ch = 8

    x = jax.random.normal(ks[0], (N, in_ch, H, W), jnp.float32)
    wq = jax.random.normal(ks[1], (NUM_HEADS * QK_DIM, in_ch, 1, 1), jnp.float32) * 0.3
    bq = jax.random.normal(ks[2], (NUM_HEADS * QK_DIM,), jnp.float32) * 0.1
    wk = jax.random.normal(ks[3], (NUM_HEADS * QK_DIM, in_ch, 1, 1), jnp.float32) * 0.3
    bk = jax.random.normal(ks[4], (NUM_HEADS * QK_DIM,), jnp.float32) * 0.1
    wv = jax.random.normal(ks[5], (NUM_HEADS * V_DIM, in_ch, 1, 1), jnp.float32) * 0.3
    bv = jax.random.normal(ks[6], (NUM_HEADS * V_DIM,), jnp.float32) * 0.1
    wp = jax.random.normal(ks[7], (out_ch, NUM_HEADS * V_DIM, 1, 1), jnp.float32) * 0.1
    bp = jax.random.normal(ks[8], (out_ch,), jnp.float32) * 0.1
    wf1 = jax.random.normal(ks[9], (out_ch * 4, out_ch, 1, 1), jnp.float32) * 0.3
    bf1 = jax.random.normal(ks[10], (out_ch * 4,), jnp.float32) * 0.1
    wf2 = jax.random.normal(ks[11], (out_ch, out_ch * 4, 1, 1), jnp.float32) * 0.3
    bf2 = jax.random.normal(ks[12], (out_ch,), jnp.float32) * 0.1

    y = simple_transformer_block(x, wq, bq, wk, bk, wv, bv, wp, bp, wf1, bf1, wf2, bf2)
    jax.block_until_ready(y)

    y_ref = _reference(x, wq, bq, wk, bk, wv, bv, wp, bp, wf1, bf1, wf2, bf2)
    assert y.shape == (N, out_ch, H, W)
    max_err = float(jnp.max(jnp.abs(y - y_ref)))
    assert jnp.allclose(y, y_ref, rtol=1e-3, atol=1e-3), f"mismatch vs reference, max|diff|={max_err}"

    print("KERNEL_OK")
</pallas_src>

<mosaic_0001>
module attributes {stable_mosaic.version = 11 : i64} {
  func.func @_transformer_block_kernel(%arg0: i32, %arg1: i32, %arg2: memref<1x128x4xf32, #tpu.memory_space<vmem>>, %arg3: memref<1x4x256xf32, #tpu.memory_space<vmem>>, %arg4: memref<4x256xf32, #tpu.memory_space<vmem>>, %arg5: memref<1x256xf32, #tpu.memory_space<vmem>>, %arg6: memref<256x4xf32, #tpu.memory_space<vmem>>, %arg7: memref<256x1xf32, #tpu.memory_space<vmem>>, %arg8: memref<512x4xf32, #tpu.memory_space<vmem>>, %arg9: memref<512x1xf32, #tpu.memory_space<vmem>>, %arg10: memref<8x512xf32, #tpu.memory_space<vmem>>, %arg11: memref<8x1xf32, #tpu.memory_space<vmem>>, %arg12: memref<32x8xf32, #tpu.memory_space<vmem>>, %arg13: memref<32x1xf32, #tpu.memory_space<vmem>>, %arg14: memref<8x32xf32, #tpu.memory_space<vmem>>, %arg15: memref<8x1xf32, #tpu.memory_space<vmem>>, %arg16: memref<1x8x128xf32, #tpu.memory_space<vmem>>, %arg17: memref<8x128x32xf32, #tpu.memory_space<vmem>>, %arg18: memref<256x256xf32, #tpu.memory_space<vmem>>, %arg19: memref<512x256xf32, #tpu.memory_space<vmem>>, %arg20: memref<512x128xf32, #tpu.memory_space<vmem>>) attributes {dimension_semantics = [#tpu.dimension_semantics<parallel>, #tpu.dimension_semantics<parallel>], iteration_bounds = array<i64: 2, 2>, scalar_prefetch = 0 : i64, scratch_operands = 4 : i64, tpu.core_type = #tpu.core_type<tc>, window_params = [{transform_indices = @transform_0, window_bounds = array<i64: 1, 128, 4>}, {transform_indices = @transform_1, window_bounds = array<i64: 1, 4, 256>}, {pipeline_mode = #tpu.pipeline_mode<synchronous>, transform_indices = @transform_2, window_bounds = array<i64: 4, 256>}, {pipeline_mode = #tpu.pipeline_mode<synchronous>, transform_indices = @transform_3, window_bounds = array<i64: 1, 256>}, {pipeline_mode = #tpu.pipeline_mode<synchronous>, transform_indices = @transform_4, window_bounds = array<i64: 256, 4>}, {pipeline_mode = #tpu.pipeline_mode<synchronous>, transform_indices = @transform_5, window_bounds = array<i64: 256, 1>}, {pipeline_mode = #tpu.pipeline_mode<synchronous>, transform_indices = @transform_6, window_bounds = array<i64: 512, 4>}, {pipeline_mode = #tpu.pipeline_mode<synchronous>, transform_indices = @transform_7, window_bounds = array<i64: 512, 1>}, {pipeline_mode = #tpu.pipeline_mode<synchronous>, transform_indices = @transform_8, window_bounds = array<i64: 8, 512>}, {pipeline_mode = #tpu.pipeline_mode<synchronous>, transform_indices = @transform_9, window_bounds = array<i64: 8, 1>}, {pipeline_mode = #tpu.pipeline_mode<synchronous>, transform_indices = @transform_10, window_bounds = array<i64: 32, 8>}, {pipeline_mode = #tpu.pipeline_mode<synchronous>, transform_indices = @transform_11, window_bounds = array<i64: 32, 1>}, {pipeline_mode = #tpu.pipeline_mode<synchronous>, transform_indices = @transform_12, window_bounds = array<i64: 8, 32>}, {pipeline_mode = #tpu.pipeline_mode<synchronous>, transform_indices = @transform_13, window_bounds = array<i64: 8, 1>}, {transform_indices = @transform_14, window_bounds = array<i64: 1, 8, 128>}]} {
    %c0 = arith.constant 0 : index
    %c0_0 = arith.constant 0 : index
    %c0_1 = arith.constant 0 : index
    %0 = vector.load %arg2[%c0, %c0_0, %c0_1] : memref<1x128x4xf32, #tpu.memory_space<vmem>>, vector<1x128x4xf32>
    %1 = vector.shape_cast %0 : vector<1x128x4xf32> to vector<128x4xf32>
    %c0_2 = arith.constant 0 : index
    %c0_3 = arith.constant 0 : index
    %c0_4 = arith.constant 0 : index
    %2 = vector.load %arg3[%c0_2, %c0_3, %c0_4] : memref<1x4x256xf32, #tpu.memory_space<vmem>>, vector<1x4x256xf32>
    %3 = vector.shape_cast %2 : vector<1x4x256xf32> to vector<4x256xf32>
    %c0_5 = arith.constant 0 : index
    %c0_6 = arith.constant 0 : index
    %4 = vector.load %arg4[%c0_5, %c0_6] : memref<4x256xf32, #tpu.memory_space<vmem>>, vector<4x256xf32>
    %cst = arith.constant dense<0.000000e+00> : vector<128x256xf32>
    %5 = tpu.matmul %1, %4, %cst {dimension_numbers = #tpu.dot_dimension_numbers<[1], [0], [0], [1], [0, 0, 1, 1], [], []>} : vector<128x4xf32>, vector<4x256xf32>, vector<128x256xf32> -> vector<128x256xf32>
    %c0_7 = arith.constant 0 : index
    %c0_8 = arith.constant 0 : index
    %6 = vector.load %arg5[%c0_7, %c0_8] : memref<1x256xf32, #tpu.memory_space<vmem>>, vector<1x256xf32>
    %7 = vector.broadcast %6 : vector<1x256xf32> to vector<128x256xf32>
    %8 = arith.addf %5, %7 : vector<128x256xf32>
    %c0_9 = arith.constant 0 : index
    %c0_10 = arith.constant 0 : index
    %9 = vector.load %arg6[%c0_9, %c0_10] : memref<256x4xf32, #tpu.memory_space<vmem>>, vector<256x4xf32>
    %cst_11 = arith.constant dense<0.000000e+00> : vector<256x256xf32>
    %10 = tpu.matmul %9, %3, %cst_11 {dimension_numbers = #tpu.dot_dimension_numbers<[1], [0], [0], [1], [0, 0, 1, 1], [], []>} : vector<256x4xf32>, vector<4x256xf32>, vector<256x256xf32> -> vector<256x256xf32>
    %c0_12 = arith.constant 0 : index
    %c0_13 = arith.constant 0 : index
    %11 = vector.load %arg7[%c0_12, %c0_13] : memref<256x1xf32, #tpu.memory_space<vmem>>, vector<256x1xf32>
    %12 = vector.broadcast %11 : vector<256x1xf32> to vector<256x256xf32>
    %13 = arith.addf %10, %12 : vector<256x256xf32>
    %c0_14 = arith.constant 0 : index
    %c0_15 = arith.constant 0 : index
    %14 = vector.load %arg18[%c0_14, %c0_15] : memref<256x256xf32, #tpu.memory_space<vmem>>, vector<256x256xf32>
    tpu.vector_store %arg18[%c0_14, %c0_15], %13 {strides = array<i32>} : memref<256x256xf32, #tpu.memory_space<vmem>>, vector<256x256xf32>,
    %c0_16 = arith.constant 0 : index
    %c0_17 = arith.constant 0 : index
    %15 = vector.load %arg8[%c0_16, %c0_17] : memref<512x4xf32, #tpu.memory_space<vmem>>, vector<512x4xf32>
    %cst_18 = arith.constant dense<0.000000e+00> : vector<512x256xf32>
    %16 = tpu.matmul %15, %3, %cst_18 {dimension_numbers = #tpu.dot_dimension_numbers<[1], [0], [0], [1], [0, 0, 1, 1], [], []>} : vector<512x4xf32>, vector<4x256xf32>, vector<512x256xf32> -> vector<512x256xf32>
    %c0_19 = arith.constant 0 : index
    %c0_20 = arith.constant 0 : index
    %17 = vector.load %arg9[%c0_19, %c0_20] : memref<512x1xf32, #tpu.memory_space<vmem>>, vector<512x1xf32>
    %18 = vector.broadcast %17 : vector<512x1xf32> to vector<512x256xf32>
    %19 = arith.addf %16, %18 : vector<512x256xf32>
    %c0_21 = arith.constant 0 : index
    %c0_22 = arith.constant 0 : index
    %20 = vector.load %arg19[%c0_21, %c0_22] : memref<512x256xf32, #tpu.memory_space<vmem>>, vector<512x256xf32>
    tpu.vector_store %arg19[%c0_21, %c0_22], %19 {strides = array<i32>} : memref<512x256xf32, #tpu.memory_space<vmem>>, vector<512x256xf32>,
    %21 = vector.extract_strided_slice %8 {offsets = [0, 0], sizes = [128, 32], strides = [1, 1]} : vector<128x256xf32> to vector<128x32xf32>
    %c0_23 = arith.constant 0 : index
    %c0_24 = arith.constant 0 : index
    %c0_25 = arith.constant 0 : index
    %22 = vector.load %arg17[%c0_23, %c0_24, %c0_25] : memref<8x128x32xf32, #tpu.memory_space<vmem>>, vector<1x128x32xf32>
    %23 = vector.shape_cast %22 : vector<1x128x32xf32> to vector<128x32xf32>
    %24 = vector.shape_cast %21 : vector<128x32xf32> to vector<1x128x32xf32>
    tpu.vector_store %arg17[%c0_23, %c0_24, %c0_25], %24 {strides = array<i32>} : memref<8x128x32xf32, #tpu.memory_space<vmem>>, vector<1x128x32xf32>,
    %25 = vector.extract_strided_slice %8 {offsets = [0, 32], sizes = [128, 32], strides = [1, 1]} : vector<128x256xf32> to vector<128x32xf32>
    %c1 = arith.constant 1 : index
    %c0_26 = arith.constant 0 : index
    %c0_27 = arith.constant 0 : index
    %26 = vector.load %arg17[%c1, %c0_26, %c0_27] : memref<8x128x32xf32, #tpu.memory_space<vmem>>, vector<1x128x32xf32>
    %27 = vector.shape_cast %26 : vector<1x128x32xf32> to vector<128x32xf32>
    %28 = vector.shape_cast %25 : vector<128x32xf32> to vector<1x128x32xf32>
    tpu.vector_store %arg17[%c1, %c0_26, %c0_27], %28 {strides = array<i32>} : memref<8x128x32xf32, #tpu.memory_space<vmem>>, vector<1x128x32xf32>,
    %29 = vector.extract_strided_slice %8 {offsets = [0, 64], sizes = [128, 32], strides = [1, 1]} : vector<128x256xf32> to vector<128x32xf32>
    %c2 = arith.constant 2 : index
    %c0_28 = arith.constant 0 : index
    %c0_29 = arith.constant 0 : index
    %30 = vector.load %arg17[%c2, %c0_28, %c0_29] : memref<8x128x32xf32, #tpu.memory_space<vmem>>, vector<1x128x32xf32>
    %31 = vector.shape_cast %30 : vector<1x128x32xf32> to vector<128x32xf32>
    %32 = vector.shape_cast %29 : vector<128x32xf32> to vector<1x128x32xf32>
    tpu.vector_store %arg17[%c2, %c0_28, %c0_29], %32 {strides = array<i32>} : memref<8x128x32xf32, #tpu.memory_space<vmem>>, vector<1x128x32xf32>,
    %33 = vector.extract_strided_slice %8 {offsets = [0, 96], sizes = [128, 32], strides = [1, 1]} : vector<128x256xf32> to vector<128x32xf32>
    %c3 = arith.constant 3 : index
    %c0_30 = arith.constant 0 : index
    %c0_31 = arith.constant 0 : index
    %34 = vector.load %arg17[%c3, %c0_30, %c0_31] : memref<8x128x32xf32, #tpu.memory_space<vmem>>, vector<1x128x32xf32>
    %35 = vector.shape_cast %34 : vector<1x128x32xf32> to vector<128x32xf32>
    %36 = vector.shape_cast %33 : vector<128x32xf32> to vector<1x128x32xf32>
    tpu.vector_store %arg17[%c3, %c0_30, %c0_31], %36 {strides = array<i32>} : memref<8x128x32xf32, #tpu.memory_space<vmem>>, vector<1x128x32xf32>,
    %37 = vector.extract_strided_slice %8 {offsets = [0, 128], sizes = [128, 32], strides = [1, 1]} : vector<128x256xf32> to vector<128x32xf32>
    %c4 = arith.constant 4 : index
    %c0_32 = arith.constant 0 : index
    %c0_33 = arith.constant 0 : index
    %38 = vector.load %arg17[%c4, %c0_32, %c0_33] : memref<8x128x32xf32, #tpu.memory_space<vmem>>, vector<1x128x32xf32>
    %39 = vector.shape_cast %38 : vector<1x128x32xf32> to vector<128x32xf32>
    %40 = vector.shape_cast %37 : vector<128x32xf32> to vector<1x128x32xf32>
    tpu.vector_store %arg17[%c4, %c0_32, %c0_33], %40 {strides = array<i32>} : memref<8x128x32xf32, #tpu.memory_space<vmem>>, vector<1x128x32xf32>,
    %41 = vector.extract_strided_slice %8 {offsets = [0, 160], sizes = [128, 32], strides = [1, 1]} : vector<128x256xf32> to vector<128x32xf32>
    %c5 = arith.constant 5 : index
    %c0_34 = arith.constant 0 : index
    %c0_35 = arith.constant 0 : index
    %42 = vector.load %arg17[%c5, %c0_34, %c0_35] : memref<8x128x32xf32, #tpu.memory_space<vmem>>, vector<1x128x32xf32>
    %43 = vector.shape_cast %42 : vector<1x128x32xf32> to vector<128x32xf32>
    %44 = vector.shape_cast %41 : vector<128x32xf32> to vector<1x128x32xf32>
    tpu.vector_store %arg17[%c5, %c0_34, %c0_35], %44 {strides = array<i32>} : memref<8x128x32xf32, #tpu.memory_space<vmem>>, vector<1x128x32xf32>,
    %45 = vector.extract_strided_slice %8 {offsets = [0, 192], sizes = [128, 32], strides = [1, 1]} : vector<128x256xf32> to vector<128x32xf32>
    %c6 = arith.constant 6 : index
    %c0_36 = arith.constant 0 : index
    %c0_37 = arith.constant 0 : index
    %46 = vector.load %arg17[%c6, %c0_36, %c0_37] : memref<8x128x32xf32, #tpu.memory_space<vmem>>, vector<1x128x32xf32>
    %47 = vector.shape_cast %46 : vector<1x128x32xf32> to vector<128x32xf32>
    %48 = vector.shape_cast %45 : vector<128x32xf32> to vector<1x128x32xf32>
    tpu.vector_store %arg17[%c6, %c0_36, %c0_37], %48 {strides = array<i32>} : memref<8x128x32xf32, #tpu.memory_space<vmem>>, vector<1x128x32xf32>,
    %49 = vector.extract_strided_slice %8 {offsets = [0, 224], sizes = [128, 32], strides = [1, 1]} : vector<128x256xf32> to vector<128x32xf32>
    %c7 = arith.constant 7 : index
    %c0_38 = arith.constant 0 : index
    %c0_39 = arith.constant 0 : index
    %50 = vector.load %arg17[%c7, %c0_38, %c0_39] : memref<8x128x32xf32, #tpu.memory_space<vmem>>, vector<1x128x32xf32>
    %51 = vector.shape_cast %50 : vector<1x128x32xf32> to vector<128x32xf32>
    %52 = vector.shape_cast %49 : vector<128x32xf32> to vector<1x128x32xf32>
    tpu.vector_store %arg17[%c7, %c0_38, %c0_39], %52 {strides = array<i32>} : memref<8x128x32xf32, #tpu.memory_space<vmem>>, vector<1x128x32xf32>,
    %cst_40 = arith.constant 1.000000e+00 : f32
    %53 = vector.broadcast %cst_40 : f32 to vector<1x256xf32>
    %c0_i32 = arith.constant 0 : i32
    %c8_i32 = arith.constant 8 : i32
    %54 = arith.addi %c0_i32, %c8_i32 : i32
    %c1_i32 = arith.constant 1 : i32
    scf.for %arg21 = %c0_i32 to %54 step %c1_i32  : i32 {
      %c1_i32_65 = arith.constant 1 : i32
      %82 = arith.muli %arg21, %c1_i32_65 : i32
      %c0_i32_66 = arith.constant 0 : i32
      %83 = arith.addi %c0_i32_66, %82 : i32
      %c32_i32 = arith.constant 32 : i32
      %84 = arith.muli %83, %c32_i32 : i32
      %85 = tpu.assume_multiple %84, 32 : i32
      %c64_i32 = arith.constant 64 : i32
      %86 = arith.muli %83, %c64_i32 : i32
      %87 = tpu.assume_multiple %86, 64 : i32
      %88 = arith.index_cast %83 : i32 to index
      %c0_67 = arith.constant 0 : index
      %c0_68 = arith.constant 0 : index
      %89 = vector.load %arg17[%88, %c0_67, %c0_68] : memref<8x128x32xf32, #tpu.memory_space<vmem>>, vector<1x128x32xf32>
      %90 = vector.shape_cast %89 : vector<1x128x32xf32> to vector<128x32xf32>
      %91 = arith.index_cast %85 : i32 to index
      %c0_69 = arith.constant 0 : index
      %92 = vector.load %arg18[%91, %c0_69] : memref<256x256xf32, #tpu.memory_space<vmem>>, vector<32x256xf32>
      %93 = arith.index_cast %87 : i32 to index
      %c0_70 = arith.constant 0 : index
      %94 = vector.load %arg19[%93, %c0_70] : memref<512x256xf32, #tpu.memory_space<vmem>>, vector<64x256xf32>
      %cst_71 = arith.constant dense<0.000000e+00> : vector<128x256xf32>
      %95 = tpu.matmul %90, %92, %cst_71 {dimension_numbers = #tpu.dot_dimension_numbers<[1], [0], [0], [1], [0, 0, 1, 1], [], []>} : vector<128x32xf32>, vector<32x256xf32>, vector<128x256xf32> -> vector<128x256xf32>
      %cst_72 = arith.constant 0.176776692 : f32
      %96 = vector.broadcast %cst_72 : f32 to vector<128x256xf32>
      %97 = arith.mulf %95, %96 : vector<128x256xf32>
      %cst_73 = arith.constant dense<0xFF800000> : vector<128xf32>
      %98 = vector.multi_reduction <maximumf>, %97, %cst_73 [1] : vector<128x256xf32> to vector<128xf32>
      %99 = vector.shape_cast %98 : vector<128xf32> to vector<128x1xf32>
      %100 = vector.broadcast %99 : vector<128x1xf32> to vector<128x256xf32>
      %101 = arith.subf %97, %100 : vector<128x256xf32>
      %102 = math.exp %101 : vector<128x256xf32>
      %cst_74 = arith.constant dense<0.000000e+00> : vector<64x128xf32>
      %103 = tpu.matmul %94, %102, %cst_74 {dimension_numbers = #tpu.dot_dimension_numbers<[1], [1], [0], [0], [0, 0, 1, 0], [], []>} : vector<64x256xf32>, vector<128x256xf32>, vector<64x128xf32> -> vector<64x128xf32>
      %cst_75 = arith.constant dense<0.000000e+00> : vector<1x128xf32>
      %104 = tpu.matmul %53, %102, %cst_75 {dimension_numbers = #tpu.dot_dimension_numbers<[1], [1], [0], [0], [0, 0, 1, 0], [], []>} : vector<1x256xf32>, vector<128x256xf32>, vector<1x128xf32> -> vector<1x128xf32>
      %105 = tpu.reciprocal %104 : vector<1x128xf32> -> vector<1x128xf32>
      %106 = vector.broadcast %105 : vector<1x128xf32> to vector<64x128xf32>
      %107 = arith.mulf %103, %106 : vector<64x128xf32>
      %108 = arith.index_cast %87 : i32 to index
      %c0_76 = arith.constant 0 : index
      %109 = vector.load %arg20[%108, %c0_76] : memref<512x128xf32, #tpu.memory_space<vmem>>, vector<64x128xf32>
      tpu.vector_store %arg20[%108, %c0_76], %107 {strides = array<i32>} : memref<512x128xf32, #tpu.memory_space<vmem>>, vector<64x128xf32>,
    }
    %c8_i32_41 = arith.constant 8 : i32
    %c0_42 = arith.constant 0 : index
    %c0_43 = arith.constant 0 : index
    %55 = vector.load %arg20[%c0_42, %c0_43] : memref<512x128xf32, #tpu.memory_space<vmem>>, vector<512x128xf32>
    %c0_44 = arith.constant 0 : index
    %c0_45 = arith.constant 0 : index
    %56 = vector.load %arg10[%c0_44, %c0_45] : memref<8x512xf32, #tpu.memory_space<vmem>>, vector<8x512xf32>
    %cst_46 = arith.constant dense<0.000000e+00> : vector<8x128xf32>
    %57 = tpu.matmul %56, %55, %cst_46 {dimension_numbers = #tpu.dot_dimension_numbers<[1], [0], [0], [1], [0, 0, 1, 1], [], []>} : vector<8x512xf32>, vector<512x128xf32>, vector<8x128xf32> -> vector<8x128xf32>
    %c0_47 = arith.constant 0 : index
    %c0_48 = arith.constant 0 : index
    %58 = vector.load %arg11[%c0_47, %c0_48] : memref<8x1xf32, #tpu.memory_space<vmem>>, vector<8x1xf32>
    %59 = vector.broadcast %58 : vector<8x1xf32> to vector<8x128xf32>
    %60 = arith.addf %57, %59 : vector<8x128xf32>
    %c0_49 = arith.constant 0 : index
    %c0_50 = arith.constant 0 : index
    %61 = vector.load %arg12[%c0_49, %c0_50] : memref<32x8xf32, #tpu.memory_space<vmem>>, vector<32x8xf32>
    %cst_51 = arith.constant dense<0.000000e+00> : vector<32x128xf32>
    %62 = tpu.matmul %61, %60, %cst_51 {dimension_numbers = #tpu.dot_dimension_numbers<[1], [0], [0], [1], [0, 0, 1, 1], [], []>} : vector<32x8xf32>, vector<8x128xf32>, vector<32x128xf32> -> vector<32x128xf32>
    %c0_52 = arith.constant 0 : index
    %c0_53 = arith.constant 0 : index
    %63 = vector.load %arg13[%c0_52, %c0_53] : memref<32x1xf32, #tpu.memory_space<vmem>>, vector<32x1xf32>
    %64 = vector.broadcast %63 : vector<32x1xf32> to vector<32x128xf32>
    %65 = arith.addf %62, %64 : vector<32x128xf32>
    %cst_54 = arith.constant 5.000000e-01 : f32
    %66 = vector.broadcast %cst_54 : f32 to vector<32x128xf32>
    %67 = arith.mulf %66, %65 : vector<32x128xf32>
    %cst_55 = arith.constant 0.707106769 : f32
    %68 = vector.broadcast %cst_55 : f32 to vector<32x128xf32>
    %69 = arith.mulf %65, %68 : vector<32x128xf32>
    %70 = math.erf %69 : vector<32x128xf32>
    %cst_56 = arith.constant 1.000000e+00 : f32
    %71 = vector.broadcast %cst_56 : f32 to vector<32x128xf32>
    %72 = arith.addf %71, %70 : vector<32x128xf32>
    %73 = arith.mulf %67, %72 : vector<32x128xf32>
    %c0_57 = arith.constant 0 : index
    %c0_58 = arith.constant 0 : index
    %74 = vector.load %arg14[%c0_57, %c0_58] : memref<8x32xf32, #tpu.memory_space<vmem>>, vector<8x32xf32>
    %cst_59 = arith.constant dense<0.000000e+00> : vector<8x128xf32>
    %75 = tpu.matmul %74, %73, %cst_59 {dimension_numbers = #tpu.dot_dimension_numbers<[1], [0], [0], [1], [0, 0, 1, 1], [], []>} : vector<8x32xf32>, vector<32x128xf32>, vector<8x128xf32> -> vector<8x128xf32>
    %c0_60 = arith.constant 0 : index
    %c0_61 = arith.constant 0 : index
    %76 = vector.load %arg15[%c0_60, %c0_61] : memref<8x1xf32, #tpu.memory_space<vmem>>, vector<8x1xf32>
    %77 = vector.broadcast %76 : vector<8x1xf32> to vector<8x128xf32>
    %78 = arith.addf %75, %77 : vector<8x128xf32>
    %c0_62 = arith.constant 0 : index
    %c0_63 = arith.constant 0 : index
    %c0_64 = arith.constant 0 : index
    %79 = vector.load %arg16[%c0_62, %c0_63, %c0_64] : memref<1x8x128xf32, #tpu.memory_space<vmem>>, vector<1x8x128xf32>
    %80 = vector.shape_cast %79 : vector<1x8x128xf32> to vector<8x128xf32>
    %81 = vector.shape_cast %78 : vector<8x128xf32> to vector<1x8x128xf32>
    tpu.vector_store %arg16[%c0_62, %c0_63, %c0_64], %81 {strides = array<i32>} : memref<1x8x128xf32, #tpu.memory_space<vmem>>, vector<1x8x128xf32>,
    return
  }
  func.func @transform_0(%arg0: i32, %arg1: i32) -> (i32, i32, i32) {
    %c0_i32 = arith.constant 0 : i32
    %c0_i32_0 = arith.constant 0 : i32
    return %arg0, %arg1, %c0_i32 : i32, i32, i32
  }
  func.func @transform_1(%arg0: i32, %arg1: i32) -> (i32, i32, i32) {
    %c0_i32 = arith.constant 0 : i32
    %c0_i32_0 = arith.constant 0 : i32
    %c0_i32_1 = arith.constant 0 : i32
    return %arg0, %c0_i32, %c0_i32_0 : i32, i32, i32
  }
  func.func @transform_2(%arg0: i32, %arg1: i32) -> (i32, i32) {
    %c0_i32 = arith.constant 0 : i32
    %c0_i32_0 = arith.constant 0 : i32
    %c0_i32_1 = arith.constant 0 : i32
    return %c0_i32, %c0_i32_0 : i32, i32
  }
  func.func @transform_3(%arg0: i32, %arg1: i32) -> (i32, i32) {
    %c0_i32 = arith.constant 0 : i32
    %c0_i32_0 = arith.constant 0 : i32
    %c0_i32_1 = arith.constant 0 : i32
    return %c0_i32, %c0_i32_0 : i32, i32
  }
  func.func @transform_4(%arg0: i32, %arg1: i32) -> (i32, i32) {
    %c0_i32 = arith.constant 0 : i32
    %c0_i32_0 = arith.constant 0 : i32
    %c0_i32_1 = arith.constant 0 : i32
    return %c0_i32, %c0_i32_0 : i32, i32
  }
  func.func @transform_5(%arg0: i32, %arg1: i32) -> (i32, i32) {
    %c0_i32 = arith.constant 0 : i32
    %c0_i32_0 = arith.constant 0 : i32
    %c0_i32_1 = arith.constant 0 : i32
    return %c0_i32, %c0_i32_0 : i32, i32
  }
  func.func @transform_6(%arg0: i32, %arg1: i32) -> (i32, i32) {
    %c0_i32 = arith.constant 0 : i32
    %c0_i32_0 = arith.constant 0 : i32
    %c0_i32_1 = arith.constant 0 : i32
    return %c0_i32, %c0_i32_0 : i32, i32
  }
  func.func @transform_7(%arg0: i32, %arg1: i32) -> (i32, i32) {
    %c0_i32 = arith.constant 0 : i32
    %c0_i32_0 = arith.constant 0 : i32
    %c0_i32_1 = arith.constant 0 : i32
    return %c0_i32, %c0_i32_0 : i32, i32
  }
  func.func @transform_8(%arg0: i32, %arg1: i32) -> (i32, i32) {
    %c0_i32 = arith.constant 0 : i32
    %c0_i32_0 = arith.constant 0 : i32
    %c0_i32_1 = arith.constant 0 : i32
    return %c0_i32, %c0_i32_0 : i32, i32
  }
  func.func @transform_9(%arg0: i32, %arg1: i32) -> (i32, i32) {
    %c0_i32 = arith.constant 0 : i32
    %c0_i32_0 = arith.constant 0 : i32
    %c0_i32_1 = arith.constant 0 : i32
    return %c0_i32, %c0_i32_0 : i32, i32
  }
  func.func @transform_10(%arg0: i32, %arg1: i32) -> (i32, i32) {
    %c0_i32 = arith.constant 0 : i32
    %c0_i32_0 = arith.constant 0 : i32
    %c0_i32_1 = arith.constant 0 : i32
    return %c0_i32, %c0_i32_0 : i32, i32
  }
  func.func @transform_11(%arg0: i32, %arg1: i32) -> (i32, i32) {
    %c0_i32 = arith.constant 0 : i32
    %c0_i32_0 = arith.constant 0 : i32
    %c0_i32_1 = arith.constant 0 : i32
    return %c0_i32, %c0_i32_0 : i32, i32
  }
  func.func @transform_12(%arg0: i32, %arg1: i32) -> (i32, i32) {
    %c0_i32 = arith.constant 0 : i32
    %c0_i32_0 = arith.constant 0 : i32
    %c0_i32_1 = arith.constant 0 : i32
    return %c0_i32, %c0_i32_0 : i32, i32
  }
  func.func @transform_13(%arg0: i32, %arg1: i32) -> (i32, i32) {
    %c0_i32 = arith.constant 0 : i32
    %c0_i32_0 = arith.constant 0 : i32
    %c0_i32_1 = arith.constant 0 : i32
    return %c0_i32, %c0_i32_0 : i32, i32
  }
  func.func @transform_14(%arg0: i32, %arg1: i32) -> (i32, i32, i32) {
    %c0_i32 = arith.constant 0 : i32
    %c0_i32_0 = arith.constant 0 : i32
    return %arg0, %c0_i32, %arg1 : i32, i32, i32
  }
}

</mosaic_0001>

<llo_original>
// kernel: integer_pow.4
$region0: #{integer_pow.4}
  #allocation0 [shape = 's32[1]{0}', space=sflag, size = 0x4, scoped, tag = 'scoped memory for integer_pow.4']
  %s0 = inlined_call_operand.vmem [shape: f32[32,8,1,1], index: 0, kind: input, shape index: {}, may-alias: {0,1}]
  %s1 = inlined_call_operand.vmem [shape: f32[32,8,1,1], index: 1, kind: input, shape index: {}, may-alias: {0,1}]
  %s2 = inlined_call_operand.vmem [shape: f32[32,8,1,1], index: 2, kind: output, shape index: {}]
  %v3 = vld [vmem:[%s0] sm:$0xff]
  %v4 = vld [vmem:[%s1] sm:$0xff]
  %5 = xla_tuple %v3, %v4
  %6 = xla_tuple %5
  %v7 = vmul.f32 %v3, %v4
  %8 = xla_tuple %v7
  %9 = vst [vmem:[%s2] sm:$0xff] %v7

// kernel: simple_transformer_block.1
$region0: #{simple_transformer_block.1}
  #allocation0 [shape = 'u32[]', space=smem, size = 0x4, offset = 0x4, fixed_abs, tag = 'smem constant byte address 0x4 - core index']
  #allocation1 [shape = 'u32[144,128]{1,0:T(1,128)}', space=vmem, size = 0x12000, scoped, tag = 'internal scratch']
  #allocation2 [shape = 'f32[8,128,32]{2,1,0:T(8,128)}', space=vmem, size = 0x80000, scoped, tag = 'scratch operand']
  #allocation3 [shape = 'f32[256,256]{1,0:T(8,128)}', space=vmem, size = 0x40000, scoped, tag = 'scratch operand']
  #allocation4 [shape = 'f32[512,256]{1,0:T(8,128)}', space=vmem, size = 0x80000, scoped, tag = 'scratch operand']
  #allocation5 [shape = 'f32[512,128]{1,0:T(8,128)}', space=vmem, size = 0x40000, scoped, tag = 'scratch operand']
  %s0 = inlined_call_operand.vmem [shape: f32[2,256,4], index: 0, kind: input, shape index: {}]
  %s1 = inlined_call_operand.vmem [shape: f32[2,4,256], index: 1, kind: input, shape index: {}]
  %s2 = inlined_call_operand.vmem [shape: f32[4,256], index: 2, kind: input, shape index: {}]
  %s3 = inlined_call_operand.vmem [shape: f32[1,256], index: 3, kind: input, shape index: {}]
  %s4 = inlined_call_operand.vmem [shape: f32[256,4], index: 4, kind: input, shape index: {}]
  %s5 = inlined_call_operand.vmem [shape: f32[256,1], index: 5, kind: input, shape index: {}]
  %s6 = inlined_call_operand.vmem [shape: f32[512,4], index: 6, kind: input, shape index: {}]
  %s7 = inlined_call_operand.vmem [shape: f32[512,1], index: 7, kind: input, shape index: {}]
  %s8 = inlined_call_operand.vmem [shape: f32[8,512], index: 8, kind: input, shape index: {}]
  %s9 = inlined_call_operand.vmem [shape: f32[8,1], index: 9, kind: input, shape index: {}]
  %s10 = inlined_call_operand.vmem [shape: f32[32,8], index: 10, kind: input, shape index: {}]
  %s11 = inlined_call_operand.vmem [shape: f32[32,1], index: 11, kind: input, shape index: {}]
  %s12 = inlined_call_operand.vmem [shape: f32[8,32], index: 12, kind: input, shape index: {}]
  %s13 = inlined_call_operand.vmem [shape: f32[8,1], index: 13, kind: input, shape index: {}]
  %s14 = inlined_call_operand.vmem [shape: f32[2,8,256], index: 14, kind: output, shape index: {}]
  %s15 = sld [smem:[#allocation0]]
  $region96: #{simple_transformer_block.1} parent=0
    _
  %s17 = ssub.s32 1, %s15
  %s18 = scalar_select 0, %s17, %s15
  loop: start=0, step=1, limit=6
  $region2: #{simple_transformer_block.1} parent=0 // loop_pre_header
    _
  $region3: #{simple_transformer_block.1} parent=0 // loop_header
    %s20 = sphi 0, %s24
    %p21 = scmp.ge.s32.totalorder %s20, 6
    %s27 = sphi 0, %s39
    %s28 = sphi 0, %s35
    %s29 = sphi 0, %s27
    %s30 = sphi 0, %s28
    %s31 = sphi 0, %s29
    %s32 = sphi 0, %s30
    %s44 = sphi 0, %s46
    %s47 = sphi 0, %s44
    %s48 = sphi 0, %s47
    %s64 = sphi 0, %s48
    %s70 = sphi 0, %s72
    %s73 = sphi 0, %s70
    %s74 = sphi 0, %s73
    %s90 = sphi 0, %s74
    %s94 = sphi 0, %s94
    %s96 = sphi 0, %s94
    %s97 = sphi 0, %s96
    %s111 = sphi 0, %s97
    %s115 = sphi 0, %s115
    %s117 = sphi 0, %s115
    %s118 = sphi 0, %s117
    %s132 = sphi 0, %s118
    %s136 = sphi 0, %s136
    %s138 = sphi 0, %s136
    %s139 = sphi 0, %s138
    %s153 = sphi 0, %s139
    %s157 = sphi 0, %s157
    %s159 = sphi 0, %s157
    %s160 = sphi 0, %s159
    %s174 = sphi 0, %s160
    %s178 = sphi 0, %s178
    %s180 = sphi 0, %s178
    %s181 = sphi 0, %s180
    %s195 = sphi 0, %s181
    %s199 = sphi 0, %s199
    %s201 = sphi 0, %s199
    %s202 = sphi 0, %s201
    %s216 = sphi 0, %s202
    %s220 = sphi 0, %s220
    %s222 = sphi 0, %s220
    %s223 = sphi 0, %s222
    %s237 = sphi 0, %s223
    %s241 = sphi 0, %s241
    %s243 = sphi 0, %s241
    %s244 = sphi 0, %s243
    %s258 = sphi 0, %s244
    %s262 = sphi 0, %s262
    %s264 = sphi 0, %s262
    %s265 = sphi 0, %s264
    %s279 = sphi 0, %s265
    %s283 = sphi 0, %s283
    %s285 = sphi 0, %s283
    %s286 = sphi 0, %s285
    %s300 = sphi 0, %s286
    %s304 = sphi 0, %s304
    %s306 = sphi 0, %s304
    %s307 = sphi 0, %s306
    %s321 = sphi 0, %s307
    %s325 = sphi 0, %s325
    %s327 = sphi 0, %s325
    %s328 = sphi 0, %s327
    %s342 = sphi 0, %s328
    %s350 = sphi 0, %s352
    %s353 = sphi 0, %s350
    %s354 = sphi 0, %s353
    %s370 = sphi 0, %s354
  $region4: #{simple_transformer_block.1} parent=0 // loop_header_branch
    %23 = sbr.rel (%p21) target = $region8
  $region5: #{simple_transformer_block.1} parent=0 // loop_body
    %s25 = ssub.s32 %s20, 1
    %s26 = ssub.s32 %s20, 2
    %s33 = sadd.s32 1, %s28
    %p34 = scmp.ge.s32.totalorder %s33, 2
    %s35 = scalar_select %p34, 0, %s33
    %s36 = sadd.s32 1, %s27
    %s37 = scalar_select %p34, %s36, %s27
    %p38 = scmp.ge.s32.totalorder %s37, 2
    %s39 = scalar_select %p38, 0, %s37
    %s40 = ssub.s32 %s27, %s39
    %s41 = ssub.s32 %s28, %s35
    %s42 = sor.u32 %s40, %s41
    %p43 = scmp.eq.s32.totalorder %s42, 0
    %s45 = sadd.s32 %s44, 1
    %s46 = scalar_select %p43, %s44, %s45
    %p49 = pneg %p43
    %p50 = scmp.eq.s32.totalorder %s20, 3
    %p51 = por %p49, %p50
    %p52 = scmp.ne.s32.totalorder %s44, %s47
    %p53 = scmp.eq.s32.totalorder %s20, 0
    %p54 = por %p52, %p53
    %p55 = scmp.ne.s32.totalorder %s44, %s47
    %p56 = scmp.eq.s32.totalorder %s25, 3
    %p57 = por %p55, %p56
    %p58 = scmp.ne.s32.totalorder %s47, %s48
    %p59 = scmp.eq.s32.totalorder %s25, 0
    %p60 = por %p58, %p59
    %p61 = scmp.ne.s32.totalorder %s47, %s48
    %p62 = scmp.eq.s32.totalorder %s26, 3
    %p63 = por %p61, %p62
    %p65 = scmp.ne.s32.totalorder %s48, %s64
    %p66 = scmp.eq.s32.totalorder %s26, 0
    %p67 = por %p65, %p66
    %s68 = ssub.s32 %s27, %s39
    %p69 = scmp.eq.s32.totalorder %s68, 0
    %s71 = sadd.s32 %s70, 1
    %s72 = scalar_select %p69, %s70, %s71
    %p75 = pneg %p69
    %p76 = scmp.eq.s32.totalorder %s20, 3
    %p77 = por %p75, %p76
    %p78 = scmp.ne.s32.totalorder %s70, %s73
    %p79 = scmp.eq.s32.totalorder %s20, 0
    %p80 = por %p78, %p79
    %p81 = scmp.ne.s32.totalorder %s70, %s73
    %p82 = scmp.eq.s32.totalorder %s25, 3
    %p83 = por %p81, %p82
    %p84 = scmp.ne.s32.totalorder %s73, %s74
    %p85 = scmp.eq.s32.totalorder %s25, 0
    %p86 = por %p84, %p85
    %p87 = scmp.ne.s32.totalorder %s73, %s74
    %p88 = scmp.eq.s32.totalorder %s26, 3
    %p89 = por %p87, %p88
    %p91 = scmp.ne.s32.totalorder %s74, %s90
    %p92 = scmp.eq.s32.totalorder %s26, 0
    %p93 = por %p91, %p92
    %s95 = sadd.s32 %s94, 1
    %p98 = scmp.eq.s32.totalorder %s20, 3
    %p99 = scmp.ne.s32.totalorder %s94, %s96
    %p100 = scmp.eq.s32.totalorder %s20, 0
    %p101 = por %p99, %p100
    %p102 = scmp.ne.s32.totalorder %s94, %s96
    %p103 = scmp.eq.s32.totalorder %s25, 3
    %p104 = por %p102, %p103
    %p105 = scmp.ne.s32.totalorder %s96, %s97
    %p106 = scmp.eq.s32.totalorder %s25, 0
    %p107 = por %p105, %p106
    %p108 = scmp.ne.s32.totalorder %s96, %s97
    %p109 = scmp.eq.s32.totalorder %s26, 3
    %p110 = por %p108, %p109
    %p112 = scmp.ne.s32.totalorder %s97, %s111
    %p113 = scmp.eq.s32.totalorder %s26, 0
    %p114 = por %p112, %p113
    %s116 = sadd.s32 %s115, 1
    %p119 = scmp.eq.s32.totalorder %s20, 3
    %p120 = scmp.ne.s32.totalorder %s115, %s117
    %p121 = scmp.eq.s32.totalorder %s20, 0
    %p122 = por %p120, %p121
    %p123 = scmp.ne.s32.totalorder %s115, %s117
    %p124 = scmp.eq.s32.totalorder %s25, 3
    %p125 = por %p123, %p124
    %p126 = scmp.ne.s32.totalorder %s117, %s118
    %p127 = scmp.eq.s32.totalorder %s25, 0
    %p128 = por %p126, %p127
    %p129 = scmp.ne.s32.totalorder %s117, %s118
    %p130 = scmp.eq.s32.totalorder %s26, 3
    %p131 = por %p129, %p130
    %p133 = scmp.ne.s32.totalorder %s118, %s132
    %p134 = scmp.eq.s32.totalorder %s26, 0
    %p135 = por %p133, %p134
    %s137 = sadd.s32 %s136, 1
    %p140 = scmp.eq.s32.totalorder %s20, 3
    %p141 = scmp.ne.s32.totalorder %s136, %s138
    %p142 = scmp.eq.s32.totalorder %s20, 0
    %p143 = por %p141, %p142
    %p144 = scmp.ne.s32.totalorder %s136, %s138
    %p145 = scmp.eq.s32.totalorder %s25, 3
    %p146 = por %p144, %p145
    %p147 = scmp.ne.s32.totalorder %s138, %s139
    %p148 = scmp.eq.s32.totalorder %s25, 0
    %p149 = por %p147, %p148
    %p150 = scmp.ne.s32.totalorder %s138, %s139
    %p151 = scmp.eq.s32.totalorder %s26, 3
    %p152 = por %p150, %p151
    %p154 = scmp.ne.s32.totalorder %s139, %s153
    %p155 = scmp.eq.s32.totalorder %s26, 0
    %p156 = por %p154, %p155
    %s158 = sadd.s32 %s157, 1
    %p161 = scmp.eq.s32.totalorder %s20, 3
    %p162 = scmp.ne.s32.totalorder %s157, %s159
    %p163 = scmp.eq.s32.totalorder %s20, 0
    %p164 = por %p162, %p163
    %p165 = scmp.ne.s32.totalorder %s157, %s159
    %p166 = scmp.eq.s32.totalorder %s25, 3
    %p167 = por %p165, %p166
    %p168 = scmp.ne.s32.totalorder %s159, %s160
    %p169 = scmp.eq.s32.totalorder %s25, 0
    %p170 = por %p168, %p169
    %p171 = scmp.ne.s32.totalorder %s159, %s160
    %p172 = scmp.eq.s32.totalorder %s26, 3
    %p173 = por %p171, %p172
    %p175 = scmp.ne.s32.totalorder %s160, %s174
    %p176 = scmp.eq.s32.totalorder %s26, 0
    %p177 = por %p175, %p176
    %s179 = sadd.s32 %s178, 1
    %p182 = scmp.eq.s32.totalorder %s20, 3
    %p183 = scmp.ne.s32.totalorder %s178, %s180
    %p184 = scmp.eq.s32.totalorder %s20, 0
    %p185 = por %p183, %p184
    %p186 = scmp.ne.s32.totalorder %s178, %s180
    %p187 = scmp.eq.s32.totalorder %s25, 3
    %p188 = por %p186, %p187
    %p189 = scmp.ne.s32.totalorder %s180, %s181
    %p190 = scmp.eq.s32.totalorder %s25, 0
    %p191 = por %p189, %p190
    %p192 = scmp.ne.s32.totalorder %s180, %s181
    %p193 = scmp.eq.s32.totalorder %s26, 3
    %p194 = por %p192, %p193
    %p196 = scmp.ne.s32.totalorder %s181, %s195
    %p197 = scmp.eq.s32.totalorder %s26, 0
    %p198 = por %p196, %p197
    %s200 = sadd.s32 %s199, 1
    %p203 = scmp.eq.s32.totalorder %s20, 3
    %p204 = scmp.ne.s32.totalorder %s199, %s201
    %p205 = scmp.eq.s32.totalorder %s20, 0
    %p206 = por %p204, %p205
    %p207 = scmp.ne.s32.totalorder %s199, %s201
    %p208 = scmp.eq.s32.totalorder %s25, 3
    %p209 = por %p207, %p208
    %p210 = scmp.ne.s32.totalorder %s201, %s202
    %p211 = scmp.eq.s32.totalorder %s25, 0
    %p212 = por %p210, %p211
    %p213 = scmp.ne.s32.totalorder %s201, %s202
    %p214 = scmp.eq.s32.totalorder %s26, 3
    %p215 = por %p213, %p214
    %p217 = scmp.ne.s32.totalorder %s202, %s216
    %p218 = scmp.eq.s32.totalorder %s26, 0
    %p219 = por %p217, %p218
    %s221 = sadd.s32 %s220, 1
    %p224 = scmp.eq.s32.totalorder %s20, 3
    %p225 = scmp.ne.s32.totalorder %s220, %s222
    %p226 = scmp.eq.s32.totalorder %s20, 0
    %p227 = por %p225, %p226
    %p228 = scmp.ne.s32.totalorder %s220, %s222
    %p229 = scmp.eq.s32.totalorder %s25, 3
    %p230 = por %p228, %p229
    %p231 = scmp.ne.s32.totalorder %s222, %s223
    %p232 = scmp.eq.s32.totalorder %s25, 0
    %p233 = por %p231, %p232
    %p234 = scmp.ne.s32.totalorder %s222, %s223
    %p235 = scmp.eq.s32.totalorder %s26, 3
    %p236 = por %p234, %p235
    %p238 = scmp.ne.s32.totalorder %s223, %s237
    %p239 = scmp.eq.s32.totalorder %s26, 0
    %p240 = por %p238, %p239
    %s242 = sadd.s32 %s241, 1
    %p245 = scmp.eq.s32.totalorder %s20, 3
    %p246 = scmp.ne.s32.totalorder %s241, %s243
    %p247 = scmp.eq.s32.totalorder %s20, 0
    %p248 = por %p246, %p247
    %p249 = scmp.ne.s32.totalorder %s241, %s243
    %p250 = scmp.eq.s32.totalorder %s25, 3
    %p251 = por %p249, %p250
    %p252 = scmp.ne.s32.totalorder %s243, %s244
    %p253 = scmp.eq.s32.totalorder %s25, 0
    %p254 = por %p252, %p253
    %p255 = scmp.ne.s32.totalorder %s243, %s244
    %p256 = scmp.eq.s32.totalorder %s26, 3
    %p257 = por %p255, %p256
    %p259 = scmp.ne.s32.totalorder %s244, %s258
    %p260 = scmp.eq.s32.totalorder %s26, 0
    %p261 = por %p259, %p260
    %s263 = sadd.s32 %s262, 1
    %p266 = scmp.eq.s32.totalorder %s20, 3
    %p267 = scmp.ne.s32.totalorder %s262, %s264
    %p268 = scmp.eq.s32.totalorder %s20, 0
    %p269 = por %p267, %p268
    %p270 = scmp.ne.s32.totalorder %s262, %s264
    %p271 = scmp.eq.s32.totalorder %s25, 3
    %p272 = por %p270, %p271
    %p273 = scmp.ne.s32.totalorder %s264, %s265
    %p274 = scmp.eq.s32.totalorder %s25, 0
    %p275 = por %p273, %p274
    %p276 = scmp.ne.s32.totalorder %s264, %s265
    %p277 = scmp.eq.s32.totalorder %s26, 3
    %p278 = por %p276, %p277
    %p280 = scmp.ne.s32.totalorder %s265, %s279
    %p281 = scmp.eq.s32.totalorder %s26, 0
    %p282 = por %p280, %p281
    %s284 = sadd.s32 %s283, 1
    %p287 = scmp.eq.s32.totalorder %s20, 3
    %p288 = scmp.ne.s32.totalorder %s283, %s285
    %p289 = scmp.eq.s32.totalorder %s20, 0
    %p290 = por %p288, %p289
    %p291 = scmp.ne.s32.totalorder %s283, %s285
    %p292 = scmp.eq.s32.totalorder %s25, 3
    %p293 = por %p291, %p292
    %p294 = scmp.ne.s32.totalorder %s285, %s286
    %p295 = scmp.eq.s32.totalorder %s25, 0
    %p296 = por %p294, %p295
    %p297 = scmp.ne.s32.totalorder %s285, %s286
    %p298 = scmp.eq.s32.totalorder %s26, 3
    %p299 = por %p297, %p298
    %p301 = scmp.ne.s32.totalorder %s286, %s300
    %p302 = scmp.eq.s32.totalorder %s26, 0
    %p303 = por %p301, %p302
    %s305 = sadd.s32 %s304, 1
    %p308 = scmp.eq.s32.totalorder %s20, 3
    %p309 = scmp.ne.s32.totalorder %s304, %s306
    %p310 = scmp.eq.s32.totalorder %s20, 0
    %p311 = por %p309, %p310
    %p312 = scmp.ne.s32.totalorder %s304, %s306
    %p313 = scmp.eq.s32.totalorder %s25, 3
    %p314 = por %p312, %p313
    %p315 = scmp.ne.s32.totalorder %s306, %s307
    %p316 = scmp.eq.s32.totalorder %s25, 0
    %p317 = por %p315, %p316
    %p318 = scmp.ne.s32.totalorder %s306, %s307
    %p319 = scmp.eq.s32.totalorder %s26, 3
    %p320 = por %p318, %p319
    %p322 = scmp.ne.s32.totalorder %s307, %s321
    %p323 = scmp.eq.s32.totalorder %s26, 0
    %p324 = por %p322, %p323
    %s326 = sadd.s32 %s325, 1
    %p329 = scmp.eq.s32.totalorder %s20, 3
    %p330 = scmp.ne.s32.totalorder %s325, %s327
    %p331 = scmp.eq.s32.totalorder %s20, 0
    %p332 = por %p330, %p331
    %p333 = scmp.ne.s32.totalorder %s325, %s327
    %p334 = scmp.eq.s32.totalorder %s25, 3
    %p335 = por %p333, %p334
    %p336 = scmp.ne.s32.totalorder %s327, %s328
    %p337 = scmp.eq.s32.totalorder %s25, 0
    %p338 = por %p336, %p337
    %p339 = scmp.ne.s32.totalorder %s327, %s328
    %p340 = scmp.eq.s32.totalorder %s26, 3
    %p341 = por %p339, %p340
    %p343 = scmp.ne.s32.totalorder %s328, %s342
    %p344 = scmp.eq.s32.totalorder %s26, 0
    %p345 = por %p343, %p344
    %s346 = ssub.s32 %s27, %s39
    %s347 = ssub.s32 %s28, %s35
    %s348 = sor.u32 %s346, %s347
    %p349 = scmp.eq.s32.totalorder %s348, 0
    %s351 = sadd.s32 %s350, 1
    %s352 = scalar_select %p349, %s350, %s351
    %p355 = pneg %p349
    %p356 = scmp.eq.s32.totalorder %s20, 3
    %p357 = por %p355, %p356
    %p358 = scmp.ne.s32.totalorder %s350, %s353
    %p359 = scmp.eq.s32.totalorder %s20, 0
    %p360 = por %p358, %p359
    %p361 = scmp.ne.s32.totalorder %s350, %s353
    %p362 = scmp.eq.s32.totalorder %s25, 3
    %p363 = por %p361, %p362
    %p364 = scmp.ne.s32.totalorder %s353, %s354
    %p365 = scmp.eq.s32.totalorder %s25, 0
    %p366 = por %p364, %p365
    %p367 = scmp.ne.s32.totalorder %s353, %s354
    %p368 = scmp.eq.s32.totalorder %s26, 3
    %p369 = por %p367, %p368
    %p371 = scmp.ne.s32.totalorder %s354, %s370
    %p372 = scmp.eq.s32.totalorder %s26, 0
    %p373 = por %p371, %p372
    %p374 = scmp.le.s32.totalorder 1, %s20
    %p375 = scmp.lt.s32.totalorder %s20, 5
    %p376 = pnand %p374, %p375
    %p377 = pneg %p376
    // Predicated region
    $region9: #{simple_transformer_block.1} parent=5 // pred_check
      _
    $region10: #{simple_transformer_block.1} parent=5 // pred_check_branch
      %379 = sbr.rel (%p376) target = $region12
    $region11: #{simple_transformer_block.1} parent=5 // pred_region
      %s380 = ssub.s32 %s20, 1
      // Predicated region
      $region13: #{simple_transformer_block.1} parent=11 // pred_check
        %p381 = pneg %p107
      $region14: #{simple_transformer_block.1} parent=11 // pred_check_branch
        %383 = sbr.rel (%p381) target = $region16
      $region15: #{simple_transformer_block.1} parent=11 // pred_region
        _
      $region16: #{simple_transformer_block.1} parent=11 // pred_fallthru
        _
      // Predicated region
      $region17: #{simple_transformer_block.1} parent=11 // pred_check
        %p384 = pneg %p128
      $region18: #{simple_transformer_block.1} parent=11 // pred_check_branch
        %386 = sbr.rel (%p384) target = $region20
      $region19: #{simple_transformer_block.1} parent=11 // pred_region
        _
      $region20: #{simple_transformer_block.1} parent=11 // pred_fallthru
        _
      // Predicated region
      $region21: #{simple_transformer_block.1} parent=11 // pred_check
        %p387 = pneg %p149
      $region22: #{simple_transformer_block.1} parent=11 // pred_check_branch
        %389 = sbr.rel (%p387) target = $region24
      $region23: #{simple_transformer_block.1} parent=11 // pred_region
        _
      $region24: #{simple_transformer_block.1} parent=11 // pred_fallthru
        _
      // Predicated region
      $region25: #{simple_transformer_block.1} parent=11 // pred_check
        %p390 = pneg %p170
      $region26: #{simple_transformer_block.1} parent=11 // pred_check_branch
        %392 = sbr.rel (%p390) target = $region28
      $region27: #{simple_transformer_block.1} parent=11 // pred_region
        _
      $region28: #{simple_transformer_block.1} parent=11 // pred_fallthru
        _
      // Predicated region
      $region29: #{simple_transformer_block.1} parent=11 // pred_check
        %p393 = pneg %p191
      $region30: #{simple_transformer_block.1} parent=11 // pred_check_branch
        %395 = sbr.rel (%p393) target = $region32
      $region31: #{simple_transformer_block.1} parent=11 // pred_region
        _
      $region32: #{simple_transformer_block.1} parent=11 // pred_fallthru
        _
      // Predicated region
      $region33: #{simple_transformer_block.1} parent=11 // pred_check
        %p396 = pneg %p212
      $region34: #{simple_transformer_block.1} parent=11 // pred_check_branch
        %398 = sbr.rel (%p396) target = $region36
      $region35: #{simple_transformer_block.1} parent=11 // pred_region
        _
      $region36: #{simple_transformer_block.1} parent=11 // pred_fallthru
        _
      // Predicated region
      $region37: #{simple_transformer_block.1} parent=11 // pred_check
        %p399 = pneg %p233
      $region38: #{simple_transformer_block.1} parent=11 // pred_check_branch
        %401 = sbr.rel (%p399) target = $region40
      $region39: #{simple_transformer_block.1} parent=11 // pred_region
        _
      $region40: #{simple_transformer_block.1} parent=11 // pred_fallthru
        _
      // Predicated region
      $region41: #{simple_transformer_block.1} parent=11 // pred_check
        %p402 = pneg %p254
      $region42: #{simple_transformer_block.1} parent=11 // pred_check_branch
        %404 = sbr.rel (%p402) target = $region44
      $region43: #{simple_transformer_block.1} parent=11 // pred_region
        _
      $region44: #{simple_transformer_block.1} parent=11 // pred_fallthru
        _
      // Predicated region
      $region45: #{simple_transformer_block.1} parent=11 // pred_check
        %p405 = pneg %p275
      $region46: #{simple_transformer_block.1} parent=11 // pred_check_branch
        %407 = sbr.rel (%p405) target = $region48
      $region47: #{simple_transformer_block.1} parent=11 // pred_region
        _
      $region48: #{simple_transformer_block.1} parent=11 // pred_fallthru
        _
      // Predicated region
      $region49: #{simple_transformer_block.1} parent=11 // pred_check
        %p408 = pneg %p296
      $region50: #{simple_transformer_block.1} parent=11 // pred_check_branch
        %410 = sbr.rel (%p408) target = $region52
      $region51: #{simple_transformer_block.1} parent=11 // pred_region
        _
      $region52: #{simple_transformer_block.1} parent=11 // pred_fallthru
        _
      // Predicated region
      $region53: #{simple_transformer_block.1} parent=11 // pred_check
        %p411 = pneg %p317
      $region54: #{simple_transformer_block.1} parent=11 // pred_check_branch
        %413 = sbr.rel (%p411) target = $region56
      $region55: #{simple_transformer_block.1} parent=11 // pred_region
        _
      $region56: #{simple_transformer_block.1} parent=11 // pred_fallthru
        _
      // Predicated region
      $region57: #{simple_transformer_block.1} parent=11 // pred_check
        %p414 = pneg %p338
      $region58: #{simple_transformer_block.1} parent=11 // pred_check_branch
        %416 = sbr.rel (%p414) target = $region60
      $region59: #{simple_transformer_block.1} parent=11 // pred_region
        _
      $region60: #{simple_transformer_block.1} parent=11 // pred_fallthru
        _
    $region12: #{simple_transformer_block.1} parent=5 // pred_fallthru
      _
    %p417 = scmp.lt.s32.totalorder %s20, 4
    // Predicated region
    $region61: #{simple_transformer_block.1} parent=5 // pred_check
      %p418 = pneg %p417
    $region62: #{simple_transformer_block.1} parent=5 // pred_check_branch
      %420 = sbr.rel (%p418) target = $region64
    $region63: #{simple_transformer_block.1} parent=5 // pred_region
      // Predicated region
      $region65: #{simple_transformer_block.1} parent=63 // pred_check
        %p421 = pneg %p54
      $region66: #{simple_transformer_block.1} parent=63 // pred_check_branch
        %423 = sbr.rel (%p421) target = $region68
      $region67: #{simple_transformer_block.1} parent=63 // pred_region
        %s424 = smul.u32 16, %s28
        %p425 = scmp.lt.s32.totalorder %s27, 1
        %s426 = scalar_select %p425, %s27, 1
        %p427 = scmp.lt.s32.totalorder %s424, 31
        %s428 = scalar_select %p427, %s424, 31
        %s429 = smul.addr %s426, 32
        %s430 = sadd.s32 %s428, %s429
        %s431 = smul.addr %s430, 8
        %s432 = scalar_lea.vmem %s0, %s431
        %s433 = smul.u32 16, %s28
      $region68: #{simple_transformer_block.1} parent=63 // pred_fallthru
        _
      // Predicated region
      $region69: #{simple_transformer_block.1} parent=63 // pred_check
        %p434 = pneg %p80
      $region70: #{simple_transformer_block.1} parent=63 // pred_check_branch
        %436 = sbr.rel (%p434) target = $region72
      $region71: #{simple_transformer_block.1} parent=63 // pred_region
        %p437 = scmp.lt.s32.totalorder %s27, 1
        %s438 = scalar_select %p437, %s27, 1
        %s439 = smul.addr %s438, 2
        %s440 = smul.addr %s439, 4
        %s441 = scalar_lea.vmem %s1, %s440
      $region72: #{simple_transformer_block.1} parent=63 // pred_fallthru
        _
    $region64: #{simple_transformer_block.1} parent=5 // pred_fallthru
      _
    %p442 = scmp.le.s32.totalorder 1, %s20
    %p443 = scmp.lt.s32.totalorder %s20, 5
    %p444 = pnand %p442, %p443
    %p445 = pneg %p444
    // Predicated region
    $region73: #{simple_transformer_block.1} parent=5 // pred_check
      _
    $region74: #{simple_transformer_block.1} parent=5 // pred_check_branch
      %447 = sbr.rel (%p444) target = $region76
    $region75: #{simple_transformer_block.1} parent=5 // pred_region
      %s448 = ssub.s32 %s20, 1
      %s449 = smul.u32 16, %s30
      %p450 = scmp.lt.s32.totalorder %s29, 1
      %s451 = scalar_select %p450, %s29, 1
      %p452 = scmp.lt.s32.totalorder %s449, 31
      %s453 = scalar_select %p452, %s449, 31
      %s454 = smul.addr %s451, 32
      %s455 = sadd.s32 %s453, %s454
      %s456 = smul.addr %s455, 8
      %s457 = scalar_lea.vmem %s0, %s456
      %p458 = pneg %p60
      %p459 = pneg %p57
      %p460 = scmp.lt.s32.totalorder %s29, 1
      %s461 = scalar_select %p460, %s29, 1
      %s462 = smul.addr %s461, 2
      %s463 = smul.addr %s462, 4
      %s464 = scalar_lea.vmem %s1, %s463
      %p465 = pneg %p86
      %p466 = pneg %p83
      %p467 = pneg %p107
      %p468 = pneg %p104
      %p469 = pneg %p128
      %p470 = pneg %p125
      %p471 = pneg %p149
      %p472 = pneg %p146
      %p473 = pneg %p170
      %p474 = pneg %p167
      %p475 = pneg %p191
      %p476 = pneg %p188
      %p477 = pneg %p212
      %p478 = pneg %p209
      %p479 = pneg %p233
      %p480 = pneg %p230
      %p481 = pneg %p254
      %p482 = pneg %p251
      %p483 = pneg %p275
      %p484 = pneg %p272
      %p485 = pneg %p296
      %p486 = pneg %p293
      %p487 = pneg %p317
      %p488 = pneg %p314
      %p489 = pneg %p338
      %p490 = pneg %p335
      %p491 = pneg %p366
      %p492 = pneg %p363
      %p493 = scmp.lt.s32.totalorder %s29, 1
      %s494 = scalar_select %p493, %s29, 1
      %p495 = scmp.lt.s32.totalorder %s30, 1
      %s496 = scalar_select %p495, %s30, 1
      %s497 = smul.addr %s494, 2
      %s498 = sadd.s32 %s496, %s497
      %s499 = smul.addr %s498, 8
      %s500 = scalar_lea.vmem %s14, %s499
      %s501 = smul.u32 16, %s30
      %p502 = scmp.lt.s32.totalorder %s29, 1
      %s503 = scalar_select %p502, %s29, 1
      %p504 = scmp.lt.s32.totalorder %s501, 31
      %s505 = scalar_select %p504, %s501, 31
      %s506 = smul.addr %s503, 32
      %s507 = sadd.s32 %s505, %s506
      %s508 = smul.addr %s507, 8
      %s509 = scalar_lea.vmem %s0, %s508
      %s510 = smul.u32 16, %s30
      %p511 = scmp.lt.s32.totalorder %s29, 1
      %s512 = scalar_select %p511, %s29, 1
      %s513 = smul.addr %s512, 2
      %s514 = smul.addr %s513, 4
      %s515 = scalar_lea.vmem %s1, %s514
      %p516 = scmp.lt.s32.totalorder %s29, 1
      %s517 = scalar_select %p516, %s29, 1
      %p518 = scmp.lt.s32.totalorder %s30, 1
      %s519 = scalar_select %p518, %s30, 1
      %s520 = smul.addr %s517, 2
      %s521 = sadd.s32 %s519, %s520
      %s522 = smul.addr %s521, 8
      %s523 = scalar_lea.vmem %s14, %s522
      %v524 = vld [vmem:[%s509] sm:$0xff]
      %v525 = vld [vmem:[%s509 + $0x8] sm:$0xff]
      %v526 = vld [vmem:[%s509 + $0x10] sm:$0xff]
      %v527 = vld [vmem:[%s509 + $0x18] sm:$0xff]
      %v528 = vld [vmem:[%s509 + $0x20] sm:$0xff]
      %v529 = vld [vmem:[%s509 + $0x28] sm:$0xff]
      %v530 = vld [vmem:[%s509 + $0x30] sm:$0xff]
      %v531 = vld [vmem:[%s509 + $0x38] sm:$0xff]
      %v532 = vld [vmem:[%s509 + $0x40] sm:$0xff]
      %v533 = vld [vmem:[%s509 + $0x48] sm:$0xff]
      %v534 = vld [vmem:[%s509 + $0x50] sm:$0xff]
      %v535 = vld [vmem:[%s509 + $0x58] sm:$0xff]
      %v536 = vld [vmem:[%s509 + $0x60] sm:$0xff]
      %v537 = vld [vmem:[%s509 + $0x68] sm:$0xff]
      %v538 = vld [vmem:[%s509 + $0x70] sm:$0xff]
      %v539 = vld [vmem:[%s509 + $0x78] sm:$0xff]
      %v540 = vld [vmem:[%s515] sm:$0xff]
      %v541 = vld [vmem:[%s2] sm:$0xff]
      %v542 = vld [vmem:[%s3] sm:$0x3]
      %v544 = vlaneseq
      %v545 = vshrl.u32 %v544, 7
      %v546 = vsub.s32 0, %v545
      %v547 = vrot.slane %v542, %v546
      %v548 = vlaneseq
      %v549 = vshrl.u32 %v548, 7
      %v550 = vsub.s32 1, %v549
      %v551 = vrot.slane %v542, %v550
      %v555 = vcombine.high %v541, %v541
      %vm556 = vcmask 31744
      %v558 = vsel %vm556, %v524, 0
      %v561 = vsel %vm556, %v525, 0
      %v564 = vsel %vm556, %v526, 0
      %v567 = vsel %vm556, %v527, 0
      %v570 = vsel %vm556, %v528, 0
      %v573 = vsel %vm556, %v529, 0
      %v576 = vsel %vm556, %v530, 0
      %v579 = vsel %vm556, %v531, 0
      %v582 = vsel %vm556, %v532, 0
      %v585 = vsel %vm556, %v533, 0
      %v588 = vsel %vm556, %v534, 0
      %v591 = vsel %vm556, %v535, 0
      %v594 = vsel %vm556, %v536, 0
      %v597 = vsel %vm556, %v537, 0
      %v600 = vsel %vm556, %v538, 0
      %v603 = vsel %vm556, %v539, 0
      %vm605 = vcmask 1043456
      %v606 = vsel %vm605, %v541, 0
      %v608 = vsel %vm605, %v555, 0
      %610 = vmatprep.subr.mxu0 0.0
      %611 = vmatpush1.msra.mxu0 0.0
      %612 = vmatprep.subr.mxu0 0.0
      %613 = vmatpush1.msra.mxu0 0.0
      %614 = vmatprep.subr.mxu0 0.0
      %615 = vmatpush1.msra.mxu0 0.0
      %616 = vmatprep.subr.mxu0 0.0
      %617 = vmatpush1.msra.mxu0 0.0
      %618 = vmatprep.subr.mxu0 0.0
      %619 = vmatpush1.msra.mxu0 0.0
      %620 = vmatprep.subr.mxu0 0.0
      %621 = vmatpush1.msra.mxu0 0.0
      %622 = vmatprep.subr.mxu0 0.0
      %623 = vmatpush1.msra.mxu0 0.0
      %624 = vmatprep.subr.mxu0 0.0
      %625 = vmatpush1.msra.mxu0 0.0
      %626 = vmatprep.subr.mxu0 0.0
      %627 = vmatpush1.msra.mxu0 0.0
      %628 = vmatprep.subr.mxu0 0.0
      %629 = vmatpush1.msra.mxu0 0.0
      %630 = vmatprep.subr.mxu0 0.0
      %631 = vmatpush1.msra.mxu0 0.0
      %632 = vmatprep.subr.mxu0 0.0
      %633 = vmatpush1.msra.mxu0 0.0
      %634 = vmatprep.subr.mxu0 0.0
      %635 = vmatpush1.msra.mxu0 0.0
      %636 = vmatprep.subr.mxu0 0.0
      %637 = vmatpush1.msra.mxu0 0.0
      %638 = vmatprep.subr.mxu0 0.0
      %639 = vmatpush1.msra.mxu0 0.0
      %640 = vmatprep.subr.mxu0 %v608
      %641 = vmatpush1.msra.mxu0 %v606
      %642 = vmatprep.subr.mxu0 0.0
      %643 = vmatpush2.msra.mxu0 0.0
      %644 = vmatprep.subr.mxu0 0.0
      %645 = vmatpush2.msra.mxu0 0.0
      %646 = vmatprep.subr.mxu0 0.0
      %647 = vmatpush2.msra.mxu0 0.0
      %648 = vmatprep.subr.mxu0 0.0
      %649 = vmatpush2.msra.mxu0 0.0
      %650 = vmatprep.subr.mxu0 0.0
      %651 = vmatpush2.msra.mxu0 0.0
      %652 = vmatprep.subr.mxu0 0.0
      %653 = vmatpush2.msra.mxu0 0.0
      %654 = vmatprep.subr.mxu0 0.0
      %655 = vmatpush2.msra.mxu0 0.0
      %656 = vmatprep.subr.mxu0 0.0
      %657 = vmatpush2.msra.mxu0 0.0
      %658 = vmatprep.subr.mxu0 0.0
      %659 = vmatpush2.msra.mxu0 0.0
      %660 = vmatprep.subr.mxu0 0.0
      %661 = vmatpush2.msra.mxu0 0.0
      %662 = vmatprep.subr.mxu0 0.0
      %663 = vmatpush2.msra.mxu0 0.0
      %664 = vmatprep.subr.mxu0 0.0
      %665 = vmatpush2.msra.mxu0 0.0
      %666 = vmatprep.subr.mxu0 0.0
      %667 = vmatpush2.msra.mxu0 0.0
      %668 = vmatprep.subr.mxu0 0.0
      %669 = vmatpush2.msra.mxu0 0.0
      %670 = vmatprep.subr.mxu0 0.0
      %671 = vmatpush2.msra.mxu0 0.0
      %672 = vmatprep.subr.mxu0 0.0
      %673 = vmatpush2.msra.mxu0 0.0
      %674 = vmatprep.mubr.f32.mxu0 0.0
      %675 = vmatmul.mubr.f32.gmra.mxu0 %v558
      %v676 = vpop.f32.mrf.mxu0
      %v677 = vadd.f32 %v547, %v676
      %v678 = vpop.f32.mrf.mxu0
      %v679 = vadd.f32 %v551, %v678
      %680 = vmatprep.mubr.f32.mxu0 0.0
      %681 = vmatmul.mubr.f32.gmra.mxu0 %v561
      %v682 = vpop.f32.mrf.mxu0
      %v683 = vadd.f32 %v547, %v682
      %v684 = vpop.f32.mrf.mxu0
      %v685 = vadd.f32 %v551, %v684
      %686 = vmatprep.mubr.f32.mxu0 0.0
      %687 = vmatmul.mubr.f32.gmra.mxu0 %v564
      %v688 = vpop.f32.mrf.mxu0
      %v689 = vadd.f32 %v547, %v688
      %v690 = vpop.f32.mrf.mxu0
      %v691 = vadd.f32 %v551, %v690
      %692 = vmatprep.mubr.f32.mxu0 0.0
      %693 = vmatmul.mubr.f32.gmra.mxu0 %v567
      %v694 = vpop.f32.mrf.mxu0
      %v695 = vadd.f32 %v547, %v694
      %v696 = vpop.f32.mrf.mxu0
      %v697 = vadd.f32 %v551, %v696
      %698 = vmatprep.mubr.f32.mxu0 0.0
      %699 = vmatmul.mubr.f32.gmra.mxu0 %v570
      %v700 = vpop.f32.mrf.mxu0
      %v701 = vadd.f32 %v547, %v700
      %v702 = vpop.f32.mrf.mxu0
      %v703 = vadd.f32 %v551, %v702
      %704 = vmatprep.mubr.f32.mxu0 0.0
      %705 = vmatmul.mubr.f32.gmra.mxu0 %v573
      %v706 = vpop.f32.mrf.mxu0
      %v707 = vadd.f32 %v547, %v706
      %v708 = vpop.f32.mrf.mxu0
      %v709 = vadd.f32 %v551, %v708
      %710 = vmatprep.mubr.f32.mxu0 0.0
      %711 = vmatmul.mubr.f32.gmra.mxu0 %v576
      %v712 = vpop.f32.mrf.mxu0
      %v713 = vadd.f32 %v547, %v712
      %v714 = vpop.f32.mrf.mxu0
      %v715 = vadd.f32 %v551, %v714
      %716 = vmatprep.mubr.f32.mxu0 0.0
      %717 = vmatmul.mubr.f32.gmra.mxu0 %v579
      %v718 = vpop.f32.mrf.mxu0
      %v719 = vadd.f32 %v547, %v718
      %v720 = vpop.f32.mrf.mxu0
      %v721 = vadd.f32 %v551, %v720
      %722 = vmatprep.mubr.f32.mxu0 0.0
      %723 = vmatmul.mubr.f32.gmra.mxu0 %v582
      %v724 = vpop.f32.mrf.mxu0
      %v725 = vadd.f32 %v547, %v724
      %v726 = vpop.f32.mrf.mxu0
      %v727 = vadd.f32 %v551, %v726
      %728 = vmatprep.mubr.f32.mxu0 0.0
      %729 = vmatmul.mubr.f32.gmra.mxu0 %v585
      %v730 = vpop.f32.mrf.mxu0
      %v731 = vadd.f32 %v547, %v730
      %v732 = vpop.f32.mrf.mxu0
      %v733 = vadd.f32 %v551, %v732
      %734 = vmatprep.mubr.f32.mxu0 0.0
      %735 = vmatmul.mubr.f32.gmra.mxu0 %v588
      %v736 = vpop.f32.mrf.mxu0
      %v737 = vadd.f32 %v547, %v736
      %v738 = vpop.f32.mrf.mxu0
      %v739 = vadd.f32 %v551, %v738
      %740 = vmatprep.mubr.f32.mxu0 0.0
      %741 = vmatmul.mubr.f32.gmra.mxu0 %v591
      %v742 = vpop.f32.mrf.mxu0
      %v743 = vadd.f32 %v547, %v742
      %v744 = vpop.f32.mrf.mxu0
      %v745 = vadd.f32 %v551, %v744
      %746 = vmatprep.mubr.f32.mxu0 0.0
      %747 = vmatmul.mubr.f32.gmra.mxu0 %v594
      %v748 = vpop.f32.mrf.mxu0
      %v749 = vadd.f32 %v547, %v748
      %v750 = vpop.f32.mrf.mxu0
      %v751 = vadd.f32 %v551, %v750
      %752 = vmatprep.mubr.f32.mxu0 0.0
      %753 = vmatmul.mubr.f32.gmra.mxu0 %v597
      %v754 = vpop.f32.mrf.mxu0
      %v755 = vadd.f32 %v547, %v754
      %v756 = vpop.f32.mrf.mxu0
      %v757 = vadd.f32 %v551, %v756
      %758 = vmatprep.mubr.f32.mxu0 0.0
      %759 = vmatmul.mubr.f32.gmra.mxu0 %v600
      %v760 = vpop.f32.mrf.mxu0
      %v761 = vadd.f32 %v547, %v760
      %v762 = vpop.f32.mrf.mxu0
      %v763 = vadd.f32 %v551, %v762
      %764 = vmatprep.mubr.f32.mxu0 0.0
      %765 = vmatmul.mubr.f32.gmra.mxu0 %v603
      %v766 = vpop.f32.mrf.mxu0
      %v767 = vadd.f32 %v547, %v766
      %v768 = vpop.f32.mrf.mxu0
      %v769 = vadd.f32 %v551, %v768
      %770 = vdwg.mxu0
      %v771 = vld [vmem:[%s4] sm:$0xff]
      %v772 = vld [vmem:[%s4 + $0x8] sm:$0xff]
      %v773 = vld [vmem:[%s4 + $0x10] sm:$0xff]
      %v774 = vld [vmem:[%s4 + $0x18] sm:$0xff]
      %v775 = vld [vmem:[%s4 + $0x20] sm:$0xff]
      %v776 = vld [vmem:[%s4 + $0x28] sm:$0xff]
      %v777 = vld [vmem:[%s4 + $0x30] sm:$0xff]
      %v778 = vld [vmem:[%s4 + $0x38] sm:$0xff]
      %v779 = vld [vmem:[%s4 + $0x40] sm:$0xff]
      %v780 = vld [vmem:[%s4 + $0x48] sm:$0xff]
      %v781 = vld [vmem:[%s4 + $0x50] sm:$0xff]
      %v782 = vld [vmem:[%s4 + $0x58] sm:$0xff]
      %v783 = vld [vmem:[%s4 + $0x60] sm:$0xff]
      %v784 = vld [vmem:[%s4 + $0x68] sm:$0xff]
      %v785 = vld [vmem:[%s4 + $0x70] sm:$0xff]
      %v786 = vld [vmem:[%s4 + $0x78] sm:$0xff]
      %v787 = vld [vmem:[%s4 + $0x80] sm:$0xff]
      %v788 = vld [vmem:[%s4 + $0x88] sm:$0xff]
      %v789 = vld [vmem:[%s4 + $0x90] sm:$0xff]
      %v790 = vld [vmem:[%s4 + $0x98] sm:$0xff]
      %v791 = vld [vmem:[%s4 + $0xa0] sm:$0xff]
      %v792 = vld [vmem:[%s4 + $0xa8] sm:$0xff]
      %v793 = vld [vmem:[%s4 + $0xb0] sm:$0xff]
      %v794 = vld [vmem:[%s4 + $0xb8] sm:$0xff]
      %v795 = vld [vmem:[%s4 + $0xc0] sm:$0xff]
      %v796 = vld [vmem:[%s4 + $0xc8] sm:$0xff]
      %v797 = vld [vmem:[%s4 + $0xd0] sm:$0xff]
      %v798 = vld [vmem:[%s4 + $0xd8] sm:$0xff]
      %v799 = vld [vmem:[%s4 + $0xe0] sm:$0xff]
      %v800 = vld [vmem:[%s4 + $0xe8] sm:$0xff]
      %v801 = vld [vmem:[%s4 + $0xf0] sm:$0xff]
      %v802 = vld [vmem:[%s4 + $0xf8] sm:$0xff]
      %v803 = vld [vmem:[%s5] sm:$0xff]
      %v804 = vld [vmem:[%s5 + $0x8] sm:$0xff]
      %v805 = vld [vmem:[%s5 + $0x10] sm:$0xff]
      %v806 = vld [vmem:[%s5 + $0x18] sm:$0xff]
      %v807 = vld [vmem:[%s5 + $0x20] sm:$0xff]
      %v808 = vld [vmem:[%s5 + $0x28] sm:$0xff]
      %v809 = vld [vmem:[%s5 + $0x30] sm:$0xff]
      %v810 = vld [vmem:[%s5 + $0x38] sm:$0xff]
      %v811 = vld [vmem:[%s5 + $0x40] sm:$0xff]
      %v812 = vld [vmem:[%s5 + $0x48] sm:$0xff]
      %v813 = vld [vmem:[%s5 + $0x50] sm:$0xff]
      %v814 = vld [vmem:[%s5 + $0x58] sm:$0xff]
      %v815 = vld [vmem:[%s5 + $0x60] sm:$0xff]
      %v816 = vld [vmem:[%s5 + $0x68] sm:$0xff]
      %v817 = vld [vmem:[%s5 + $0x70] sm:$0xff]
      %v818 = vld [vmem:[%s5 + $0x78] sm:$0xff]
      %v819 = vld [vmem:[%s5 + $0x80] sm:$0xff]
      %v820 = vld [vmem:[%s5 + $0x88] sm:$0xff]
      %v821 = vld [vmem:[%s5 + $0x90] sm:$0xff]
      %v822 = vld [vmem:[%s5 + $0x98] sm:$0xff]
      %v823 = vld [vmem:[%s5 + $0xa0] sm:$0xff]
      %v824 = vld [vmem:[%s5 + $0xa8] sm:$0xff]
      %v825 = vld [vmem:[%s5 + $0xb0] sm:$0xff]
      %v826 = vld [vmem:[%s5 + $0xb8] sm:$0xff]
      %v827 = vld [vmem:[%s5 + $0xc0] sm:$0xff]
      %v828 = vld [vmem:[%s5 + $0xc8] sm:$0xff]
      %v829 = vld [vmem:[%s5 + $0xd0] sm:$0xff]
      %v830 = vld [vmem:[%s5 + $0xd8] sm:$0xff]
      %v831 = vld [vmem:[%s5 + $0xe0] sm:$0xff]
      %v832 = vld [vmem:[%s5 + $0xe8] sm:$0xff]
      %v833 = vld [vmem:[%s5 + $0xf0] sm:$0xff]
      %v834 = vld [vmem:[%s5 + $0xf8] sm:$0xff]
      %836 = vset.pattern.permute.xlu0 0
      %837 = vperm.xlu0 %836, %v803
      %v838 = vpop.permute.xlu0 %837
      %841 = vset.pattern.permute.xlu0 0
      %842 = vperm.xlu0 %841, %v804
      %v843 = vpop.permute.xlu0 %842
      %846 = vset.pattern.permute.xlu0 0
      %847 = vperm.xlu0 %846, %v805
      %v848 = vpop.permute.xlu0 %847
      %851 = vset.pattern.permute.xlu0 0
      %852 = vperm.xlu0 %851, %v806
      %v853 = vpop.permute.xlu0 %852
      %856 = vset.pattern.permute.xlu0 0
      %857 = vperm.xlu0 %856, %v807
      %v858 = vpop.permute.xlu0 %857
      %861 = vset.pattern.permute.xlu0 0
      %862 = vperm.xlu0 %861, %v808
      %v863 = vpop.permute.xlu0 %862
      %866 = vset.pattern.permute.xlu0 0
      %867 = vperm.xlu0 %866, %v809
      %v868 = vpop.permute.xlu0 %867
      %871 = vset.pattern.permute.xlu0 0
      %872 = vperm.xlu0 %871, %v810
      %v873 = vpop.permute.xlu0 %872
      %876 = vset.pattern.permute.xlu0 0
      %877 = vperm.xlu0 %876, %v811
      %v878 = vpop.permute.xlu0 %877
      %881 = vset.pattern.permute.xlu0 0
      %882 = vperm.xlu0 %881, %v812
      %v883 = vpop.permute.xlu0 %882
      %886 = vset.pattern.permute.xlu0 0
      %887 = vperm.xlu0 %886, %v813
      %v888 = vpop.permute.xlu0 %887
      %891 = vset.pattern.permute.xlu0 0
      %892 = vperm.xlu0 %891, %v814
      %v893 = vpop.permute.xlu0 %892
      %896 = vset.pattern.permute.xlu0 0
      %897 = vperm.xlu0 %896, %v815
      %v898 = vpop.permute.xlu0 %897
      %901 = vset.pattern.permute.xlu0 0
      %902 = vperm.xlu0 %901, %v816
      %v903 = vpop.permute.xlu0 %902
      %906 = vset.pattern.permute.xlu0 0
      %907 = vperm.xlu0 %906, %v817
      %v908 = vpop.permute.xlu0 %907
      %911 = vset.pattern.permute.xlu0 0
      %912 = vperm.xlu0 %911, %v818
      %v913 = vpop.permute.xlu0 %912
      %916 = vset.pattern.permute.xlu0 0
      %917 = vperm.xlu0 %916, %v819
      %v918 = vpop.permute.xlu0 %917
      %921 = vset.pattern.permute.xlu0 0
      %922 = vperm.xlu0 %921, %v820
      %v923 = vpop.permute.xlu0 %922
      %926 = vset.pattern.permute.xlu0 0
      %927 = vperm.xlu0 %926, %v821
      %v928 = vpop.permute.xlu0 %927
      %931 = vset.pattern.permute.xlu0 0
      %932 = vperm.xlu0 %931, %v822
      %v933 = vpop.permute.xlu0 %932
      %936 = vset.pattern.permute.xlu0 0
      %937 = vperm.xlu0 %936, %v823
      %v938 = vpop.permute.xlu0 %937
      %941 = vset.pattern.permute.xlu0 0
      %942 = vperm.xlu0 %941, %v824
      %v943 = vpop.permute.xlu0 %942
      %946 = vset.pattern.permute.xlu0 0
      %947 = vperm.xlu0 %946, %v825
      %v948 = vpop.permute.xlu0 %947
      %951 = vset.pattern.permute.xlu0 0
      %952 = vperm.xlu0 %951, %v826
      %v953 = vpop.permute.xlu0 %952
      %956 = vset.pattern.permute.xlu0 0
      %957 = vperm.xlu0 %956, %v827
      %v958 = vpop.permute.xlu0 %957
      %961 = vset.pattern.permute.xlu0 0
      %962 = vperm.xlu0 %961, %v828
      %v963 = vpop.permute.xlu0 %962
      %966 = vset.pattern.permute.xlu0 0
      %967 = vperm.xlu0 %966, %v829
      %v968 = vpop.permute.xlu0 %967
      %971 = vset.pattern.permute.xlu0 0
      %972 = vperm.xlu0 %971, %v830
      %v973 = vpop.permute.xlu0 %972
      %976 = vset.pattern.permute.xlu0 0
      %977 = vperm.xlu0 %976, %v831
      %v978 = vpop.permute.xlu0 %977
      %981 = vset.pattern.permute.xlu0 0
      %982 = vperm.xlu0 %981, %v832
      %v983 = vpop.permute.xlu0 %982
      %986 = vset.pattern.permute.xlu0 0
      %987 = vperm.xlu0 %986, %v833
      %v988 = vpop.permute.xlu0 %987
      %991 = vset.pattern.permute.xlu0 0
      %992 = vperm.xlu0 %991, %v834
      %v993 = vpop.permute.xlu0 %992
      %v996 = vcombine.high %v540, %v540
      %v998 = vsel %vm556, %v771, 0
      %v1001 = vsel %vm556, %v772, 0
      %v1004 = vsel %vm556, %v773, 0
      %v1007 = vsel %vm556, %v774, 0
      %v1010 = vsel %vm556, %v775, 0
      %v1013 = vsel %vm556, %v776, 0
      %v1016 = vsel %vm556, %v777, 0
      %v1019 = vsel %vm556, %v778, 0
      %v1022 = vsel %vm556, %v779, 0
      %v1025 = vsel %vm556, %v780, 0
      %v1028 = vsel %vm556, %v781, 0
      %v1031 = vsel %vm556, %v782, 0
      %v1034 = vsel %vm556, %v783, 0
      %v1037 = vsel %vm556, %v784, 0
      %v1040 = vsel %vm556, %v785, 0
      %v1043 = vsel %vm556, %v786, 0
      %v1046 = vsel %vm556, %v787, 0
      %v1049 = vsel %vm556, %v788, 0
      %v1052 = vsel %vm556, %v789, 0
      %v1055 = vsel %vm556, %v790, 0
      %v1058 = vsel %vm556, %v791, 0
      %v1061 = vsel %vm556, %v792, 0
      %v1064 = vsel %vm556, %v793, 0
      %v1067 = vsel %vm556, %v794, 0
      %v1070 = vsel %vm556, %v795, 0
      %v1073 = vsel %vm556, %v796, 0
      %v1076 = vsel %vm556, %v797, 0
      %v1079 = vsel %vm556, %v798, 0
      %v1082 = vsel %vm556, %v799, 0
      %v1085 = vsel %vm556, %v800, 0
      %v1088 = vsel %vm556, %v801, 0
      %v1091 = vsel %vm556, %v802, 0
      %v1093 = vsel %vm605, %v540, 0
      %v1095 = vsel %vm605, %v996, 0
      %1097 = vmatprep.subr.mxu0 0.0
      %1098 = vmatpush1.msra.mxu0 0.0
      %1099 = vmatprep.subr.mxu0 0.0
      %1100 = vmatpush1.msra.mxu0 0.0
      %1101 = vmatprep.subr.mxu0 0.0
      %1102 = vmatpush1.msra.mxu0 0.0
      %1103 = vmatprep.subr.mxu0 0.0
      %1104 = vmatpush1.msra.mxu0 0.0
      %1105 = vmatprep.subr.mxu0 0.0
      %1106 = vmatpush1.msra.mxu0 0.0
      %1107 = vmatprep.subr.mxu0 0.0
      %1108 = vmatpush1.msra.mxu0 0.0
      %1109 = vmatprep.subr.mxu0 0.0
      %1110 = vmatpush1.msra.mxu0 0.0
      %1111 = vmatprep.subr.mxu0 0.0
      %1112 = vmatpush1.msra.mxu0 0.0
      %1113 = vmatprep.subr.mxu0 0.0
      %1114 = vmatpush1.msra.mxu0 0.0
      %1115 = vmatprep.subr.mxu0 0.0
      %1116 = vmatpush1.msra.mxu0 0.0
      %1117 = vmatprep.subr.mxu0 0.0
      %1118 = vmatpush1.msra.mxu0 0.0
      %1119 = vmatprep.subr.mxu0 0.0
      %1120 = vmatpush1.msra.mxu0 0.0
      %1121 = vmatprep.subr.mxu0 0.0
      %1122 = vmatpush1.msra.mxu0 0.0
      %1123 = vmatprep.subr.mxu0 0.0
      %1124 = vmatpush1.msra.mxu0 0.0
      %1125 = vmatprep.subr.mxu0 0.0
      %1126 = vmatpush1.msra.mxu0 0.0
      %1127 = vmatprep.subr.mxu0 %v1095
      %1128 = vmatpush1.msra.mxu0 %v1093
      %1129 = vmatprep.subr.mxu0 0.0
      %1130 = vmatpush2.msra.mxu0 0.0
      %1131 = vmatprep.subr.mxu0 0.0
      %1132 = vmatpush2.msra.mxu0 0.0
      %1133 = vmatprep.subr.mxu0 0.0
      %1134 = vmatpush2.msra.mxu0 0.0
      %1135 = vmatprep.subr.mxu0 0.0
      %1136 = vmatpush2.msra.mxu0 0.0
      %1137 = vmatprep.subr.mxu0 0.0
      %1138 = vmatpush2.msra.mxu0 0.0
      %1139 = vmatprep.subr.mxu0 0.0
      %1140 = vmatpush2.msra.mxu0 0.0
      %1141 = vmatprep.subr.mxu0 0.0
      %1142 = vmatpush2.msra.mxu0 0.0
      %1143 = vmatprep.subr.mxu0 0.0
      %1144 = vmatpush2.msra.mxu0 0.0
      %1145 = vmatprep.subr.mxu0 0.0
      %1146 = vmatpush2.msra.mxu0 0.0
      %1147 = vmatprep.subr.mxu0 0.0
      %1148 = vmatpush2.msra.mxu0 0.0
      %1149 = vmatprep.subr.mxu0 0.0
      %1150 = vmatpush2.msra.mxu0 0.0
      %1151 = vmatprep.subr.mxu0 0.0
      %1152 = vmatpush2.msra.mxu0 0.0
      %1153 = vmatprep.subr.mxu0 0.0
      %1154 = vmatpush2.msra.mxu0 0.0
      %1155 = vmatprep.subr.mxu0 0.0
      %1156 = vmatpush2.msra.mxu0 0.0
      %1157 = vmatprep.subr.mxu0 0.0
      %1158 = vmatpush2.msra.mxu0 0.0
      %1159 = vmatprep.subr.mxu0 0.0
      %1160 = vmatpush2.msra.mxu0 0.0
      %1161 = vmatprep.mubr.f32.mxu0 0.0
      %1162 = vmatmul.mubr.f32.gmra.mxu0 %v998
      %v1163 = vpop.f32.mrf.mxu0
      %v1164 = vadd.f32 %v838, %v1163
      %v1165 = vpop.f32.mrf.mxu0
      %v1166 = vadd.f32 %v838, %v1165
      %1167 = vmatprep.mubr.f32.mxu0 0.0
      %1168 = vmatmul.mubr.f32.gmra.mxu0 %v1001
      %v1169 = vpop.f32.mrf.mxu0
      %v1170 = vadd.f32 %v843, %v1169
      %v1171 = vpop.f32.mrf.mxu0
      %v1172 = vadd.f32 %v843, %v1171
      %1173 = vmatprep.mubr.f32.mxu0 0.0
      %1174 = vmatmul.mubr.f32.gmra.mxu0 %v1004
      %v1175 = vpop.f32.mrf.mxu0
      %v1176 = vadd.f32 %v848, %v1175
      %v1177 = vpop.f32.mrf.mxu0
      %v1178 = vadd.f32 %v848, %v1177
      %1179 = vmatprep.mubr.f32.mxu0 0.0
      %1180 = vmatmul.mubr.f32.gmra.mxu0 %v1007
      %v1181 = vpop.f32.mrf.mxu0
      %v1182 = vadd.f32 %v853, %v1181
      %v1183 = vpop.f32.mrf.mxu0
      %v1184 = vadd.f32 %v853, %v1183
      %1185 = vmatprep.mubr.f32.mxu0 0.0
      %1186 = vmatmul.mubr.f32.gmra.mxu0 %v1010
      %v1187 = vpop.f32.mrf.mxu0
      %v1188 = vadd.f32 %v858, %v1187
      %v1189 = vpop.f32.mrf.mxu0
      %v1190 = vadd.f32 %v858, %v1189
      %1191 = vmatprep.mubr.f32.mxu0 0.0
      %1192 = vmatmul.mubr.f32.gmra.mxu0 %v1013
      %v1193 = vpop.f32.mrf.mxu0
      %v1194 = vadd.f32 %v863, %v1193
      %v1195 = vpop.f32.mrf.mxu0
      %v1196 = vadd.f32 %v863, %v1195
      %1197 = vmatprep.mubr.f32.mxu0 0.0
      %1198 = vmatmul.mubr.f32.gmra.mxu0 %v1016
      %v1199 = vpop.f32.mrf.mxu0
      %v1200 = vadd.f32 %v868, %v1199
      %v1201 = vpop.f32.mrf.mxu0
      %v1202 = vadd.f32 %v868, %v1201
      %1203 = vmatprep.mubr.f32.mxu0 0.0
      %1204 = vmatmul.mubr.f32.gmra.mxu0 %v1019
      %v1205 = vpop.f32.mrf.mxu0
      %v1206 = vadd.f32 %v873, %v1205
      %v1207 = vpop.f32.mrf.mxu0
      %v1208 = vadd.f32 %v873, %v1207
      %1209 = vmatprep.mubr.f32.mxu0 0.0
      %1210 = vmatmul.mubr.f32.gmra.mxu0 %v1022
      %v1211 = vpop.f32.mrf.mxu0
      %v1212 = vadd.f32 %v878, %v1211
      %v1213 = vpop.f32.mrf.mxu0
      %v1214 = vadd.f32 %v878, %v1213
      %1215 = vmatprep.mubr.f32.mxu0 0.0
      %1216 = vmatmul.mubr.f32.gmra.mxu0 %v1025
      %v1217 = vpop.f32.mrf.mxu0
      %v1218 = vadd.f32 %v883, %v1217
      %v1219 = vpop.f32.mrf.mxu0
      %v1220 = vadd.f32 %v883, %v1219
      %1221 = vmatprep.mubr.f32.mxu0 0.0
      %1222 = vmatmul.mubr.f32.gmra.mxu0 %v1028
      %v1223 = vpop.f32.mrf.mxu0
      %v1224 = vadd.f32 %v888, %v1223
      %v1225 = vpop.f32.mrf.mxu0
      %v1226 = vadd.f32 %v888, %v1225
      %1227 = vmatprep.mubr.f32.mxu0 0.0
      %1228 = vmatmul.mubr.f32.gmra.mxu0 %v1031
      %v1229 = vpop.f32.mrf.mxu0
      %v1230 = vadd.f32 %v893, %v1229
      %v1231 = vpop.f32.mrf.mxu0
      %v1232 = vadd.f32 %v893, %v1231
      %1233 = vmatprep.mubr.f32.mxu0 0.0
      %1234 = vmatmul.mubr.f32.gmra.mxu0 %v1034
      %v1235 = vpop.f32.mrf.mxu0
      %v1236 = vadd.f32 %v898, %v1235
      %v1237 = vpop.f32.mrf.mxu0
      %v1238 = vadd.f32 %v898, %v1237
      %1239 = vmatprep.mubr.f32.mxu0 0.0
      %1240 = vmatmul.mubr.f32.gmra.mxu0 %v1037
      %v1241 = vpop.f32.mrf.mxu0
      %v1242 = vadd.f32 %v903, %v1241
      %v1243 = vpop.f32.mrf.mxu0
      %v1244 = vadd.f32 %v903, %v1243
      %1245 = vmatprep.mubr.f32.mxu0 0.0
      %1246 = vmatmul.mubr.f32.gmra.mxu0 %v1040
      %v1247 = vpop.f32.mrf.mxu0
      %v1248 = vadd.f32 %v908, %v1247
      %v1249 = vpop.f32.mrf.mxu0
      %v1250 = vadd.f32 %v908, %v1249
      %1251 = vmatprep.mubr.f32.mxu0 0.0
      %1252 = vmatmul.mubr.f32.gmra.mxu0 %v1043
      %v1253 = vpop.f32.mrf.mxu0
      %v1254 = vadd.f32 %v913, %v1253
      %v1255 = vpop.f32.mrf.mxu0
      %v1256 = vadd.f32 %v913, %v1255
      %1257 = vmatprep.mubr.f32.mxu0 0.0
      %1258 = vmatmul.mubr.f32.gmra.mxu0 %v1046
      %v1259 = vpop.f32.mrf.mxu0
      %v1260 = vadd.f32 %v918, %v1259
      %v1261 = vpop.f32.mrf.mxu0
      %v1262 = vadd.f32 %v918, %v1261
      %1263 = vmatprep.mubr.f32.mxu0 0.0
      %1264 = vmatmul.mubr.f32.gmra.mxu0 %v1049
      %v1265 = vpop.f32.mrf.mxu0
      %v1266 = vadd.f32 %v923, %v1265
      %v1267 = vpop.f32.mrf.mxu0
      %v1268 = vadd.f32 %v923, %v1267
      %1269 = vmatprep.mubr.f32.mxu0 0.0
      %1270 = vmatmul.mubr.f32.gmra.mxu0 %v1052
      %v1271 = vpop.f32.mrf.mxu0
      %v1272 = vadd.f32 %v928, %v1271
      %v1273 = vpop.f32.mrf.mxu0
      %v1274 = vadd.f32 %v928, %v1273
      %1275 = vmatprep.mubr.f32.mxu0 0.0
      %1276 = vmatmul.mubr.f32.gmra.mxu0 %v1055
      %v1277 = vpop.f32.mrf.mxu0
      %v1278 = vadd.f32 %v933, %v1277
      %v1279 = vpop.f32.mrf.mxu0
      %v1280 = vadd.f32 %v933, %v1279
      %1281 = vmatprep.mubr.f32.mxu0 0.0
      %1282 = vmatmul.mubr.f32.gmra.mxu0 %v1058
      %v1283 = vpop.f32.mrf.mxu0
      %v1284 = vadd.f32 %v938, %v1283
      %v1285 = vpop.f32.mrf.mxu0
      %v1286 = vadd.f32 %v938, %v1285
      %1287 = vmatprep.mubr.f32.mxu0 0.0
      %1288 = vmatmul.mubr.f32.gmra.mxu0 %v1061
      %v1289 = vpop.f32.mrf.mxu0
      %v1290 = vadd.f32 %v943, %v1289
      %v1291 = vpop.f32.mrf.mxu0
      %v1292 = vadd.f32 %v943, %v1291
      %1293 = vmatprep.mubr.f32.mxu0 0.0
      %1294 = vmatmul.mubr.f32.gmra.mxu0 %v1064
      %v1295 = vpop.f32.mrf.mxu0
      %v1296 = vadd.f32 %v948, %v1295
      %v1297 = vpop.f32.mrf.mxu0
      %v1298 = vadd.f32 %v948, %v1297
      %1299 = vmatprep.mubr.f32.mxu0 0.0
      %1300 = vmatmul.mubr.f32.gmra.mxu0 %v1067
      %v1301 = vpop.f32.mrf.mxu0
      %v1302 = vadd.f32 %v953, %v1301
      %v1303 = vpop.f32.mrf.mxu0
      %v1304 = vadd.f32 %v953, %v1303
      %1305 = vmatprep.mubr.f32.mxu0 0.0
      %1306 = vmatmul.mubr.f32.gmra.mxu0 %v1070
      %v1307 = vpop.f32.mrf.mxu0
      %v1308 = vadd.f32 %v958, %v1307
      %v1309 = vpop.f32.mrf.mxu0
      %v1310 = vadd.f32 %v958, %v1309
      %1311 = vmatprep.mubr.f32.mxu0 0.0
      %1312 = vmatmul.mubr.f32.gmra.mxu0 %v1073
      %v1313 = vpop.f32.mrf.mxu0
      %v1314 = vadd.f32 %v963, %v1313
      %v1315 = vpop.f32.mrf.mxu0
      %v1316 = vadd.f32 %v963, %v1315
      %1317 = vmatprep.mubr.f32.mxu0 0.0
      %1318 = vmatmul.mubr.f32.gmra.mxu0 %v1076
      %v1319 = vpop.f32.mrf.mxu0
      %v1320 = vadd.f32 %v968, %v1319
      %v1321 = vpop.f32.mrf.mxu0
      %v1322 = vadd.f32 %v968, %v1321
      %1323 = vmatprep.mubr.f32.mxu0 0.0
      %1324 = vmatmul.mubr.f32.gmra.mxu0 %v1079
      %v1325 = vpop.f32.mrf.mxu0
      %v1326 = vadd.f32 %v973, %v1325
      %v1327 = vpop.f32.mrf.mxu0
      %v1328 = vadd.f32 %v973, %v1327
      %1329 = vmatprep.mubr.f32.mxu0 0.0
      %1330 = vmatmul.mubr.f32.gmra.mxu0 %v1082
      %v1331 = vpop.f32.mrf.mxu0
      %v1332 = vadd.f32 %v978, %v1331
      %v1333 = vpop.f32.mrf.mxu0
      %v1334 = vadd.f32 %v978, %v1333
      %1335 = vmatprep.mubr.f32.mxu0 0.0
      %1336 = vmatmul.mubr.f32.gmra.mxu0 %v1085
      %v1337 = vpop.f32.mrf.mxu0
      %v1338 = vadd.f32 %v983, %v1337
      %v1339 = vpop.f32.mrf.mxu0
      %v1340 = vadd.f32 %v983, %v1339
      %1341 = vmatprep.mubr.f32.mxu0 0.0
      %1342 = vmatmul.mubr.f32.gmra.mxu0 %v1088
      %v1343 = vpop.f32.mrf.mxu0
      %v1344 = vadd.f32 %v988, %v1343
      %v1345 = vpop.f32.mrf.mxu0
      %v1346 = vadd.f32 %v988, %v1345
      %1347 = vmatprep.mubr.f32.mxu0 0.0
      %1348 = vmatmul.mubr.f32.gmra.mxu0 %v1091
      %v1349 = vpop.f32.mrf.mxu0
      %v1350 = vadd.f32 %v993, %v1349
      %v1351 = vpop.f32.mrf.mxu0
      %v1352 = vadd.f32 %v993, %v1351
      %1353 = vdwg.mxu0
      %1354 = vst [vmem:[#allocation3] sm:$0xff] %v1164
      %1355 = vst [vmem:[#allocation3 + $0x8] sm:$0xff] %v1166
      %1356 = vst [vmem:[#allocation3 + $0x10] sm:$0xff] %v1170
      %1357 = vst [vmem:[#allocation3 + $0x18] sm:$0xff] %v1172
      %1358 = vst [vmem:[#allocation3 + $0x20] sm:$0xff] %v1176
      %1359 = vst [vmem:[#allocation3 + $0x28] sm:$0xff] %v1178
      %1360 = vst [vmem:[#allocation3 + $0x30] sm:$0xff] %v1182
      %1361 = vst [vmem:[#allocation3 + $0x38] sm:$0xff] %v1184
      %1362 = vst [vmem:[#allocation3 + $0x40] sm:$0xff] %v1188
      %1363 = vst [vmem:[#allocation3 + $0x48] sm:$0xff] %v1190
      %1364 = vst [vmem:[#allocation3 + $0x50] sm:$0xff] %v1194
      %1365 = vst [vmem:[#allocation3 + $0x58] sm:$0xff] %v1196
      %1366 = vst [vmem:[#allocation3 + $0x60] sm:$0xff] %v1200
      %1367 = vst [vmem:[#allocation3 + $0x68] sm:$0xff] %v1202
      %1368 = vst [vmem:[#allocation3 + $0x70] sm:$0xff] %v1206
      %1369 = vst [vmem:[#allocation3 + $0x78] sm:$0xff] %v1208
      %1370 = vst [vmem:[#allocation3 + $0x80] sm:$0xff] %v1212
      %1371 = vst [vmem:[#allocation3 + $0x88] sm:$0xff] %v1214
      %1372 = vst [vmem:[#allocation3 + $0x90] sm:$0xff] %v1218
      %1373 = vst [vmem:[#allocation3 + $0x98] sm:$0xff] %v1220
      %1374 = vst [vmem:[#allocation3 + $0xa0] sm:$0xff] %v1224
      %1375 = vst [vmem:[#allocation3 + $0xa8] sm:$0xff] %v1226
      %1376 = vst [vmem:[#allocation3 + $0xb0] sm:$0xff] %v1230
      %1377 = vst [vmem:[#allocation3 + $0xb8] sm:$0xff] %v1232
      %1378 = vst [vmem:[#allocation3 + $0xc0] sm:$0xff] %v1236
      %1379 = vst [vmem:[#allocation3 + $0xc8] sm:$0xff] %v1238
      %1380 = vst [vmem:[#allocation3 + $0xd0] sm:$0xff] %v1242
      %1381 = vst [vmem:[#allocation3 + $0xd8] sm:$0xff] %v1244
      %1382 = vst [vmem:[#allocation3 + $0xe0] sm:$0xff] %v1248
      %1383 = vst [vmem:[#allocation3 + $0xe8] sm:$0xff] %v1250
      %1384 = vst [vmem:[#allocation3 + $0xf0] sm:$0xff] %v1254
      %1385 = vst [vmem:[#allocation3 + $0xf8] sm:$0xff] %v1256
      %1386 = vst [vmem:[#allocation3 + $0x100] sm:$0xff] %v1260
      %1387 = vst [vmem:[#allocation3 + $0x108] sm:$0xff] %v1262
      %1388 = vst [vmem:[#allocation3 + $0x110] sm:$0xff] %v1266
      %1389 = vst [vmem:[#allocation3 + $0x118] sm:$0xff] %v1268
      %1390 = vst [vmem:[#allocation3 + $0x120] sm:$0xff] %v1272
      %1391 = vst [vmem:[#allocation3 + $0x128] sm:$0xff] %v1274
      %1392 = vst [vmem:[#allocation3 + $0x130] sm:$0xff] %v1278
      %1393 = vst [vmem:[#allocation3 + $0x138] sm:$0xff] %v1280
      %1394 = vst [vmem:[#allocation3 + $0x140] sm:$0xff] %v1284
      %1395 = vst [vmem:[#allocation3 + $0x148] sm:$0xff] %v1286
      %1396 = vst [vmem:[#allocation3 + $0x150] sm:$0xff] %v1290
      %1397 = vst [vmem:[#allocation3 + $0x158] sm:$0xff] %v1292
      %1398 = vst [vmem:[#allocation3 + $0x160] sm:$0xff] %v1296
      %1399 = vst [vmem:[#allocation3 + $0x168] sm:$0xff] %v1298
      %1400 = vst [vmem:[#allocation3 + $0x170] sm:$0xff] %v1302
      %1401 = vst [vmem:[#allocation3 + $0x178] sm:$0xff] %v1304
      %1402 = vst [vmem:[#allocation3 + $0x180] sm:$0xff] %v1308
      %1403 = vst [vmem:[#allocation3 + $0x188] sm:$0xff] %v1310
      %1404 = vst [vmem:[#allocation3 + $0x190] sm:$0xff] %v1314
      %1405 = vst [vmem:[#allocation3 + $0x198] sm:$0xff] %v1316
      %1406 = vst [vmem:[#allocation3 + $0x1a0] sm:$0xff] %v1320
      %1407 = vst [vmem:[#allocation3 + $0x1a8] sm:$0xff] %v1322
      %1408 = vst [vmem:[#allocation3 + $0x1b0] sm:$0xff] %v1326
      %1409 = vst [vmem:[#allocation3 + $0x1b8] sm:$0xff] %v1328
      %1410 = vst [vmem:[#allocation3 + $0x1c0] sm:$0xff] %v1332
      %1411 = vst [vmem:[#allocation3 + $0x1c8] sm:$0xff] %v1334
      %1412 = vst [vmem:[#allocation3 + $0x1d0] sm:$0xff] %v1338
      %1413 = vst [vmem:[#allocation3 + $0x1d8] sm:$0xff] %v1340
      %1414 = vst [vmem:[#allocation3 + $0x1e0] sm:$0xff] %v1344
      %1415 = vst [vmem:[#allocation3 + $0x1e8] sm:$0xff] %v1346
      %1416 = vst [vmem:[#allocation3 + $0x1f0] sm:$0xff] %v1350
      %1417 = vst [vmem:[#allocation3 + $0x1f8] sm:$0xff] %v1352
      %v1418 = vld [vmem:[%s6] sm:$0xff]
      %v1419 = vld [vmem:[%s6 + $0x8] sm:$0xff]
      %v1420 = vld [vmem:[%s6 + $0x10] sm:$0xff]
      %v1421 = vld [vmem:[%s6 + $0x18] sm:$0xff]
      %v1422 = vld [vmem:[%s6 + $0x20] sm:$0xff]
      %v1423 = vld [vmem:[%s6 + $0x28] sm:$0xff]
      %v1424 = vld [vmem:[%s6 + $0x30] sm:$0xff]
      %v1425 = vld [vmem:[%s6 + $0x38] sm:$0xff]
      %v1426 = vld [vmem:[%s6 + $0x40] sm:$0xff]
      %v1427 = vld [vmem:[%s6 + $0x48] sm:$0xff]
      %v1428 = vld [vmem:[%s6 + $0x50] sm:$0xff]
      %v1429 = vld [vmem:[%s6 + $0x58] sm:$0xff]
      %v1430 = vld [vmem:[%s6 + $0x60] sm:$0xff]
      %v1431 = vld [vmem:[%s6 + $0x68] sm:$0xff]
      %v1432 = vld [vmem:[%s6 + $0x70] sm:$0xff]
      %v1433 = vld [vmem:[%s6 + $0x78] sm:$0xff]
      %v1434 = vld [vmem:[%s6 + $0x80] sm:$0xff]
      %v1435 = vld [vmem:[%s6 + $0x88] sm:$0xff]
      %v1436 = vld [vmem:[%s6 + $0x90] sm:$0xff]
      %v1437 = vld [vmem:[%s6 + $0x98] sm:$0xff]
      %v1438 = vld [vmem:[%s6 + $0xa0] sm:$0xff]
      %v1439 = vld [vmem:[%s6 + $0xa8] sm:$0xff]
      %v1440 = vld [vmem:[%s6 + $0xb0] sm:$0xff]
      %v1441 = vld [vmem:[%s6 + $0xb8] sm:$0xff]
      %v1442 = vld [vmem:[%s6 + $0xc0] sm:$0xff]
      %v1443 = vld [vmem:[%s6 + $0xc8] sm:$0xff]
      %v1444 = vld [vmem:[%s6 + $0xd0] sm:$0xff]
      %v1445 = vld [vmem:[%s6 + $0xd8] sm:$0xff]
      %v1446 = vld [vmem:[%s6 + $0xe0] sm:$0xff]
      %v1447 = vld [vmem:[%s6 + $0xe8] sm:$0xff]
      %v1448 = vld [vmem:[%s6 + $0xf0] sm:$0xff]
      %v1449 = vld [vmem:[%s6 + $0xf8] sm:$0xff]
      %v1450 = vld [vmem:[%s6 + $0x100] sm:$0xff]
      %v1451 = vld [vmem:[%s6 + $0x108] sm:$0xff]
      %v1452 = vld [vmem:[%s6 + $0x110] sm:$0xff]
      %v1453 = vld [vmem:[%s6 + $0x118] sm:$0xff]
      %v1454 = vld [vmem:[%s6 + $0x120] sm:$0xff]
      %v1455 = vld [vmem:[%s6 + $0x128] sm:$0xff]
      %v1456 = vld [vmem:[%s6 + $0x130] sm:$0xff]
      %v1457 = vld [vmem:[%s6 + $0x138] sm:$0xff]
      %v1458 = vld [vmem:[%s6 + $0x140] sm:$0xff]
      %v1459 = vld [vmem:[%s6 + $0x148] sm:$0xff]
      %v1460 = vld [vmem:[%s6 + $0x150] sm:$0xff]
      %v1461 = vld [vmem:[%s6 + $0x158] sm:$0xff]
      %v1462 = vld [vmem:[%s6 + $0x160] sm:$0xff]
      %v1463 = vld [vmem:[%s6 + $0x168] sm:$0xff]
      %v1464 = vld [vmem:[%s6 + $0x170] sm:$0xff]
      %v1465 = vld [vmem:[%s6 + $0x178] sm:$0xff]
      %v1466 = vld [vmem:[%s6 + $0x180] sm:$0xff]
      %v1467 = vld [vmem:[%s6 + $0x188] sm:$0xff]
      %v1468 = vld [vmem:[%s6 + $0x190] sm:$0xff]
      %v1469 = vld [vmem:[%s6 + $0x198] sm:$0xff]
      %v1470 = vld [vmem:[%s6 + $0x1a0] sm:$0xff]
      %v1471 = vld [vmem:[%s6 + $0x1a8] sm:$0xff]
      %v1472 = vld [vmem:[%s6 + $0x1b0] sm:$0xff]
      %v1473 = vld [vmem:[%s6 + $0x1b8] sm:$0xff]
      %v1474 = vld [vmem:[%s6 + $0x1c0] sm:$0xff]
      %v1475 = vld [vmem:[%s6 + $0x1c8] sm:$0xff]
      %v1476 = vld [vmem:[%s6 + $0x1d0] sm:$0xff]
      %v1477 = vld [vmem:[%s6 + $0x1d8] sm:$0xff]
      %v1478 = vld [vmem:[%s6 + $0x1e0] sm:$0xff]
      %v1479 = vld [vmem:[%s6 + $0x1e8] sm:$0xff]
      %v1480 = vld [vmem:[%s6 + $0x1f0] sm:$0xff]
      %v1481 = vld [vmem:[%s6 + $0x1f8] sm:$0xff]
      %v1482 = vld [vmem:[%s7] sm:$0xff]
      %v1483 = vld [vmem:[%s7 + $0x8] sm:$0xff]
      %v1484 = vld [vmem:[%s7 + $0x10] sm:$0xff]
      %v1485 = vld [vmem:[%s7 + $0x18] sm:$0xff]
      %v1486 = vld [vmem:[%s7 + $0x20] sm:$0xff]
      %v1487 = vld [vmem:[%s7 + $0x28] sm:$0xff]
      %v1488 = vld [vmem:[%s7 + $0x30] sm:$0xff]
      %v1489 = vld [vmem:[%s7 + $0x38] sm:$0xff]
      %v1490 = vld [vmem:[%s7 + $0x40] sm:$0xff]
      %v1491 = vld [vmem:[%s7 + $0x48] sm:$0xff]
      %v1492 = vld [vmem:[%s7 + $0x50] sm:$0xff]
      %v1493 = vld [vmem:[%s7 + $0x58] sm:$0xff]
      %v1494 = vld [vmem:[%s7 + $0x60] sm:$0xff]
      %v1495 = vld [vmem:[%s7 + $0x68] sm:$0xff]
      %v1496 = vld [vmem:[%s7 + $0x70] sm:$0xff]
      %v1497 = vld [vmem:[%s7 + $0x78] sm:$0xff]
      %v1498 = vld [vmem:[%s7 + $0x80] sm:$0xff]
      %v1499 = vld [vmem:[%s7 + $0x88] sm:$0xff]
      %v1500 = vld [vmem:[%s7 + $0x90] sm:$0xff]
      %v1501 = vld [vmem:[%s7 + $0x98] sm:$0xff]
      %v1502 = vld [vmem:[%s7 + $0xa0] sm:$0xff]
      %v1503 = vld [vmem:[%s7 + $0xa8] sm:$0xff]
      %v1504 = vld [vmem:[%s7 + $0xb0] sm:$0xff]
      %v1505 = vld [vmem:[%s7 + $0xb8] sm:$0xff]
      %v1506 = vld [vmem:[%s7 + $0xc0] sm:$0xff]
      %v1507 = vld [vmem:[%s7 + $0xc8] sm:$0xff]
      %v1508 = vld [vmem:[%s7 + $0xd0] sm:$0xff]
      %v1509 = vld [vmem:[%s7 + $0xd8] sm:$0xff]
      %v1510 = vld [vmem:[%s7 + $0xe0] sm:$0xff]
      %v1511 = vld [vmem:[%s7 + $0xe8] sm:$0xff]
      %v1512 = vld [vmem:[%s7 + $0xf0] sm:$0xff]
      %v1513 = vld [vmem:[%s7 + $0xf8] sm:$0xff]
      %v1514 = vld [vmem:[%s7 + $0x100] sm:$0xff]
      %v1515 = vld [vmem:[%s7 + $0x108] sm:$0xff]
      %v1516 = vld [vmem:[%s7 + $0x110] sm:$0xff]
      %v1517 = vld [vmem:[%s7 + $0x118] sm:$0xff]
      %v1518 = vld [vmem:[%s7 + $0x120] sm:$0xff]
      %v1519 = vld [vmem:[%s7 + $0x128] sm:$0xff]
      %v1520 = vld [vmem:[%s7 + $0x130] sm:$0xff]
      %v1521 = vld [vmem:[%s7 + $0x138] sm:$0xff]
      %v1522 = vld [vmem:[%s7 + $0x140] sm:$0xff]
      %v1523 = vld [vmem:[%s7 + $0x148] sm:$0xff]
      %v1524 = vld [vmem:[%s7 + $0x150] sm:$0xff]
      %v1525 = vld [vmem:[%s7 + $0x158] sm:$0xff]
      %v1526 = vld [vmem:[%s7 + $0x160] sm:$0xff]
      %v1527 = vld [vmem:[%s7 + $0x168] sm:$0xff]
      %v1528 = vld [vmem:[%s7 + $0x170] sm:$0xff]
      %v1529 = vld [vmem:[%s7 + $0x178] sm:$0xff]
      %v1530 = vld [vmem:[%s7 + $0x180] sm:$0xff]
      %v1531 = vld [vmem:[%s7 + $0x188] sm:$0xff]
      %v1532 = vld [vmem:[%s7 + $0x190] sm:$0xff]
      %v1533 = vld [vmem:[%s7 + $0x198] sm:$0xff]
      %v1534 = vld [vmem:[%s7 + $0x1a0] sm:$0xff]
      %v1535 = vld [vmem:[%s7 + $0x1a8] sm:$0xff]
      %v1536 = vld [vmem:[%s7 + $0x1b0] sm:$0xff]
      %v1537 = vld [vmem:[%s7 + $0x1b8] sm:$0xff]
      %v1538 = vld [vmem:[%s7 + $0x1c0] sm:$0xff]
      %v1539 = vld [vmem:[%s7 + $0x1c8] sm:$0xff]
      %v1540 = vld [vmem:[%s7 + $0x1d0] sm:$0xff]
      %v1541 = vld [vmem:[%s7 + $0x1d8] sm:$0xff]
      %v1542 = vld [vmem:[%s7 + $0x1e0] sm:$0xff]
      %v1543 = vld [vmem:[%s7 + $0x1e8] sm:$0xff]
      %v1544 = vld [vmem:[%s7 + $0x1f0] sm:$0xff]
      %v1545 = vld [vmem:[%s7 + $0x1f8] sm:$0xff]
      %1547 = vset.pattern.permute.xlu0 0
      %1548 = vperm.xlu0 %1547, %v1482
      %v1549 = vpop.permute.xlu0 %1548
      %1552 = vset.pattern.permute.xlu0 0
      %1553 = vperm.xlu0 %1552, %v1483
      %v1554 = vpop.permute.xlu0 %1553
      %1557 = vset.pattern.permute.xlu0 0
      %1558 = vperm.xlu0 %1557, %v1484
      %v1559 = vpop.permute.xlu0 %1558
      %1562 = vset.pattern.permute.xlu0 0
      %1563 = vperm.xlu0 %1562, %v1485
      %v1564 = vpop.permute.xlu0 %1563
      %1567 = vset.pattern.permute.xlu0 0
      %1568 = vperm.xlu0 %1567, %v1486
      %v1569 = vpop.permute.xlu0 %1568
      %1572 = vset.pattern.permute.xlu0 0
      %1573 = vperm.xlu0 %1572, %v1487
      %v1574 = vpop.permute.xlu0 %1573
      %1577 = vset.pattern.permute.xlu0 0
      %1578 = vperm.xlu0 %1577, %v1488
      %v1579 = vpop.permute.xlu0 %1578
      %1582 = vset.pattern.permute.xlu0 0
      %1583 = vperm.xlu0 %1582, %v1489
      %v1584 = vpop.permute.xlu0 %1583
      %1587 = vset.pattern.permute.xlu0 0
      %1588 = vperm.xlu0 %1587, %v1490
      %v1589 = vpop.permute.xlu0 %1588
      %1592 = vset.pattern.permute.xlu0 0
      %1593 = vperm.xlu0 %1592, %v1491
      %v1594 = vpop.permute.xlu0 %1593
      %1597 = vset.pattern.permute.xlu0 0
      %1598 = vperm.xlu0 %1597, %v1492
      %v1599 = vpop.permute.xlu0 %1598
      %1602 = vset.pattern.permute.xlu0 0
      %1603 = vperm.xlu0 %1602, %v1493
      %v1604 = vpop.permute.xlu0 %1603
      %1607 = vset.pattern.permute.xlu0 0
      %1608 = vperm.xlu0 %1607, %v1494
      %v1609 = vpop.permute.xlu0 %1608
      %1612 = vset.pattern.permute.xlu0 0
      %1613 = vperm.xlu0 %1612, %v1495
      %v1614 = vpop.permute.xlu0 %1613
      %1617 = vset.pattern.permute.xlu0 0
      %1618 = vperm.xlu0 %1617, %v1496
      %v1619 = vpop.permute.xlu0 %1618
      %1622 = vset.pattern.permute.xlu0 0
      %1623 = vperm.xlu0 %1622, %v1497
      %v1624 = vpop.permute.xlu0 %1623
      %1627 = vset.pattern.permute.xlu0 0
      %1628 = vperm.xlu0 %1627, %v1498
      %v1629 = vpop.permute.xlu0 %1628
      %1632 = vset.pattern.permute.xlu0 0
      %1633 = vperm.xlu0 %1632, %v1499
      %v1634 = vpop.permute.xlu0 %1633
      %1637 = vset.pattern.permute.xlu0 0
      %1638 = vperm.xlu0 %1637, %v1500
      %v1639 = vpop.permute.xlu0 %1638
      %1642 = vset.pattern.permute.xlu0 0
      %1643 = vperm.xlu0 %1642, %v1501
      %v1644 = vpop.permute.xlu0 %1643
      %1647 = vset.pattern.permute.xlu0 0
      %1648 = vperm.xlu0 %1647, %v1502
      %v1649 = vpop.permute.xlu0 %1648
      %1652 = vset.pattern.permute.xlu0 0
      %1653 = vperm.xlu0 %1652, %v1503
      %v1654 = vpop.permute.xlu0 %1653
      %1657 = vset.pattern.permute.xlu0 0
      %1658 = vperm.xlu0 %1657, %v1504
      %v1659 = vpop.permute.xlu0 %1658
      %1662 = vset.pattern.permute.xlu0 0
      %1663 = vperm.xlu0 %1662, %v1505
      %v1664 = vpop.permute.xlu0 %1663
      %1667 = vset.pattern.permute.xlu0 0
      %1668 = vperm.xlu0 %1667, %v1506
      %v1669 = vpop.permute.xlu0 %1668
      %1672 = vset.pattern.permute.xlu0 0
      %1673 = vperm.xlu0 %1672, %v1507
      %v1674 = vpop.permute.xlu0 %1673
      %1677 = vset.pattern.permute.xlu0 0
      %1678 = vperm.xlu0 %1677, %v1508
      %v1679 = vpop.permute.xlu0 %1678
      %1682 = vset.pattern.permute.xlu0 0
      %1683 = vperm.xlu0 %1682, %v1509
      %v1684 = vpop.permute.xlu0 %1683
      %1687 = vset.pattern.permute.xlu0 0
      %1688 = vperm.xlu0 %1687, %v1510
      %v1689 = vpop.permute.xlu0 %1688
      %1692 = vset.pattern.permute.xlu0 0
      %1693 = vperm.xlu0 %1692, %v1511
      %v1694 = vpop.permute.xlu0 %1693
      %1697 = vset.pattern.permute.xlu0 0
      %1698 = vperm.xlu0 %1697, %v1512
      %v1699 = vpop.permute.xlu0 %1698
      %1702 = vset.pattern.permute.xlu0 0
      %1703 = vperm.xlu0 %1702, %v1513
      %v1704 = vpop.permute.xlu0 %1703
      %1707 = vset.pattern.permute.xlu0 0
      %1708 = vperm.xlu0 %1707, %v1514
      %v1709 = vpop.permute.xlu0 %1708
      %1712 = vset.pattern.permute.xlu0 0
      %1713 = vperm.xlu0 %1712, %v1515
      %v1714 = vpop.permute.xlu0 %1713
      %1717 = vset.pattern.permute.xlu0 0
      %1718 = vperm.xlu0 %1717, %v1516
      %v1719 = vpop.permute.xlu0 %1718
      %1722 = vset.pattern.permute.xlu0 0
      %1723 = vperm.xlu0 %1722, %v1517
      %v1724 = vpop.permute.xlu0 %1723
      %1727 = vset.pattern.permute.xlu0 0
      %1728 = vperm.xlu0 %1727, %v1518
      %v1729 = vpop.permute.xlu0 %1728
      %1732 = vset.pattern.permute.xlu0 0
      %1733 = vperm.xlu0 %1732, %v1519
      %v1734 = vpop.permute.xlu0 %1733
      %1737 = vset.pattern.permute.xlu0 0
      %1738 = vperm.xlu0 %1737, %v1520
      %v1739 = vpop.permute.xlu0 %1738
      %1742 = vset.pattern.permute.xlu0 0
      %1743 = vperm.xlu0 %1742, %v1521
      %v1744 = vpop.permute.xlu0 %1743
      %1747 = vset.pattern.permute.xlu0 0
      %1748 = vperm.xlu0 %1747, %v1522
      %v1749 = vpop.permute.xlu0 %1748
      %1752 = vset.pattern.permute.xlu0 0
      %1753 = vperm.xlu0 %1752, %v1523
      %v1754 = vpop.permute.xlu0 %1753
      %1757 = vset.pattern.permute.xlu0 0
      %1758 = vperm.xlu0 %1757, %v1524
      %v1759 = vpop.permute.xlu0 %1758
      %1762 = vset.pattern.permute.xlu0 0
      %1763 = vperm.xlu0 %1762, %v1525
      %v1764 = vpop.permute.xlu0 %1763
      %1767 = vset.pattern.permute.xlu0 0
      %1768 = vperm.xlu0 %1767, %v1526
      %v1769 = vpop.permute.xlu0 %1768
      %1772 = vset.pattern.permute.xlu0 0
      %1773 = vperm.xlu0 %1772, %v1527
      %v1774 = vpop.permute.xlu0 %1773
      %1777 = vset.pattern.permute.xlu0 0
      %1778 = vperm.xlu0 %1777, %v1528
      %v1779 = vpop.permute.xlu0 %1778
      %1782 = vset.pattern.permute.xlu0 0
      %1783 = vperm.xlu0 %1782, %v1529
      %v1784 = vpop.permute.xlu0 %1783
      %1787 = vset.pattern.permute.xlu0 0
      %1788 = vperm.xlu0 %1787, %v1530
      %v1789 = vpop.permute.xlu0 %1788
      %1792 = vset.pattern.permute.xlu0 0
      %1793 = vperm.xlu0 %1792, %v1531
      %v1794 = vpop.permute.xlu0 %1793
      %1797 = vset.pattern.permute.xlu0 0
      %1798 = vperm.xlu0 %1797, %v1532
      %v1799 = vpop.permute.xlu0 %1798
      %1802 = vset.pattern.permute.xlu0 0
      %1803 = vperm.xlu0 %1802, %v1533
      %v1804 = vpop.permute.xlu0 %1803
      %1807 = vset.pattern.permute.xlu0 0
      %1808 = vperm.xlu0 %1807, %v1534
      %v1809 = vpop.permute.xlu0 %1808
      %1812 = vset.pattern.permute.xlu0 0
      %1813 = vperm.xlu0 %1812, %v1535
      %v1814 = vpop.permute.xlu0 %1813
      %1817 = vset.pattern.permute.xlu0 0
      %1818 = vperm.xlu0 %1817, %v1536
      %v1819 = vpop.permute.xlu0 %1818
      %1822 = vset.pattern.permute.xlu0 0
      %1823 = vperm.xlu0 %1822, %v1537
      %v1824 = vpop.permute.xlu0 %1823
      %1827 = vset.pattern.permute.xlu0 0
      %1828 = vperm.xlu0 %1827, %v1538
      %v1829 = vpop.permute.xlu0 %1828
      %1832 = vset.pattern.permute.xlu0 0
      %1833 = vperm.xlu0 %1832, %v1539
      %v1834 = vpop.permute.xlu0 %1833
      %1837 = vset.pattern.permute.xlu0 0
      %1838 = vperm.xlu0 %1837, %v1540
      %v1839 = vpop.permute.xlu0 %1838
      %1842 = vset.pattern.permute.xlu0 0
      %1843 = vperm.xlu0 %1842, %v1541
      %v1844 = vpop.permute.xlu0 %1843
      %1847 = vset.pattern.permute.xlu0 0
      %1848 = vperm.xlu0 %1847, %v1542
      %v1849 = vpop.permute.xlu0 %1848
      %1852 = vset.pattern.permute.xlu0 0
      %1853 = vperm.xlu0 %1852, %v1543
      %v1854 = vpop.permute.xlu0 %1853
      %1857 = vset.pattern.permute.xlu0 0
      %1858 = vperm.xlu0 %1857, %v1544
      %v1859 = vpop.permute.xlu0 %1858
      %1862 = vset.pattern.permute.xlu0 0
      %1863 = vperm.xlu0 %1862, %v1545
      %v1864 = vpop.permute.xlu0 %1863
      %v1867 = vsel %vm556, %v1418, 0
      %v1870 = vsel %vm556, %v1419, 0
      %v1873 = vsel %vm556, %v1420, 0
      %v1876 = vsel %vm556, %v1421, 0
      %v1879 = vsel %vm556, %v1422, 0
      %v1882 = vsel %vm556, %v1423, 0
      %v1885 = vsel %vm556, %v1424, 0
      %v1888 = vsel %vm556, %v1425, 0
      %v1891 = vsel %vm556, %v1426, 0
      %v1894 = vsel %vm556, %v1427, 0
      %v1897 = vsel %vm556, %v1428, 0
      %v1900 = vsel %vm556, %v1429, 0
      %v1903 = vsel %vm556, %v1430, 0
      %v1906 = vsel %vm556, %v1431, 0
      %v1909 = vsel %vm556, %v1432, 0
      %v1912 = vsel %vm556, %v1433, 0
      %v1915 = vsel %vm556, %v1434, 0
      %v1918 = vsel %vm556, %v1435, 0
      %v1921 = vsel %vm556, %v1436, 0
      %v1924 = vsel %vm556, %v1437, 0
      %v1927 = vsel %vm556, %v1438, 0
      %v1930 = vsel %vm556, %v1439, 0
      %v1933 = vsel %vm556, %v1440, 0
      %v1936 = vsel %vm556, %v1441, 0
      %v1939 = vsel %vm556, %v1442, 0
      %v1942 = vsel %vm556, %v1443, 0
      %v1945 = vsel %vm556, %v1444, 0
      %v1948 = vsel %vm556, %v1445, 0
      %v1951 = vsel %vm556, %v1446, 0
      %v1954 = vsel %vm556, %v1447, 0
      %v1957 = vsel %vm556, %v1448, 0
      %v1960 = vsel %vm556, %v1449, 0
      %v1963 = vsel %vm556, %v1450, 0
      %v1966 = vsel %vm556, %v1451, 0
      %v1969 = vsel %vm556, %v1452, 0
      %v1972 = vsel %vm556, %v1453, 0
      %v1975 = vsel %vm556, %v1454, 0
      %v1978 = vsel %vm556, %v1455, 0
      %v1981 = vsel %vm556, %v1456, 0
      %v1984 = vsel %vm556, %v1457, 0
      %v1987 = vsel %vm556, %v1458, 0
      %v1990 = vsel %vm556, %v1459, 0
      %v1993 = vsel %vm556, %v1460, 0
      %v1996 = vsel %vm556, %v1461, 0
      %v1999 = vsel %vm556, %v1462, 0
      %v2002 = vsel %vm556, %v1463, 0
      %v2005 = vsel %vm556, %v1464, 0
      %v2008 = vsel %vm556, %v1465, 0
      %v2011 = vsel %vm556, %v1466, 0
      %v2014 = vsel %vm556, %v1467, 0
      %v2017 = vsel %vm556, %v1468, 0
      %v2020 = vsel %vm556, %v1469, 0
      %v2023 = vsel %vm556, %v1470, 0
      %v2026 = vsel %vm556, %v1471, 0
      %v2029 = vsel %vm556, %v1472, 0
      %v2032 = vsel %vm556, %v1473, 0
      %v2035 = vsel %vm556, %v1474, 0
      %v2038 = vsel %vm556, %v1475, 0
      %v2041 = vsel %vm556, %v1476, 0
      %v2044 = vsel %vm556, %v1477, 0
      %v2047 = vsel %vm556, %v1478, 0
      %v2050 = vsel %vm556, %v1479, 0
      %v2053 = vsel %vm556, %v1480, 0
      %v2056 = vsel %vm556, %v1481, 0
      %2058 = vmatprep.subr.mxu0 0.0
      %2059 = vmatpush1.msra.mxu0 0.0
      %2060 = vmatprep.subr.mxu0 0.0
      %2061 = vmatpush1.msra.mxu0 0.0
      %2062 = vmatprep.subr.mxu0 0.0
      %2063 = vmatpush1.msra.mxu0 0.0
      %2064 = vmatprep.subr.mxu0 0.0
      %2065 = vmatpush1.msra.mxu0 0.0
      %2066 = vmatprep.subr.mxu0 0.0
      %2067 = vmatpush1.msra.mxu0 0.0
      %2068 = vmatprep.subr.mxu0 0.0
      %2069 = vmatpush1.msra.mxu0 0.0
      %2070 = vmatprep.subr.mxu0 0.0
      %2071 = vmatpush1.msra.mxu0 0.0
      %2072 = vmatprep.subr.mxu0 0.0
      %2073 = vmatpush1.msra.mxu0 0.0
      %2074 = vmatprep.subr.mxu0 0.0
      %2075 = vmatpush1.msra.mxu0 0.0
      %2076 = vmatprep.subr.mxu0 0.0
      %2077 = vmatpush1.msra.mxu0 0.0
      %2078 = vmatprep.subr.mxu0 0.0
      %2079 = vmatpush1.msra.mxu0 0.0
      %2080 = vmatprep.subr.mxu0 0.0
      %2081 = vmatpush1.msra.mxu0 0.0
      %2082 = vmatprep.subr.mxu0 0.0
      %2083 = vmatpush1.msra.mxu0 0.0
      %2084 = vmatprep.subr.mxu0 0.0
      %2085 = vmatpush1.msra.mxu0 0.0
      %2086 = vmatprep.subr.mxu0 0.0
      %2087 = vmatpush1.msra.mxu0 0.0
      %2088 = vmatprep.subr.mxu0 %v1095
      %2089 = vmatpush1.msra.mxu0 %v1093
      %2090 = vmatprep.subr.mxu0 0.0
      %2091 = vmatpush2.msra.mxu0 0.0
      %2092 = vmatprep.subr.mxu0 0.0
      %2093 = vmatpush2.msra.mxu0 0.0
      %2094 = vmatprep.subr.mxu0 0.0
      %2095 = vmatpush2.msra.mxu0 0.0
      %2096 = vmatprep.subr.mxu0 0.0
      %2097 = vmatpush2.msra.mxu0 0.0
      %2098 = vmatprep.subr.mxu0 0.0
      %2099 = vmatpush2.msra.mxu0 0.0
      %2100 = vmatprep.subr.mxu0 0.0
      %2101 = vmatpush2.msra.mxu0 0.0
      %2102 = vmatprep.subr.mxu0 0.0
      %2103 = vmatpush2.msra.mxu0 0.0
      %2104 = vmatprep.subr.mxu0 0.0
      %2105 = vmatpush2.msra.mxu0 0.0
      %2106 = vmatprep.subr.mxu0 0.0
      %2107 = vmatpush2.msra.mxu0 0.0
      %2108 = vmatprep.subr.mxu0 0.0
      %2109 = vmatpush2.msra.mxu0 0.0
      %2110 = vmatprep.subr.mxu0 0.0
      %2111 = vmatpush2.msra.mxu0 0.0
      %2112 = vmatprep.subr.mxu0 0.0
      %2113 = vmatpush2.msra.mxu0 0.0
      %2114 = vmatprep.subr.mxu0 0.0
      %2115 = vmatpush2.msra.mxu0 0.0
      %2116 = vmatprep.subr.mxu0 0.0
      %2117 = vmatpush2.msra.mxu0 0.0
      %2118 = vmatprep.subr.mxu0 0.0
      %2119 = vmatpush2.msra.mxu0 0.0
      %2120 = vmatprep.subr.mxu0 0.0
      %2121 = vmatpush2.msra.mxu0 0.0
      %2122 = vmatprep.mubr.f32.mxu0 0.0
      %2123 = vmatmul.mubr.f32.gmra.mxu0 %v1867
      %v2124 = vpop.f32.mrf.mxu0
      %v2125 = vadd.f32 %v1549, %v2124
      %v2126 = vpop.f32.mrf.mxu0
      %v2127 = vadd.f32 %v1549, %v2126
      %2128 = vmatprep.mubr.f32.mxu0 0.0
      %2129 = vmatmul.mubr.f32.gmra.mxu0 %v1870
      %v2130 = vpop.f32.mrf.mxu0
      %v2131 = vadd.f32 %v1554, %v2130
      %v2132 = vpop.f32.mrf.mxu0
      %v2133 = vadd.f32 %v1554, %v2132
      %2134 = vmatprep.mubr.f32.mxu0 0.0
      %2135 = vmatmul.mubr.f32.gmra.mxu0 %v1873
      %v2136 = vpop.f32.mrf.mxu0
      %v2137 = vadd.f32 %v1559, %v2136
      %v2138 = vpop.f32.mrf.mxu0
      %v2139 = vadd.f32 %v1559, %v2138
      %2140 = vmatprep.mubr.f32.mxu0 0.0
      %2141 = vmatmul.mubr.f32.gmra.mxu0 %v1876
      %v2142 = vpop.f32.mrf.mxu0
      %v2143 = vadd.f32 %v1564, %v2142
      %v2144 = vpop.f32.mrf.mxu0
      %v2145 = vadd.f32 %v1564, %v2144
      %2146 = vmatprep.mubr.f32.mxu0 0.0
      %2147 = vmatmul.mubr.f32.gmra.mxu0 %v1879
      %v2148 = vpop.f32.mrf.mxu0
      %v2149 = vadd.f32 %v1569, %v2148
      %v2150 = vpop.f32.mrf.mxu0
      %v2151 = vadd.f32 %v1569, %v2150
      %2152 = vmatprep.mubr.f32.mxu0 0.0
      %2153 = vmatmul.mubr.f32.gmra.mxu0 %v1882
      %v2154 = vpop.f32.mrf.mxu0
      %v2155 = vadd.f32 %v1574, %v2154
      %v2156 = vpop.f32.mrf.mxu0
      %v2157 = vadd.f32 %v1574, %v2156
      %2158 = vmatprep.mubr.f32.mxu0 0.0
      %2159 = vmatmul.mubr.f32.gmra.mxu0 %v1885
      %v2160 = vpop.f32.mrf.mxu0
      %v2161 = vadd.f32 %v1579, %v2160
      %v2162 = vpop.f32.mrf.mxu0
      %v2163 = vadd.f32 %v1579, %v2162
      %2164 = vmatprep.mubr.f32.mxu0 0.0
      %2165 = vmatmul.mubr.f32.gmra.mxu0 %v1888
      %v2166 = vpop.f32.mrf.mxu0
      %v2167 = vadd.f32 %v1584, %v2166
      %v2168 = vpop.f32.mrf.mxu0
      %v2169 = vadd.f32 %v1584, %v2168
      %2170 = vmatprep.mubr.f32.mxu0 0.0
      %2171 = vmatmul.mubr.f32.gmra.mxu0 %v1891
      %v2172 = vpop.f32.mrf.mxu0
      %v2173 = vadd.f32 %v1589, %v2172
      %v2174 = vpop.f32.mrf.mxu0
      %v2175 = vadd.f32 %v1589, %v2174
      %2176 = vmatprep.mubr.f32.mxu0 0.0
      %2177 = vmatmul.mubr.f32.gmra.mxu0 %v1894
      %v2178 = vpop.f32.mrf.mxu0
      %v2179 = vadd.f32 %v1594, %v2178
      %v2180 = vpop.f32.mrf.mxu0
      %v2181 = vadd.f32 %v1594, %v2180
      %2182 = vmatprep.mubr.f32.mxu0 0.0
      %2183 = vmatmul.mubr.f32.gmra.mxu0 %v1897
      %v2184 = vpop.f32.mrf.mxu0
      %v2185 = vadd.f32 %v1599, %v2184
      %v2186 = vpop.f32.mrf.mxu0
      %v2187 = vadd.f32 %v1599, %v2186
      %2188 = vmatprep.mubr.f32.mxu0 0.0
      %2189 = vmatmul.mubr.f32.gmra.mxu0 %v1900
      %v2190 = vpop.f32.mrf.mxu0
      %v2191 = vadd.f32 %v1604, %v2190
      %v2192 = vpop.f32.mrf.mxu0
      %v2193 = vadd.f32 %v1604, %v2192
      %2194 = vmatprep.mubr.f32.mxu0 0.0
      %2195 = vmatmul.mubr.f32.gmra.mxu0 %v1903
      %v2196 = vpop.f32.mrf.mxu0
      %v2197 = vadd.f32 %v1609, %v2196
      %v2198 = vpop.f32.mrf.mxu0
      %v2199 = vadd.f32 %v1609, %v2198
      %2200 = vmatprep.mubr.f32.mxu0 0.0
      %2201 = vmatmul.mubr.f32.gmra.mxu0 %v1906
      %v2202 = vpop.f32.mrf.mxu0
      %v2203 = vadd.f32 %v1614, %v2202
      %v2204 = vpop.f32.mrf.mxu0
      %v2205 = vadd.f32 %v1614, %v2204
      %2206 = vmatprep.mubr.f32.mxu0 0.0
      %2207 = vmatmul.mubr.f32.gmra.mxu0 %v1909
      %v2208 = vpop.f32.mrf.mxu0
      %v2209 = vadd.f32 %v1619, %v2208
      %v2210 = vpop.f32.mrf.mxu0
      %v2211 = vadd.f32 %v1619, %v2210
      %2212 = vmatprep.mubr.f32.mxu0 0.0
      %2213 = vmatmul.mubr.f32.gmra.mxu0 %v1912
      %v2214 = vpop.f32.mrf.mxu0
      %v2215 = vadd.f32 %v1624, %v2214
      %v2216 = vpop.f32.mrf.mxu0
      %v2217 = vadd.f32 %v1624, %v2216
      %2218 = vmatprep.mubr.f32.mxu0 0.0
      %2219 = vmatmul.mubr.f32.gmra.mxu0 %v1915
      %v2220 = vpop.f32.mrf.mxu0
      %v2221 = vadd.f32 %v1629, %v2220
      %v2222 = vpop.f32.mrf.mxu0
      %v2223 = vadd.f32 %v1629, %v2222
      %2224 = vmatprep.mubr.f32.mxu0 0.0
      %2225 = vmatmul.mubr.f32.gmra.mxu0 %v1918
      %v2226 = vpop.f32.mrf.mxu0
      %v2227 = vadd.f32 %v1634, %v2226
      %v2228 = vpop.f32.mrf.mxu0
      %v2229 = vadd.f32 %v1634, %v2228
      %2230 = vmatprep.mubr.f32.mxu0 0.0
      %2231 = vmatmul.mubr.f32.gmra.mxu0 %v1921
      %v2232 = vpop.f32.mrf.mxu0
      %v2233 = vadd.f32 %v1639, %v2232
      %v2234 = vpop.f32.mrf.mxu0
      %v2235 = vadd.f32 %v1639, %v2234
      %2236 = vmatprep.mubr.f32.mxu0 0.0
      %2237 = vmatmul.mubr.f32.gmra.mxu0 %v1924
      %v2238 = vpop.f32.mrf.mxu0
      %v2239 = vadd.f32 %v1644, %v2238
      %v2240 = vpop.f32.mrf.mxu0
      %v2241 = vadd.f32 %v1644, %v2240
      %2242 = vmatprep.mubr.f32.mxu0 0.0
      %2243 = vmatmul.mubr.f32.gmra.mxu0 %v1927
      %v2244 = vpop.f32.mrf.mxu0
      %v2245 = vadd.f32 %v1649, %v2244
      %v2246 = vpop.f32.mrf.mxu0
      %v2247 = vadd.f32 %v1649, %v2246
      %2248 = vmatprep.mubr.f32.mxu0 0.0
      %2249 = vmatmul.mubr.f32.gmra.mxu0 %v1930
      %v2250 = vpop.f32.mrf.mxu0
      %v2251 = vadd.f32 %v1654, %v2250
      %v2252 = vpop.f32.mrf.mxu0
      %v2253 = vadd.f32 %v1654, %v2252
      %2254 = vmatprep.mubr.f32.mxu0 0.0
      %2255 = vmatmul.mubr.f32.gmra.mxu0 %v1933
      %v2256 = vpop.f32.mrf.mxu0
      %v2257 = vadd.f32 %v1659, %v2256
      %v2258 = vpop.f32.mrf.mxu0
      %v2259 = vadd.f32 %v1659, %v2258
      %2260 = vmatprep.mubr.f32.mxu0 0.0
      %2261 = vmatmul.mubr.f32.gmra.mxu0 %v1936
      %v2262 = vpop.f32.mrf.mxu0
      %v2263 = vadd.f32 %v1664, %v2262
      %v2264 = vpop.f32.mrf.mxu0
      %v2265 = vadd.f32 %v1664, %v2264
      %2266 = vmatprep.mubr.f32.mxu0 0.0
      %2267 = vmatmul.mubr.f32.gmra.mxu0 %v1939
      %v2268 = vpop.f32.mrf.mxu0
      %v2269 = vadd.f32 %v1669, %v2268
      %v2270 = vpop.f32.mrf.mxu0
      %v2271 = vadd.f32 %v1669, %v2270
      %2272 = vmatprep.mubr.f32.mxu0 0.0
      %2273 = vmatmul.mubr.f32.gmra.mxu0 %v1942
      %v2274 = vpop.f32.mrf.mxu0
      %v2275 = vadd.f32 %v1674, %v2274
      %v2276 = vpop.f32.mrf.mxu0
      %v2277 = vadd.f32 %v1674, %v2276
      %2278 = vmatprep.mubr.f32.mxu0 0.0
      %2279 = vmatmul.mubr.f32.gmra.mxu0 %v1945
      %v2280 = vpop.f32.mrf.mxu0
      %v2281 = vadd.f32 %v1679, %v2280
      %v2282 = vpop.f32.mrf.mxu0
      %v2283 = vadd.f32 %v1679, %v2282
      %2284 = vmatprep.mubr.f32.mxu0 0.0
      %2285 = vmatmul.mubr.f32.gmra.mxu0 %v1948
      %v2286 = vpop.f32.mrf.mxu0
      %v2287 = vadd.f32 %v1684, %v2286
      %v2288 = vpop.f32.mrf.mxu0
      %v2289 = vadd.f32 %v1684, %v2288
      %2290 = vmatprep.mubr.f32.mxu0 0.0
      %2291 = vmatmul.mubr.f32.gmra.mxu0 %v1951
      %v2292 = vpop.f32.mrf.mxu0
      %v2293 = vadd.f32 %v1689, %v2292
      %v2294 = vpop.f32.mrf.mxu0
      %v2295 = vadd.f32 %v1689, %v2294
      %2296 = vmatprep.mubr.f32.mxu0 0.0
      %2297 = vmatmul.mubr.f32.gmra.mxu0 %v1954
      %v2298 = vpop.f32.mrf.mxu0
      %v2299 = vadd.f32 %v1694, %v2298
      %v2300 = vpop.f32.mrf.mxu0
      %v2301 = vadd.f32 %v1694, %v2300
      %2302 = vmatprep.mubr.f32.mxu0 0.0
      %2303 = vmatmul.mubr.f32.gmra.mxu0 %v1957
      %v2304 = vpop.f32.mrf.mxu0
      %v2305 = vadd.f32 %v1699, %v2304
      %v2306 = vpop.f32.mrf.mxu0
      %v2307 = vadd.f32 %v1699, %v2306
      %2308 = vmatprep.mubr.f32.mxu0 0.0
      %2309 = vmatmul.mubr.f32.gmra.mxu0 %v1960
      %v2310 = vpop.f32.mrf.mxu0
      %v2311 = vadd.f32 %v1704, %v2310
      %v2312 = vpop.f32.mrf.mxu0
      %v2313 = vadd.f32 %v1704, %v2312
      %2314 = vmatprep.mubr.f32.mxu0 0.0
      %2315 = vmatmul.mubr.f32.gmra.mxu0 %v1963
      %v2316 = vpop.f32.mrf.mxu0
      %v2317 = vadd.f32 %v1709, %v2316
      %v2318 = vpop.f32.mrf.mxu0
      %v2319 = vadd.f32 %v1709, %v2318
      %2320 = vmatprep.mubr.f32.mxu0 0.0
      %2321 = vmatmul.mubr.f32.gmra.mxu0 %v1966
      %v2322 = vpop.f32.mrf.mxu0
      %v2323 = vadd.f32 %v1714, %v2322
      %v2324 = vpop.f32.mrf.mxu0
      %v2325 = vadd.f32 %v1714, %v2324
      %2326 = vmatprep.mubr.f32.mxu0 0.0
      %2327 = vmatmul.mubr.f32.gmra.mxu0 %v1969
      %v2328 = vpop.f32.mrf.mxu0
      %v2329 = vadd.f32 %v1719, %v2328
      %v2330 = vpop.f32.mrf.mxu0
      %v2331 = vadd.f32 %v1719, %v2330
      %2332 = vmatprep.mubr.f32.mxu0 0.0
      %2333 = vmatmul.mubr.f32.gmra.mxu0 %v1972
      %v2334 = vpop.f32.mrf.mxu0
      %v2335 = vadd.f32 %v1724, %v2334
      %v2336 = vpop.f32.mrf.mxu0
      %v2337 = vadd.f32 %v1724, %v2336
      %2338 = vmatprep.mubr.f32.mxu0 0.0
      %2339 = vmatmul.mubr.f32.gmra.mxu0 %v1975
      %v2340 = vpop.f32.mrf.mxu0
      %v2341 = vadd.f32 %v1729, %v2340
      %v2342 = vpop.f32.mrf.mxu0
      %v2343 = vadd.f32 %v1729, %v2342
      %2344 = vmatprep.mubr.f32.mxu0 0.0
      %2345 = vmatmul.mubr.f32.gmra.mxu0 %v1978
      %v2346 = vpop.f32.mrf.mxu0
      %v2347 = vadd.f32 %v1734, %v2346
      %v2348 = vpop.f32.mrf.mxu0
      %v2349 = vadd.f32 %v1734, %v2348
      %2350 = vmatprep.mubr.f32.mxu0 0.0
      %2351 = vmatmul.mubr.f32.gmra.mxu0 %v1981
      %v2352 = vpop.f32.mrf.mxu0
      %v2353 = vadd.f32 %v1739, %v2352
      %v2354 = vpop.f32.mrf.mxu0
      %v2355 = vadd.f32 %v1739, %v2354
      %2356 = vmatprep.mubr.f32.mxu0 0.0
      %2357 = vmatmul.mubr.f32.gmra.mxu0 %v1984
      %v2358 = vpop.f32.mrf.mxu0
      %v2359 = vadd.f32 %v1744, %v2358
      %v2360 = vpop.f32.mrf.mxu0
      %v2361 = vadd.f32 %v1744, %v2360
      %2362 = vmatprep.mubr.f32.mxu0 0.0
      %2363 = vmatmul.mubr.f32.gmra.mxu0 %v1987
      %v2364 = vpop.f32.mrf.mxu0
      %v2365 = vadd.f32 %v1749, %v2364
      %v2366 = vpop.f32.mrf.mxu0
      %v2367 = vadd.f32 %v1749, %v2366
      %2368 = vmatprep.mubr.f32.mxu0 0.0
      %2369 = vmatmul.mubr.f32.gmra.mxu0 %v1990
      %v2370 = vpop.f32.mrf.mxu0
      %v2371 = vadd.f32 %v1754, %v2370
      %v2372 = vpop.f32.mrf.mxu0
      %v2373 = vadd.f32 %v1754, %v2372
      %2374 = vmatprep.mubr.f32.mxu0 0.0
      %2375 = vmatmul.mubr.f32.gmra.mxu0 %v1993
      %v2376 = vpop.f32.mrf.mxu0
      %v2377 = vadd.f32 %v1759, %v2376
      %v2378 = vpop.f32.mrf.mxu0
      %v2379 = vadd.f32 %v1759, %v2378
      %2380 = vmatprep.mubr.f32.mxu0 0.0
      %2381 = vmatmul.mubr.f32.gmra.mxu0 %v1996
      %v2382 = vpop.f32.mrf.mxu0
      %v2383 = vadd.f32 %v1764, %v2382
      %v2384 = vpop.f32.mrf.mxu0
      %v2385 = vadd.f32 %v1764, %v2384
      %2386 = vmatprep.mubr.f32.mxu0 0.0
      %2387 = vmatmul.mubr.f32.gmra.mxu0 %v1999
      %v2388 = vpop.f32.mrf.mxu0
      %v2389 = vadd.f32 %v1769, %v2388
      %v2390 = vpop.f32.mrf.mxu0
      %v2391 = vadd.f32 %v1769, %v2390
      %2392 = vmatprep.mubr.f32.mxu0 0.0
      %2393 = vmatmul.mubr.f32.gmra.mxu0 %v2002
      %v2394 = vpop.f32.mrf.mxu0
      %v2395 = vadd.f32 %v1774, %v2394
      %v2396 = vpop.f32.mrf.mxu0
      %v2397 = vadd.f32 %v1774, %v2396
      %2398 = vmatprep.mubr.f32.mxu0 0.0
      %2399 = vmatmul.mubr.f32.gmra.mxu0 %v2005
      %v2400 = vpop.f32.mrf.mxu0
      %v2401 = vadd.f32 %v1779, %v2400
      %v2402 = vpop.f32.mrf.mxu0
      %v2403 = vadd.f32 %v1779, %v2402
      %2404 = vmatprep.mubr.f32.mxu0 0.0
      %2405 = vmatmul.mubr.f32.gmra.mxu0 %v2008
      %v2406 = vpop.f32.mrf.mxu0
      %v2407 = vadd.f32 %v1784, %v2406
      %v2408 = vpop.f32.mrf.mxu0
      %v2409 = vadd.f32 %v1784, %v2408
      %2410 = vmatprep.mubr.f32.mxu0 0.0
      %2411 = vmatmul.mubr.f32.gmra.mxu0 %v2011
      %v2412 = vpop.f32.mrf.mxu0
      %v2413 = vadd.f32 %v1789, %v2412
      %v2414 = vpop.f32.mrf.mxu0
      %v2415 = vadd.f32 %v1789, %v2414
      %2416 = vmatprep.mubr.f32.mxu0 0.0
      %2417 = vmatmul.mubr.f32.gmra.mxu0 %v2014
      %v2418 = vpop.f32.mrf.mxu0
      %v2419 = vadd.f32 %v1794, %v2418
      %v2420 = vpop.f32.mrf.mxu0
      %v2421 = vadd.f32 %v1794, %v2420
      %2422 = vmatprep.mubr.f32.mxu0 0.0
      %2423 = vmatmul.mubr.f32.gmra.mxu0 %v2017
      %v2424 = vpop.f32.mrf.mxu0
      %v2425 = vadd.f32 %v1799, %v2424
      %v2426 = vpop.f32.mrf.mxu0
      %v2427 = vadd.f32 %v1799, %v2426
      %2428 = vmatprep.mubr.f32.mxu0 0.0
      %2429 = vmatmul.mubr.f32.gmra.mxu0 %v2020
      %v2430 = vpop.f32.mrf.mxu0
      %v2431 = vadd.f32 %v1804, %v2430
      %v2432 = vpop.f32.mrf.mxu0
      %v2433 = vadd.f32 %v1804, %v2432
      %2434 = vmatprep.mubr.f32.mxu0 0.0
      %2435 = vmatmul.mubr.f32.gmra.mxu0 %v2023
      %v2436 = vpop.f32.mrf.mxu0
      %v2437 = vadd.f32 %v1809, %v2436
      %v2438 = vpop.f32.mrf.mxu0
      %v2439 = vadd.f32 %v1809, %v2438
      %2440 = vmatprep.mubr.f32.mxu0 0.0
      %2441 = vmatmul.mubr.f32.gmra.mxu0 %v2026
      %v2442 = vpop.f32.mrf.mxu0
      %v2443 = vadd.f32 %v1814, %v2442
      %v2444 = vpop.f32.mrf.mxu0
      %v2445 = vadd.f32 %v1814, %v2444
      %2446 = vmatprep.mubr.f32.mxu0 0.0
      %2447 = vmatmul.mubr.f32.gmra.mxu0 %v2029
      %v2448 = vpop.f32.mrf.mxu0
      %v2449 = vadd.f32 %v1819, %v2448
      %v2450 = vpop.f32.mrf.mxu0
      %v2451 = vadd.f32 %v1819, %v2450
      %2452 = vmatprep.mubr.f32.mxu0 0.0
      %2453 = vmatmul.mubr.f32.gmra.mxu0 %v2032
      %v2454 = vpop.f32.mrf.mxu0
      %v2455 = vadd.f32 %v1824, %v2454
      %v2456 = vpop.f32.mrf.mxu0
      %v2457 = vadd.f32 %v1824, %v2456
      %2458 = vmatprep.mubr.f32.mxu0 0.0
      %2459 = vmatmul.mubr.f32.gmra.mxu0 %v2035
      %v2460 = vpop.f32.mrf.mxu0
      %v2461 = vadd.f32 %v1829, %v2460
      %v2462 = vpop.f32.mrf.mxu0
      %v2463 = vadd.f32 %v1829, %v2462
      %2464 = vmatprep.mubr.f32.mxu0 0.0
      %2465 = vmatmul.mubr.f32.gmra.mxu0 %v2038
      %v2466 = vpop.f32.mrf.mxu0
      %v2467 = vadd.f32 %v1834, %v2466
      %v2468 = vpop.f32.mrf.mxu0
      %v2469 = vadd.f32 %v1834, %v2468
      %2470 = vmatprep.mubr.f32.mxu0 0.0
      %2471 = vmatmul.mubr.f32.gmra.mxu0 %v2041
      %v2472 = vpop.f32.mrf.mxu0
      %v2473 = vadd.f32 %v1839, %v2472
      %v2474 = vpop.f32.mrf.mxu0
      %v2475 = vadd.f32 %v1839, %v2474
      %2476 = vmatprep.mubr.f32.mxu0 0.0
      %2477 = vmatmul.mubr.f32.gmra.mxu0 %v2044
      %v2478 = vpop.f32.mrf.mxu0
      %v2479 = vadd.f32 %v1844, %v2478
      %v2480 = vpop.f32.mrf.mxu0
      %v2481 = vadd.f32 %v1844, %v2480
      %2482 = vmatprep.mubr.f32.mxu0 0.0
      %2483 = vmatmul.mubr.f32.gmra.mxu0 %v2047
      %v2484 = vpop.f32.mrf.mxu0
      %v2485 = vadd.f32 %v1849, %v2484
      %v2486 = vpop.f32.mrf.mxu0
      %v2487 = vadd.f32 %v1849, %v2486
      %2488 = vmatprep.mubr.f32.mxu0 0.0
      %2489 = vmatmul.mubr.f32.gmra.mxu0 %v2050
      %v2490 = vpop.f32.mrf.mxu0
      %v2491 = vadd.f32 %v1854, %v2490
      %v2492 = vpop.f32.mrf.mxu0
      %v2493 = vadd.f32 %v1854, %v2492
      %2494 = vmatprep.mubr.f32.mxu0 0.0
      %2495 = vmatmul.mubr.f32.gmra.mxu0 %v2053
      %v2496 = vpop.f32.mrf.mxu0
      %v2497 = vadd.f32 %v1859, %v2496
      %v2498 = vpop.f32.mrf.mxu0
      %v2499 = vadd.f32 %v1859, %v2498
      %2500 = vmatprep.mubr.f32.mxu0 0.0
      %2501 = vmatmul.mubr.f32.gmra.mxu0 %v2056
      %v2502 = vpop.f32.mrf.mxu0
      %v2503 = vadd.f32 %v1864, %v2502
      %v2504 = vpop.f32.mrf.mxu0
      %v2505 = vadd.f32 %v1864, %v2504
      %2506 = vdwg.mxu0
      %2507 = vst [vmem:[#allocation4] sm:$0xff] %v2125
      %2508 = vst [vmem:[#allocation4 + $0x8] sm:$0xff] %v2127
      %2509 = vst [vmem:[#allocation4 + $0x10] sm:$0xff] %v2131
      %2510 = vst [vmem:[#allocation4 + $0x18] sm:$0xff] %v2133
      %2511 = vst [vmem:[#allocation4 + $0x20] sm:$0xff] %v2137
      %2512 = vst [vmem:[#allocation4 + $0x28] sm:$0xff] %v2139
      %2513 = vst [vmem:[#allocation4 + $0x30] sm:$0xff] %v2143
      %2514 = vst [vmem:[#allocation4 + $0x38] sm:$0xff] %v2145
      %2515 = vst [vmem:[#allocation4 + $0x40] sm:$0xff] %v2149
      %2516 = vst [vmem:[#allocation4 + $0x48] sm:$0xff] %v2151
      %2517 = vst [vmem:[#allocation4 + $0x50] sm:$0xff] %v2155
      %2518 = vst [vmem:[#allocation4 + $0x58] sm:$0xff] %v2157
      %2519 = vst [vmem:[#allocation4 + $0x60] sm:$0xff] %v2161
      %2520 = vst [vmem:[#allocation4 + $0x68] sm:$0xff] %v2163
      %2521 = vst [vmem:[#allocation4 + $0x70] sm:$0xff] %v2167
      %2522 = vst [vmem:[#allocation4 + $0x78] sm:$0xff] %v2169
      %2523 = vst [vmem:[#allocation4 + $0x80] sm:$0xff] %v2173
      %2524 = vst [vmem:[#allocation4 + $0x88] sm:$0xff] %v2175
      %2525 = vst [vmem:[#allocation4 + $0x90] sm:$0xff] %v2179
      %2526 = vst [vmem:[#allocation4 + $0x98] sm:$0xff] %v2181
      %2527 = vst [vmem:[#allocation4 + $0xa0] sm:$0xff] %v2185
      %2528 = vst [vmem:[#allocation4 + $0xa8] sm:$0xff] %v2187
      %2529 = vst [vmem:[#allocation4 + $0xb0] sm:$0xff] %v2191
      %2530 = vst [vmem:[#allocation4 + $0xb8] sm:$0xff] %v2193
      %2531 = vst [vmem:[#allocation4 + $0xc0] sm:$0xff] %v2197
      %2532 = vst [vmem:[#allocation4 + $0xc8] sm:$0xff] %v2199
      %2533 = vst [vmem:[#allocation4 + $0xd0] sm:$0xff] %v2203
      %2534 = vst [vmem:[#allocation4 + $0xd8] sm:$0xff] %v2205
      %2535 = vst [vmem:[#allocation4 + $0xe0] sm:$0xff] %v2209
      %2536 = vst [vmem:[#allocation4 + $0xe8] sm:$0xff] %v2211
      %2537 = vst [vmem:[#allocation4 + $0xf0] sm:$0xff] %v2215
      %2538 = vst [vmem:[#allocation4 + $0xf8] sm:$0xff] %v2217
      %2539 = vst [vmem:[#allocation4 + $0x100] sm:$0xff] %v2221
      %2540 = vst [vmem:[#allocation4 + $0x108] sm:$0xff] %v2223
      %2541 = vst [vmem:[#allocation4 + $0x110] sm:$0xff] %v2227
      %2542 = vst [vmem:[#allocation4 + $0x118] sm:$0xff] %v2229
      %2543 = vst [vmem:[#allocation4 + $0x120] sm:$0xff] %v2233
      %2544 = vst [vmem:[#allocation4 + $0x128] sm:$0xff] %v2235
      %2545 = vst [vmem:[#allocation4 + $0x130] sm:$0xff] %v2239
      %2546 = vst [vmem:[#allocation4 + $0x138] sm:$0xff] %v2241
      %2547 = vst [vmem:[#allocation4 + $0x140] sm:$0xff] %v2245
      %2548 = vst [vmem:[#allocation4 + $0x148] sm:$0xff] %v2247
      %2549 = vst [vmem:[#allocation4 + $0x150] sm:$0xff] %v2251
      %2550 = vst [vmem:[#allocation4 + $0x158] sm:$0xff] %v2253
      %2551 = vst [vmem:[#allocation4 + $0x160] sm:$0xff] %v2257
      %2552 = vst [vmem:[#allocation4 + $0x168] sm:$0xff] %v2259
      %2553 = vst [vmem:[#allocation4 + $0x170] sm:$0xff] %v2263
      %2554 = vst [vmem:[#allocation4 + $0x178] sm:$0xff] %v2265
      %2555 = vst [vmem:[#allocation4 + $0x180] sm:$0xff] %v2269
      %2556 = vst [vmem:[#allocation4 + $0x188] sm:$0xff] %v2271
      %2557 = vst [vmem:[#allocation4 + $0x190] sm:$0xff] %v2275
      %2558 = vst [vmem:[#allocation4 + $0x198] sm:$0xff] %v2277
      %2559 = vst [vmem:[#allocation4 + $0x1a0] sm:$0xff] %v2281
      %2560 = vst [vmem:[#allocation4 + $0x1a8] sm:$0xff] %v2283
      %2561 = vst [vmem:[#allocation4 + $0x1b0] sm:$0xff] %v2287
      %2562 = vst [vmem:[#allocation4 + $0x1b8] sm:$0xff] %v2289
      %2563 = vst [vmem:[#allocation4 + $0x1c0] sm:$0xff] %v2293
      %2564 = vst [vmem:[#allocation4 + $0x1c8] sm:$0xff] %v2295
      %2565 = vst [vmem:[#allocation4 + $0x1d0] sm:$0xff] %v2299
      %2566 = vst [vmem:[#allocation4 + $0x1d8] sm:$0xff] %v2301
      %2567 = vst [vmem:[#allocation4 + $0x1e0] sm:$0xff] %v2305
      %2568 = vst [vmem:[#allocation4 + $0x1e8] sm:$0xff] %v2307
      %2569 = vst [vmem:[#allocation4 + $0x1f0] sm:$0xff] %v2311
      %2570 = vst [vmem:[#allocation4 + $0x1f8] sm:$0xff] %v2313
      %2571 = vst [vmem:[#allocation4 + $0x200] sm:$0xff] %v2317
      %2572 = vst [vmem:[#allocation4 + $0x208] sm:$0xff] %v2319
      %2573 = vst [vmem:[#allocation4 + $0x210] sm:$0xff] %v2323
      %2574 = vst [vmem:[#allocation4 + $0x218] sm:$0xff] %v2325
      %2575 = vst [vmem:[#allocation4 + $0x220] sm:$0xff] %v2329
      %2576 = vst [vmem:[#allocation4 + $0x228] sm:$0xff] %v2331
      %2577 = vst [vmem:[#allocation4 + $0x230] sm:$0xff] %v2335
      %2578 = vst [vmem:[#allocation4 + $0x238] sm:$0xff] %v2337
      %2579 = vst [vmem:[#allocation4 + $0x240] sm:$0xff] %v2341
      %2580 = vst [vmem:[#allocation4 + $0x248] sm:$0xff] %v2343
      %2581 = vst [vmem:[#allocation4 + $0x250] sm:$0xff] %v2347
      %2582 = vst [vmem:[#allocation4 + $0x258] sm:$0xff] %v2349
      %2583 = vst [vmem:[#allocation4 + $0x260] sm:$0xff] %v2353
      %2584 = vst [vmem:[#allocation4 + $0x268] sm:$0xff] %v2355
      %2585 = vst [vmem:[#allocation4 + $0x270] sm:$0xff] %v2359
      %2586 = vst [vmem:[#allocation4 + $0x278] sm:$0xff] %v2361
      %2587 = vst [vmem:[#allocation4 + $0x280] sm:$0xff] %v2365
      %2588 = vst [vmem:[#allocation4 + $0x288] sm:$0xff] %v2367
      %2589 = vst [vmem:[#allocation4 + $0x290] sm:$0xff] %v2371
      %2590 = vst [vmem:[#allocation4 + $0x298] sm:$0xff] %v2373
      %2591 = vst [vmem:[#allocation4 + $0x2a0] sm:$0xff] %v2377
      %2592 = vst [vmem:[#allocation4 + $0x2a8] sm:$0xff] %v2379
      %2593 = vst [vmem:[#allocation4 + $0x2b0] sm:$0xff] %v2383
      %2594 = vst [vmem:[#allocation4 + $0x2b8] sm:$0xff] %v2385
      %2595 = vst [vmem:[#allocation4 + $0x2c0] sm:$0xff] %v2389
      %2596 = vst [vmem:[#allocation4 + $0x2c8] sm:$0xff] %v2391
      %2597 = vst [vmem:[#allocation4 + $0x2d0] sm:$0xff] %v2395
      %2598 = vst [vmem:[#allocation4 + $0x2d8] sm:$0xff] %v2397
      %2599 = vst [vmem:[#allocation4 + $0x2e0] sm:$0xff] %v2401
      %2600 = vst [vmem:[#allocation4 + $0x2e8] sm:$0xff] %v2403
      %2601 = vst [vmem:[#allocation4 + $0x2f0] sm:$0xff] %v2407
      %2602 = vst [vmem:[#allocation4 + $0x2f8] sm:$0xff] %v2409
      %2603 = vst [vmem:[#allocation4 + $0x300] sm:$0xff] %v2413
      %2604 = vst [vmem:[#allocation4 + $0x308] sm:$0xff] %v2415
      %2605 = vst [vmem:[#allocation4 + $0x310] sm:$0xff] %v2419
      %2606 = vst [vmem:[#allocation4 + $0x318] sm:$0xff] %v2421
      %2607 = vst [vmem:[#allocation4 + $0x320] sm:$0xff] %v2425
      %2608 = vst [vmem:[#allocation4 + $0x328] sm:$0xff] %v2427
      %2609 = vst [vmem:[#allocation4 + $0x330] sm:$0xff] %v2431
      %2610 = vst [vmem:[#allocation4 + $0x338] sm:$0xff] %v2433
      %2611 = vst [vmem:[#allocation4 + $0x340] sm:$0xff] %v2437
      %2612 = vst [vmem:[#allocation4 + $0x348] sm:$0xff] %v2439
      %2613 = vst [vmem:[#allocation4 + $0x350] sm:$0xff] %v2443
      %2614 = vst [vmem:[#allocation4 + $0x358] sm:$0xff] %v2445
      %2615 = vst [vmem:[#allocation4 + $0x360] sm:$0xff] %v2449
      %2616 = vst [vmem:[#allocation4 + $0x368] sm:$0xff] %v2451
      %2617 = vst [vmem:[#allocation4 + $0x370] sm:$0xff] %v2455
      %2618 = vst [vmem:[#allocation4 + $0x378] sm:$0xff] %v2457
      %2619 = vst [vmem:[#allocation4 + $0x380] sm:$0xff] %v2461
      %2620 = vst [vmem:[#allocation4 + $0x388] sm:$0xff] %v2463
      %2621 = vst [vmem:[#allocation4 + $0x390] sm:$0xff] %v2467
      %2622 = vst [vmem:[#allocation4 + $0x398] sm:$0xff] %v2469
      %2623 = vst [vmem:[#allocation4 + $0x3a0] sm:$0xff] %v2473
      %2624 = vst [vmem:[#allocation4 + $0x3a8] sm:$0xff] %v2475
      %2625 = vst [vmem:[#allocation4 + $0x3b0] sm:$0xff] %v2479
      %2626 = vst [vmem:[#allocation4 + $0x3b8] sm:$0xff] %v2481
      %2627 = vst [vmem:[#allocation4 + $0x3c0] sm:$0xff] %v2485
      %2628 = vst [vmem:[#allocation4 + $0x3c8] sm:$0xff] %v2487
      %2629 = vst [vmem:[#allocation4 + $0x3d0] sm:$0xff] %v2491
      %2630 = vst [vmem:[#allocation4 + $0x3d8] sm:$0xff] %v2493
      %2631 = vst [vmem:[#allocation4 + $0x3e0] sm:$0xff] %v2497
      %2632 = vst [vmem:[#allocation4 + $0x3e8] sm:$0xff] %v2499
      %2633 = vst [vmem:[#allocation4 + $0x3f0] sm:$0xff] %v2503
      %2634 = vst [vmem:[#allocation4 + $0x3f8] sm:$0xff] %v2505
      %vm2635 = vcmask 261120
      %2636 = vst.msk [vmem:[#allocation2] sm:$0xff] %vm2635, %v677
      %2637 = vst.msk [vmem:[#allocation2 + $0x8] sm:$0xff] %vm2635, %v683
      %2638 = vst.msk [vmem:[#allocation2 + $0x10] sm:$0xff] %vm2635, %v689
      %2639 = vst.msk [vmem:[#allocation2 + $0x18] sm:$0xff] %vm2635, %v695
      %2640 = vst.msk [vmem:[#allocation2 + $0x20] sm:$0xff] %vm2635, %v701
      %2641 = vst.msk [vmem:[#allocation2 + $0x28] sm:$0xff] %vm2635, %v707
      %2642 = vst.msk [vmem:[#allocation2 + $0x30] sm:$0xff] %vm2635, %v713
      %2643 = vst.msk [vmem:[#allocation2 + $0x38] sm:$0xff] %vm2635, %v719
      %2644 = vst.msk [vmem:[#allocation2 + $0x40] sm:$0xff] %vm2635, %v725
      %2645 = vst.msk [vmem:[#allocation2 + $0x48] sm:$0xff] %vm2635, %v731
      %2646 = vst.msk [vmem:[#allocation2 + $0x50] sm:$0xff] %vm2635, %v737
      %2647 = vst.msk [vmem:[#allocation2 + $0x58] sm:$0xff] %vm2635, %v743
      %2648 = vst.msk [vmem:[#allocation2 + $0x60] sm:$0xff] %vm2635, %v749
      %2649 = vst.msk [vmem:[#allocation2 + $0x68] sm:$0xff] %vm2635, %v755
      %2650 = vst.msk [vmem:[#allocation2 + $0x70] sm:$0xff] %vm2635, %v761
      %2651 = vst.msk [vmem:[#allocation2 + $0x78] sm:$0xff] %vm2635, %v767
      %2668 = vrot.lane.b32.xlu0 %v677, 96
      %v2669 = vpop.permute.xlu0 %2668
      %2670 = vrot.lane.b32.xlu0 %v683, 96
      %v2671 = vpop.permute.xlu0 %2670
      %2672 = vrot.lane.b32.xlu0 %v689, 96
      %v2673 = vpop.permute.xlu0 %2672
      %2674 = vrot.lane.b32.xlu0 %v695, 96
      %v2675 = vpop.permute.xlu0 %2674
      %2676 = vrot.lane.b32.xlu0 %v701, 96
      %v2677 = vpop.permute.xlu0 %2676
      %2678 = vrot.lane.b32.xlu0 %v707, 96
      %v2679 = vpop.permute.xlu0 %2678
      %2680 = vrot.lane.b32.xlu0 %v713, 96
      %v2681 = vpop.permute.xlu0 %2680
      %2682 = vrot.lane.b32.xlu0 %v719, 96
      %v2683 = vpop.permute.xlu0 %2682
      %2684 = vrot.lane.b32.xlu0 %v725, 96
      %v2685 = vpop.permute.xlu0 %2684
      %2686 = vrot.lane.b32.xlu0 %v731, 96
      %v2687 = vpop.permute.xlu0 %2686
      %2688 = vrot.lane.b32.xlu0 %v737, 96
      %v2689 = vpop.permute.xlu0 %2688
      %2690 = vrot.lane.b32.xlu0 %v743, 96
      %v2691 = vpop.permute.xlu0 %2690
      %2692 = vrot.lane.b32.xlu0 %v749, 96
      %v2693 = vpop.permute.xlu0 %2692
      %2694 = vrot.lane.b32.xlu0 %v755, 96
      %v2695 = vpop.permute.xlu0 %2694
      %2696 = vrot.lane.b32.xlu0 %v761, 96
      %v2697 = vpop.permute.xlu0 %2696
      %2698 = vrot.lane.b32.xlu0 %v767, 96
      %v2699 = vpop.permute.xlu0 %2698
      %s2716 = scalar_lea.vmem [#allocation2], 128
      %2717 = vst.msk [vmem:[%s2716] sm:$0xff] %vm2635, %v2669
      %2718 = vst.msk [vmem:[%s2716 + $0x8] sm:$0xff] %vm2635, %v2671
      %2719 = vst.msk [vmem:[%s2716 + $0x10] sm:$0xff] %vm2635, %v2673
      %2720 = vst.msk [vmem:[%s2716 + $0x18] sm:$0xff] %vm2635, %v2675
      %2721 = vst.msk [vmem:[%s2716 + $0x20] sm:$0xff] %vm2635, %v2677
      %2722 = vst.msk [vmem:[%s2716 + $0x28] sm:$0xff] %vm2635, %v2679
      %2723 = vst.msk [vmem:[%s2716 + $0x30] sm:$0xff] %vm2635, %v2681
      %2724 = vst.msk [vmem:[%s2716 + $0x38] sm:$0xff] %vm2635, %v2683
      %2725 = vst.msk [vmem:[%s2716 + $0x40] sm:$0xff] %vm2635, %v2685
      %2726 = vst.msk [vmem:[%s2716 + $0x48] sm:$0xff] %vm2635, %v2687
      %2727 = vst.msk [vmem:[%s2716 + $0x50] sm:$0xff] %vm2635, %v2689
      %2728 = vst.msk [vmem:[%s2716 + $0x58] sm:$0xff] %vm2635, %v2691
      %2729 = vst.msk [vmem:[%s2716 + $0x60] sm:$0xff] %vm2635, %v2693
      %2730 = vst.msk [vmem:[%s2716 + $0x68] sm:$0xff] %vm2635, %v2695
      %2731 = vst.msk [vmem:[%s2716 + $0x70] sm:$0xff] %vm2635, %v2697
      %2732 = vst.msk [vmem:[%s2716 + $0x78] sm:$0xff] %vm2635, %v2699
      %2733 = vrot.lane.b32.xlu0 %v677, 64
      %v2734 = vpop.permute.xlu0 %2733
      %2735 = vrot.lane.b32.xlu0 %v683, 64
      %v2736 = vpop.permute.xlu0 %2735
      %2737 = vrot.lane.b32.xlu0 %v689, 64
      %v2738 = vpop.permute.xlu0 %2737
      %2739 = vrot.lane.b32.xlu0 %v695, 64
      %v2740 = vpop.permute.xlu0 %2739
      %2741 = vrot.lane.b32.xlu0 %v701, 64
      %v2742 = vpop.permute.xlu0 %2741
      %2743 = vrot.lane.b32.xlu0 %v707, 64
      %v2744 = vpop.permute.xlu0 %2743
      %2745 = vrot.lane.b32.xlu0 %v713, 64
      %v2746 = vpop.permute.xlu0 %2745
      %2747 = vrot.lane.b32.xlu0 %v719, 64
      %v2748 = vpop.permute.xlu0 %2747
      %2749 = vrot.lane.b32.xlu0 %v725, 64
      %v2750 = vpop.permute.xlu0 %2749
      %2751 = vrot.lane.b32.xlu0 %v731, 64
      %v2752 = vpop.permute.xlu0 %2751
      %2753 = vrot.lane.b32.xlu0 %v737, 64
      %v2754 = vpop.permute.xlu0 %2753
      %2755 = vrot.lane.b32.xlu0 %v743, 64
      %v2756 = vpop.permute.xlu0 %2755
      %2757 = vrot.lane.b32.xlu0 %v749, 64
      %v2758 = vpop.permute.xlu0 %2757
      %2759 = vrot.lane.b32.xlu0 %v755, 64
      %v2760 = vpop.permute.xlu0 %2759
      %2761 = vrot.lane.b32.xlu0 %v761, 64
      %v2762 = vpop.permute.xlu0 %2761
      %2763 = vrot.lane.b32.xlu0 %v767, 64
      %v2764 = vpop.permute.xlu0 %2763
      %s2781 = scalar_lea.vmem [#allocation2], 256
      %2782 = vst.msk [vmem:[%s2781] sm:$0xff] %vm2635, %v2734
      %2783 = vst.msk [vmem:[%s2781 + $0x8] sm:$0xff] %vm2635, %v2736
      %2784 = vst.msk [vmem:[%s2781 + $0x10] sm:$0xff] %vm2635, %v2738
      %2785 = vst.msk [vmem:[%s2781 + $0x18] sm:$0xff] %vm2635, %v2740
      %2786 = vst.msk [vmem:[%s2781 + $0x20] sm:$0xff] %vm2635, %v2742
      %2787 = vst.msk [vmem:[%s2781 + $0x28] sm:$0xff] %vm2635, %v2744
      %2788 = vst.msk [vmem:[%s2781 + $0x30] sm:$0xff] %vm2635, %v2746
      %2789 = vst.msk [vmem:[%s2781 + $0x38] sm:$0xff] %vm2635, %v2748
      %2790 = vst.msk [vmem:[%s2781 + $0x40] sm:$0xff] %vm2635, %v2750
      %2791 = vst.msk [vmem:[%s2781 + $0x48] sm:$0xff] %vm2635, %v2752
      %2792 = vst.msk [vmem:[%s2781 + $0x50] sm:$0xff] %vm2635, %v2754
      %2793 = vst.msk [vmem:[%s2781 + $0x58] sm:$0xff] %vm2635, %v2756
      %2794 = vst.msk [vmem:[%s2781 + $0x60] sm:$0xff] %vm2635, %v2758
      %2795 = vst.msk [vmem:[%s2781 + $0x68] sm:$0xff] %vm2635, %v2760
      %2796 = vst.msk [vmem:[%s2781 + $0x70] sm:$0xff] %vm2635, %v2762
      %2797 = vst.msk [vmem:[%s2781 + $0x78] sm:$0xff] %vm2635, %v2764
      %2798 = vrot.lane.b32.xlu0 %v677, 32
      %v2799 = vpop.permute.xlu0 %2798
      %2800 = vrot.lane.b32.xlu0 %v683, 32
      %v2801 = vpop.permute.xlu0 %2800
      %2802 = vrot.lane.b32.xlu0 %v689, 32
      %v2803 = vpop.permute.xlu0 %2802
      %2804 = vrot.lane.b32.xlu0 %v695, 32
      %v2805 = vpop.permute.xlu0 %2804
      %2806 = vrot.lane.b32.xlu0 %v701, 32
      %v2807 = vpop.permute.xlu0 %2806
      %2808 = vrot.lane.b32.xlu0 %v707, 32
      %v2809 = vpop.permute.xlu0 %2808
      %2810 = vrot.lane.b32.xlu0 %v713, 32
      %v2811 = vpop.permute.xlu0 %2810
      %2812 = vrot.lane.b32.xlu0 %v719, 32
      %v2813 = vpop.permute.xlu0 %2812
      %2814 = vrot.lane.b32.xlu0 %v725, 32
      %v2815 = vpop.permute.xlu0 %2814
      %2816 = vrot.lane.b32.xlu0 %v731, 32
      %v2817 = vpop.permute.xlu0 %2816
      %2818 = vrot.lane.b32.xlu0 %v737, 32
      %v2819 = vpop.permute.xlu0 %2818
      %2820 = vrot.lane.b32.xlu0 %v743, 32
      %v2821 = vpop.permute.xlu0 %2820
      %2822 = vrot.lane.b32.xlu0 %v749, 32
      %v2823 = vpop.permute.xlu0 %2822
      %2824 = vrot.lane.b32.xlu0 %v755, 32
      %v2825 = vpop.permute.xlu0 %2824
      %2826 = vrot.lane.b32.xlu0 %v761, 32
      %v2827 = vpop.permute.xlu0 %2826
      %2828 = vrot.lane.b32.xlu0 %v767, 32
      %v2829 = vpop.permute.xlu0 %2828
      %s2846 = scalar_lea.vmem [#allocation2], 384
      %2847 = vst.msk [vmem:[%s2846] sm:$0xff] %vm2635, %v2799
      %2848 = vst.msk [vmem:[%s2846 + $0x8] sm:$0xff] %vm2635, %v2801
      %2849 = vst.msk [vmem:[%s2846 + $0x10] sm:$0xff] %vm2635, %v2803
      %2850 = vst.msk [vmem:[%s2846 + $0x18] sm:$0xff] %vm2635, %v2805
      %2851 = vst.msk [vmem:[%s2846 + $0x20] sm:$0xff] %vm2635, %v2807
      %2852 = vst.msk [vmem:[%s2846 + $0x28] sm:$0xff] %vm2635, %v2809
      %2853 = vst.msk [vmem:[%s2846 + $0x30] sm:$0xff] %vm2635, %v2811
      %2854 = vst.msk [vmem:[%s2846 + $0x38] sm:$0xff] %vm2635, %v2813
      %2855 = vst.msk [vmem:[%s2846 + $0x40] sm:$0xff] %vm2635, %v2815
      %2856 = vst.msk [vmem:[%s2846 + $0x48] sm:$0xff] %vm2635, %v2817
      %2857 = vst.msk [vmem:[%s2846 + $0x50] sm:$0xff] %vm2635, %v2819
      %2858 = vst.msk [vmem:[%s2846 + $0x58] sm:$0xff] %vm2635, %v2821
      %2859 = vst.msk [vmem:[%s2846 + $0x60] sm:$0xff] %vm2635, %v2823
      %2860 = vst.msk [vmem:[%s2846 + $0x68] sm:$0xff] %vm2635, %v2825
      %2861 = vst.msk [vmem:[%s2846 + $0x70] sm:$0xff] %vm2635, %v2827
      %2862 = vst.msk [vmem:[%s2846 + $0x78] sm:$0xff] %vm2635, %v2829
      %s2863 = scalar_lea.vmem [#allocation2], 512
      %2864 = vst.msk [vmem:[%s2863] sm:$0xff] %vm2635, %v679
      %2865 = vst.msk [vmem:[%s2863 + $0x8] sm:$0xff] %vm2635, %v685
      %2866 = vst.msk [vmem:[%s2863 + $0x10] sm:$0xff] %vm2635, %v691
      %2867 = vst.msk [vmem:[%s2863 + $0x18] sm:$0xff] %vm2635, %v697
      %2868 = vst.msk [vmem:[%s2863 + $0x20] sm:$0xff] %vm2635, %v703
      %2869 = vst.msk [vmem:[%s2863 + $0x28] sm:$0xff] %vm2635, %v709
      %2870 = vst.msk [vmem:[%s2863 + $0x30] sm:$0xff] %vm2635, %v715
      %2871 = vst.msk [vmem:[%s2863 + $0x38] sm:$0xff] %vm2635, %v721
      %2872 = vst.msk [vmem:[%s2863 + $0x40] sm:$0xff] %vm2635, %v727
      %2873 = vst.msk [vmem:[%s2863 + $0x48] sm:$0xff] %vm2635, %v733
      %2874 = vst.msk [vmem:[%s2863 + $0x50] sm:$0xff] %vm2635, %v739
      %2875 = vst.msk [vmem:[%s2863 + $0x58] sm:$0xff] %vm2635, %v745
      %2876 = vst.msk [vmem:[%s2863 + $0x60] sm:$0xff] %vm2635, %v751
      %2877 = vst.msk [vmem:[%s2863 + $0x68] sm:$0xff] %vm2635, %v757
      %2878 = vst.msk [vmem:[%s2863 + $0x70] sm:$0xff] %vm2635, %v763
      %2879 = vst.msk [vmem:[%s2863 + $0x78] sm:$0xff] %vm2635, %v769
      %2896 = vrot.lane.b32.xlu0 %v679, 96
      %v2897 = vpop.permute.xlu0 %2896
      %2898 = vrot.lane.b32.xlu0 %v685, 96
      %v2899 = vpop.permute.xlu0 %2898
      %2900 = vrot.lane.b32.xlu0 %v691, 96
      %v2901 = vpop.permute.xlu0 %2900
      %2902 = vrot.lane.b32.xlu0 %v697, 96
      %v2903 = vpop.permute.xlu0 %2902
      %2904 = vrot.lane.b32.xlu0 %v703, 96
      %v2905 = vpop.permute.xlu0 %2904
      %2906 = vrot.lane.b32.xlu0 %v709, 96
      %v2907 = vpop.permute.xlu0 %2906
      %2908 = vrot.lane.b32.xlu0 %v715, 96
      %v2909 = vpop.permute.xlu0 %2908
      %2910 = vrot.lane.b32.xlu0 %v721, 96
      %v2911 = vpop.permute.xlu0 %2910
      %2912 = vrot.lane.b32.xlu0 %v727, 96
      %v2913 = vpop.permute.xlu0 %2912
      %2914 = vrot.lane.b32.xlu0 %v733, 96
      %v2915 = vpop.permute.xlu0 %2914
      %2916 = vrot.lane.b32.xlu0 %v739, 96
      %v2917 = vpop.permute.xlu0 %2916
      %2918 = vrot.lane.b32.xlu0 %v745, 96
      %v2919 = vpop.permute.xlu0 %2918
      %2920 = vrot.lane.b32.xlu0 %v751, 96
      %v2921 = vpop.permute.xlu0 %2920
      %2922 = vrot.lane.b32.xlu0 %v757, 96
      %v2923 = vpop.permute.xlu0 %2922
      %2924 = vrot.lane.b32.xlu0 %v763, 96
      %v2925 = vpop.permute.xlu0 %2924
      %2926 = vrot.lane.b32.xlu0 %v769, 96
      %v2927 = vpop.permute.xlu0 %2926
      %s2944 = scalar_lea.vmem [#allocation2], 640
      %2945 = vst.msk [vmem:[%s2944] sm:$0xff] %vm2635, %v2897
      %2946 = vst.msk [vmem:[%s2944 + $0x8] sm:$0xff] %vm2635, %v2899
      %2947 = vst.msk [vmem:[%s2944 + $0x10] sm:$0xff] %vm2635, %v2901
      %2948 = vst.msk [vmem:[%s2944 + $0x18] sm:$0xff] %vm2635, %v2903
      %2949 = vst.msk [vmem:[%s2944 + $0x20] sm:$0xff] %vm2635, %v2905
      %2950 = vst.msk [vmem:[%s2944 + $0x28] sm:$0xff] %vm2635, %v2907
      %2951 = vst.msk [vmem:[%s2944 + $0x30] sm:$0xff] %vm2635, %v2909
      %2952 = vst.msk [vmem:[%s2944 + $0x38] sm:$0xff] %vm2635, %v2911
      %2953 = vst.msk [vmem:[%s2944 + $0x40] sm:$0xff] %vm2635, %v2913
      %2954 = vst.msk [vmem:[%s2944 + $0x48] sm:$0xff] %vm2635, %v2915
      %2955 = vst.msk [vmem:[%s2944 + $0x50] sm:$0xff] %vm2635, %v2917
      %2956 = vst.msk [vmem:[%s2944 + $0x58] sm:$0xff] %vm2635, %v2919
      %2957 = vst.msk [vmem:[%s2944 + $0x60] sm:$0xff] %vm2635, %v2921
      %2958 = vst.msk [vmem:[%s2944 + $0x68] sm:$0xff] %vm2635, %v2923
      %2959 = vst.msk [vmem:[%s2944 + $0x70] sm:$0xff] %vm2635, %v2925
      %2960 = vst.msk [vmem:[%s2944 + $0x78] sm:$0xff] %vm2635, %v2927
      %2961 = vrot.lane.b32.xlu0 %v679, 64
      %v2962 = vpop.permute.xlu0 %2961
      %2963 = vrot.lane.b32.xlu0 %v685, 64
      %v2964 = vpop.permute.xlu0 %2963
      %2965 = vrot.lane.b32.xlu0 %v691, 64
      %v2966 = vpop.permute.xlu0 %2965
      %2967 = vrot.lane.b32.xlu0 %v697, 64
      %v2968 = vpop.permute.xlu0 %2967
      %2969 = vrot.lane.b32.xlu0 %v703, 64
      %v2970 = vpop.permute.xlu0 %2969
      %2971 = vrot.lane.b32.xlu0 %v709, 64
      %v2972 = vpop.permute.xlu0 %2971
      %2973 = vrot.lane.b32.xlu0 %v715, 64
      %v2974 = vpop.permute.xlu0 %2973
      %2975 = vrot.lane.b32.xlu0 %v721, 64
      %v2976 = vpop.permute.xlu0 %2975
      %2977 = vrot.lane.b32.xlu0 %v727, 64
      %v2978 = vpop.permute.xlu0 %2977
      %2979 = vrot.lane.b32.xlu0 %v733, 64
      %v2980 = vpop.permute.xlu0 %2979
      %2981 = vrot.lane.b32.xlu0 %v739, 64
      %v2982 = vpop.permute.xlu0 %2981
      %2983 = vrot.lane.b32.xlu0 %v745, 64
      %v2984 = vpop.permute.xlu0 %2983
      %2985 = vrot.lane.b32.xlu0 %v751, 64
      %v2986 = vpop.permute.xlu0 %2985
      %2987 = vrot.lane.b32.xlu0 %v757, 64
      %v2988 = vpop.permute.xlu0 %2987
      %2989 = vrot.lane.b32.xlu0 %v763, 64
      %v2990 = vpop.permute.xlu0 %2989
      %2991 = vrot.lane.b32.xlu0 %v769, 64
      %v2992 = vpop.permute.xlu0 %2991
      %s3009 = scalar_lea.vmem [#allocation2], 768
      %3010 = vst.msk [vmem:[%s3009] sm:$0xff] %vm2635, %v2962
      %3011 = vst.msk [vmem:[%s3009 + $0x8] sm:$0xff] %vm2635, %v2964
      %3012 = vst.msk [vmem:[%s3009 + $0x10] sm:$0xff] %vm2635, %v2966
      %3013 = vst.msk [vmem:[%s3009 + $0x18] sm:$0xff] %vm2635, %v2968
      %3014 = vst.msk [vmem:[%s3009 + $0x20] sm:$0xff] %vm2635, %v2970
      %3015 = vst.msk [vmem:[%s3009 + $0x28] sm:$0xff] %vm2635, %v2972
      %3016 = vst.msk [vmem:[%s3009 + $0x30] sm:$0xff] %vm2635, %v2974
      %3017 = vst.msk [vmem:[%s3009 + $0x38] sm:$0xff] %vm2635, %v2976
      %3018 = vst.msk [vmem:[%s3009 + $0x40] sm:$0xff] %vm2635, %v2978
      %3019 = vst.msk [vmem:[%s3009 + $0x48] sm:$0xff] %vm2635, %v2980
      %3020 = vst.msk [vmem:[%s3009 + $0x50] sm:$0xff] %vm2635, %v2982
      %3021 = vst.msk [vmem:[%s3009 + $0x58] sm:$0xff] %vm2635, %v2984
      %3022 = vst.msk [vmem:[%s3009 + $0x60] sm:$0xff] %vm2635, %v2986
      %3023 = vst.msk [vmem:[%s3009 + $0x68] sm:$0xff] %vm2635, %v2988
      %3024 = vst.msk [vmem:[%s3009 + $0x70] sm:$0xff] %vm2635, %v2990
      %3025 = vst.msk [vmem:[%s3009 + $0x78] sm:$0xff] %vm2635, %v2992
      %3026 = vrot.lane.b32.xlu0 %v679, 32
      %v3027 = vpop.permute.xlu0 %3026
      %3028 = vrot.lane.b32.xlu0 %v685, 32
      %v3029 = vpop.permute.xlu0 %3028
      %3030 = vrot.lane.b32.xlu0 %v691, 32
      %v3031 = vpop.permute.xlu0 %3030
      %3032 = vrot.lane.b32.xlu0 %v697, 32
      %v3033 = vpop.permute.xlu0 %3032
      %3034 = vrot.lane.b32.xlu0 %v703, 32
      %v3035 = vpop.permute.xlu0 %3034
      %3036 = vrot.lane.b32.xlu0 %v709, 32
      %v3037 = vpop.permute.xlu0 %3036
      %3038 = vrot.lane.b32.xlu0 %v715, 32
      %v3039 = vpop.permute.xlu0 %3038
      %3040 = vrot.lane.b32.xlu0 %v721, 32
      %v3041 = vpop.permute.xlu0 %3040
      %3042 = vrot.lane.b32.xlu0 %v727, 32
      %v3043 = vpop.permute.xlu0 %3042
      %3044 = vrot.lane.b32.xlu0 %v733, 32
      %v3045 = vpop.permute.xlu0 %3044
      %3046 = vrot.lane.b32.xlu0 %v739, 32
      %v3047 = vpop.permute.xlu0 %3046
      %3048 = vrot.lane.b32.xlu0 %v745, 32
      %v3049 = vpop.permute.xlu0 %3048
      %3050 = vrot.lane.b32.xlu0 %v751, 32
      %v3051 = vpop.permute.xlu0 %3050
      %3052 = vrot.lane.b32.xlu0 %v757, 32
      %v3053 = vpop.permute.xlu0 %3052
      %3054 = vrot.lane.b32.xlu0 %v763, 32
      %v3055 = vpop.permute.xlu0 %3054
      %3056 = vrot.lane.b32.xlu0 %v769, 32
      %v3057 = vpop.permute.xlu0 %3056
      %s3074 = scalar_lea.vmem [#allocation2], 896
      %3075 = vst.msk [vmem:[%s3074] sm:$0xff] %vm2635, %v3027
      %3076 = vst.msk [vmem:[%s3074 + $0x8] sm:$0xff] %vm2635, %v3029
      %3077 = vst.msk [vmem:[%s3074 + $0x10] sm:$0xff] %vm2635, %v3031
      %3078 = vst.msk [vmem:[%s3074 + $0x18] sm:$0xff] %vm2635, %v3033
      %3079 = vst.msk [vmem:[%s3074 + $0x20] sm:$0xff] %vm2635, %v3035
      %3080 = vst.msk [vmem:[%s3074 + $0x28] sm:$0xff] %vm2635, %v3037
      %3081 = vst.msk [vmem:[%s3074 + $0x30] sm:$0xff] %vm2635, %v3039
      %3082 = vst.msk [vmem:[%s3074 + $0x38] sm:$0xff] %vm2635, %v3041
      %3083 = vst.msk [vmem:[%s3074 + $0x40] sm:$0xff] %vm2635, %v3043
      %3084 = vst.msk [vmem:[%s3074 + $0x48] sm:$0xff] %vm2635, %v3045
      %3085 = vst.msk [vmem:[%s3074 + $0x50] sm:$0xff] %vm2635, %v3047
      %3086 = vst.msk [vmem:[%s3074 + $0x58] sm:$0xff] %vm2635, %v3049
      %3087 = vst.msk [vmem:[%s3074 + $0x60] sm:$0xff] %vm2635, %v3051
      %3088 = vst.msk [vmem:[%s3074 + $0x68] sm:$0xff] %vm2635, %v3053
      %3089 = vst.msk [vmem:[%s3074 + $0x70] sm:$0xff] %vm2635, %v3055
      %3090 = vst.msk [vmem:[%s3074 + $0x78] sm:$0xff] %vm2635, %v3057
      loop: start=0, step=1, limit=8
      $region77: #{simple_transformer_block.1} parent=75 // loop_pre_header
        _
      $region78: #{simple_transformer_block.1} parent=75 // loop_header
        %s3092 = sphi 0, %s3096
        %p3093 = scmp.ge.s32.totalorder %s3092, 8
      $region79: #{simple_transformer_block.1} parent=75 // loop_header_branch
        %3095 = sbr.rel (%p3093) target = $region83
      $region80: #{simple_transformer_block.1} parent=75 // loop_body
        %s3097 = smul.u32 %s3092, 32
        %s3098 = smul.u32 %s3092, 64
        %s3099 = smul.u32 %s3092, 128
        %s3100 = scalar_lea.vmem [#allocation2], %s3099
        %v3101 = vld [vmem:[%s3100] sm:$0xff]
        %v3102 = vld [vmem:[%s3100 + $0x8] sm:$0xff]
        %v3103 = vld [vmem:[%s3100 + $0x10] sm:$0xff]
        %v3104 = vld [vmem:[%s3100 + $0x18] sm:$0xff]
        %v3105 = vld [vmem:[%s3100 + $0x20] sm:$0xff]
        %v3106 = vld [vmem:[%s3100 + $0x28] sm:$0xff]
        %v3107 = vld [vmem:[%s3100 + $0x30] sm:$0xff]
        %v3108 = vld [vmem:[%s3100 + $0x38] sm:$0xff]
        %v3109 = vld [vmem:[%s3100 + $0x40] sm:$0xff]
        %v3110 = vld [vmem:[%s3100 + $0x48] sm:$0xff]
        %v3111 = vld [vmem:[%s3100 + $0x50] sm:$0xff]
        %v3112 = vld [vmem:[%s3100 + $0x58] sm:$0xff]
        %v3113 = vld [vmem:[%s3100 + $0x60] sm:$0xff]
        %v3114 = vld [vmem:[%s3100 + $0x68] sm:$0xff]
        %v3115 = vld [vmem:[%s3100 + $0x70] sm:$0xff]
        %v3116 = vld [vmem:[%s3100 + $0x78] sm:$0xff]
        %s3117 = sshra.s32 %s3097, 3
        %s3118 = sand.u32 %s3097, 7
        %s3119 = smul.u32 %s3117, 2
        %s3120 = smul.addr %s3119, 8
        %s3121 = scalar_lea.vmem [#allocation3], %s3120
        %v3122 = vld [vmem:[%s3121] sm:$0xff]
        %v3123 = vld [vmem:[%s3121 + $0x8] sm:$0xff]
        %v3124 = vld [vmem:[%s3121 + $0x10] sm:$0xff]
        %v3125 = vld [vmem:[%s3121 + $0x18] sm:$0xff]
        %v3126 = vld [vmem:[%s3121 + $0x20] sm:$0xff]
        %v3127 = vld [vmem:[%s3121 + $0x28] sm:$0xff]
        %v3128 = vld [vmem:[%s3121 + $0x30] sm:$0xff]
        %v3129 = vld [vmem:[%s3121 + $0x38] sm:$0xff]
        %s3130 = sshra.s32 %s3098, 3
        %s3131 = sand.u32 %s3098, 7
        %s3132 = smul.u32 %s3130, 2
        %s3133 = smul.addr %s3132, 8
        %s3134 = scalar_lea.vmem [#allocation4], %s3133
        %v3135 = vld [vmem:[%s3134] sm:$0xff]
        %v3136 = vld [vmem:[%s3134 + $0x8] sm:$0xff]
        %v3137 = vld [vmem:[%s3134 + $0x10] sm:$0xff]
        %v3138 = vld [vmem:[%s3134 + $0x18] sm:$0xff]
        %v3139 = vld [vmem:[%s3134 + $0x20] sm:$0xff]
        %v3140 = vld [vmem:[%s3134 + $0x28] sm:$0xff]
        %v3141 = vld [vmem:[%s3134 + $0x30] sm:$0xff]
        %v3142 = vld [vmem:[%s3134 + $0x38] sm:$0xff]
        %v3143 = vld [vmem:[%s3134 + $0x40] sm:$0xff]
        %v3144 = vld [vmem:[%s3134 + $0x48] sm:$0xff]
        %v3145 = vld [vmem:[%s3134 + $0x50] sm:$0xff]
        %v3146 = vld [vmem:[%s3134 + $0x58] sm:$0xff]
        %v3147 = vld [vmem:[%s3134 + $0x60] sm:$0xff]
        %v3148 = vld [vmem:[%s3134 + $0x68] sm:$0xff]
        %v3149 = vld [vmem:[%s3134 + $0x70] sm:$0xff]
        %v3150 = vld [vmem:[%s3134 + $0x78] sm:$0xff]
        %v3152 = vsel %vm2635, %v3101, 0
        %v3155 = vsel %vm2635, %v3102, 0
        %v3158 = vsel %vm2635, %v3103, 0
        %v3161 = vsel %vm2635, %v3104, 0
        %v3164 = vsel %vm2635, %v3105, 0
        %v3167 = vsel %vm2635, %v3106, 0
        %v3170 = vsel %vm2635, %v3107, 0
        %v3173 = vsel %vm2635, %v3108, 0
        %v3176 = vsel %vm2635, %v3109, 0
        %v3179 = vsel %vm2635, %v3110, 0
        %v3182 = vsel %vm2635, %v3111, 0
        %v3185 = vsel %vm2635, %v3112, 0
        %v3188 = vsel %vm2635, %v3113, 0
        %v3191 = vsel %vm2635, %v3114, 0
        %v3194 = vsel %vm2635, %v3115, 0
        %v3197 = vsel %vm2635, %v3116, 0
        %3199 = vmatprep.subr.mxu0 0.0
        %3200 = vmatpush1.msra.mxu0 0.0
        %3201 = vmatprep.subr.mxu0 0.0
        %3202 = vmatpush1.msra.mxu0 0.0
        %3203 = vmatprep.subr.mxu0 0.0
        %3204 = vmatpush1.msra.mxu0 0.0
        %3205 = vmatprep.subr.mxu0 0.0
        %3206 = vmatpush1.msra.mxu0 0.0
        %3207 = vmatprep.subr.mxu0 0.0
        %3208 = vmatpush1.msra.mxu0 0.0
        %3209 = vmatprep.subr.mxu0 0.0
        %3210 = vmatpush1.msra.mxu0 0.0
        %3211 = vmatprep.subr.mxu0 0.0
        %3212 = vmatpush1.msra.mxu0 0.0
        %3213 = vmatprep.subr.mxu0 0.0
        %3214 = vmatpush1.msra.mxu0 0.0
        %3215 = vmatprep.subr.mxu0 0.0
        %3216 = vmatpush1.msra.mxu0 0.0
        %3217 = vmatprep.subr.mxu0 0.0
        %3218 = vmatpush1.msra.mxu0 0.0
        %3219 = vmatprep.subr.mxu0 0.0
        %3220 = vmatpush1.msra.mxu0 0.0
        %3221 = vmatprep.subr.mxu0 0.0
        %3222 = vmatpush1.msra.mxu0 0.0
        %3223 = vmatprep.subr.mxu0 %v3129
        %3224 = vmatpush1.msra.mxu0 %v3128
        %3225 = vmatprep.subr.mxu0 %v3127
        %3226 = vmatpush1.msra.mxu0 %v3126
        %3227 = vmatprep.subr.mxu0 %v3125
        %3228 = vmatpush1.msra.mxu0 %v3124
        %3229 = vmatprep.subr.mxu0 %v3123
        %3230 = vmatpush1.msra.mxu0 %v3122
        %3231 = vmatprep.subr.mxu0 0.0
        %3232 = vmatpush2.msra.mxu0 0.0
        %3233 = vmatprep.subr.mxu0 0.0
        %3234 = vmatpush2.msra.mxu0 0.0
        %3235 = vmatprep.subr.mxu0 0.0
        %3236 = vmatpush2.msra.mxu0 0.0
        %3237 = vmatprep.subr.mxu0 0.0
        %3238 = vmatpush2.msra.mxu0 0.0
        %3239 = vmatprep.subr.mxu0 0.0
        %3240 = vmatpush2.msra.mxu0 0.0
        %3241 = vmatprep.subr.mxu0 0.0
        %3242 = vmatpush2.msra.mxu0 0.0
        %3243 = vmatprep.subr.mxu0 0.0
        %3244 = vmatpush2.msra.mxu0 0.0
        %3245 = vmatprep.subr.mxu0 0.0
        %3246 = vmatpush2.msra.mxu0 0.0
        %3247 = vmatprep.subr.mxu0 0.0
        %3248 = vmatpush2.msra.mxu0 0.0
        %3249 = vmatprep.subr.mxu0 0.0
        %3250 = vmatpush2.msra.mxu0 0.0
        %3251 = vmatprep.subr.mxu0 0.0
        %3252 = vmatpush2.msra.mxu0 0.0
        %3253 = vmatprep.subr.mxu0 0.0
        %3254 = vmatpush2.msra.mxu0 0.0
        %3255 = vmatprep.subr.mxu0 0.0
        %3256 = vmatpush2.msra.mxu0 0.0
        %3257 = vmatprep.subr.mxu0 0.0
        %3258 = vmatpush2.msra.mxu0 0.0
        %3259 = vmatprep.subr.mxu0 0.0
        %3260 = vmatpush2.msra.mxu0 0.0
        %3261 = vmatprep.subr.mxu0 0.0
        %3262 = vmatpush2.msra.mxu0 0.0
        %3263 = vmatprep.mubr.f32.mxu0 0.0
        %3264 = vmatmul.mubr.f32.gmra.mxu0 %v3152
        %v3265 = vpop.f32.mrf.mxu0
        %v3266 = vadd.f32 0.0, %v3265
        %v3267 = vpop.f32.mrf.mxu0
        %v3268 = vadd.f32 0.0, %v3267
        %3269 = vmatprep.mubr.f32.mxu0 0.0
        %3270 = vmatmul.mubr.f32.gmra.mxu0 %v3155
        %v3271 = vpop.f32.mrf.mxu0
        %v3272 = vadd.f32 0.0, %v3271
        %v3273 = vpop.f32.mrf.mxu0
        %v3274 = vadd.f32 0.0, %v3273
        %3275 = vmatprep.mubr.f32.mxu0 0.0
        %3276 = vmatmul.mubr.f32.gmra.mxu0 %v3158
        %v3277 = vpop.f32.mrf.mxu0
        %v3278 = vadd.f32 0.0, %v3277
        %v3279 = vpop.f32.mrf.mxu0
        %v3280 = vadd.f32 0.0, %v3279
        %3281 = vmatprep.mubr.f32.mxu0 0.0
        %3282 = vmatmul.mubr.f32.gmra.mxu0 %v3161
        %v3283 = vpop.f32.mrf.mxu0
        %v3284 = vadd.f32 0.0, %v3283
        %v3285 = vpop.f32.mrf.mxu0
        %v3286 = vadd.f32 0.0, %v3285
        %3287 = vmatprep.mubr.f32.mxu0 0.0
        %3288 = vmatmul.mubr.f32.gmra.mxu0 %v3164
        %v3289 = vpop.f32.mrf.mxu0
        %v3290 = vadd.f32 0.0, %v3289
        %v3291 = vpop.f32.mrf.mxu0
        %v3292 = vadd.f32 0.0, %v3291
        %3293 = vmatprep.mubr.f32.mxu0 0.0
        %3294 = vmatmul.mubr.f32.gmra.mxu0 %v3167
        %v3295 = vpop.f32.mrf.mxu0
        %v3296 = vadd.f32 0.0, %v3295
        %v3297 = vpop.f32.mrf.mxu0
        %v3298 = vadd.f32 0.0, %v3297
        %3299 = vmatprep.mubr.f32.mxu0 0.0
        %3300 = vmatmul.mubr.f32.gmra.mxu0 %v3170
        %v3301 = vpop.f32.mrf.mxu0
        %v3302 = vadd.f32 0.0, %v3301
        %v3303 = vpop.f32.mrf.mxu0
        %v3304 = vadd.f32 0.0, %v3303
        %3305 = vmatprep.mubr.f32.mxu0 0.0
        %3306 = vmatmul.mubr.f32.gmra.mxu0 %v3173
        %v3307 = vpop.f32.mrf.mxu0
        %v3308 = vadd.f32 0.0, %v3307
        %v3309 = vpop.f32.mrf.mxu0
        %v3310 = vadd.f32 0.0, %v3309
        %3311 = vmatprep.mubr.f32.mxu0 0.0
        %3312 = vmatmul.mubr.f32.gmra.mxu0 %v3176
        %v3313 = vpop.f32.mrf.mxu0
        %v3314 = vadd.f32 0.0, %v3313
        %v3315 = vpop.f32.mrf.mxu0
        %v3316 = vadd.f32 0.0, %v3315
        %3317 = vmatprep.mubr.f32.mxu0 0.0
        %3318 = vmatmul.mubr.f32.gmra.mxu0 %v3179
        %v3319 = vpop.f32.mrf.mxu0
        %v3320 = vadd.f32 0.0, %v3319
        %v3321 = vpop.f32.mrf.mxu0
        %v3322 = vadd.f32 0.0, %v3321
        %3323 = vmatprep.mubr.f32.mxu0 0.0
        %3324 = vmatmul.mubr.f32.gmra.mxu0 %v3182
        %v3325 = vpop.f32.mrf.mxu0
        %v3326 = vadd.f32 0.0, %v3325
        %v3327 = vpop.f32.mrf.mxu0
        %v3328 = vadd.f32 0.0, %v3327
        %3329 = vmatprep.mubr.f32.mxu0 0.0
        %3330 = vmatmul.mubr.f32.gmra.mxu0 %v3185
        %v3331 = vpop.f32.mrf.mxu0
        %v3332 = vadd.f32 0.0, %v3331
        %v3333 = vpop.f32.mrf.mxu0
        %v3334 = vadd.f32 0.0, %v3333
        %3335 = vmatprep.mubr.f32.mxu0 0.0
        %3336 = vmatmul.mubr.f32.gmra.mxu0 %v3188
        %v3337 = vpop.f32.mrf.mxu0
        %v3338 = vadd.f32 0.0, %v3337
        %v3339 = vpop.f32.mrf.mxu0
        %v3340 = vadd.f32 0.0, %v3339
        %3341 = vmatprep.mubr.f32.mxu0 0.0
        %3342 = vmatmul.mubr.f32.gmra.mxu0 %v3191
        %v3343 = vpop.f32.mrf.mxu0
        %v3344 = vadd.f32 0.0, %v3343
        %v3345 = vpop.f32.mrf.mxu0
        %v3346 = vadd.f32 0.0, %v3345
        %3347 = vmatprep.mubr.f32.mxu0 0.0
        %3348 = vmatmul.mubr.f32.gmra.mxu0 %v3194
        %v3349 = vpop.f32.mrf.mxu0
        %v3350 = vadd.f32 0.0, %v3349
        %v3351 = vpop.f32.mrf.mxu0
        %v3352 = vadd.f32 0.0, %v3351
        %3353 = vmatprep.mubr.f32.mxu0 0.0
        %3354 = vmatmul.mubr.f32.gmra.mxu0 %v3197
        %v3355 = vpop.f32.mrf.mxu0
        %v3356 = vadd.f32 0.0, %v3355
        %v3357 = vpop.f32.mrf.mxu0
        %v3358 = vadd.f32 0.0, %v3357
        %3359 = vdwg.mxu0
        %v3360 = vmul.f32 %v3266, 0.17677669
        %v3361 = vmul.f32 %v3268, 0.17677669
        %v3362 = vmul.f32 %v3272, 0.17677669
        %v3363 = vmul.f32 %v3274, 0.17677669
        %v3364 = vmul.f32 %v3278, 0.17677669
        %v3365 = vmul.f32 %v3280, 0.17677669
        %v3366 = vmul.f32 %v3284, 0.17677669
        %v3367 = vmul.f32 %v3286, 0.17677669
        %v3368 = vmul.f32 %v3290, 0.17677669
        %v3369 = vmul.f32 %v3292, 0.17677669
        %v3370 = vmul.f32 %v3296, 0.17677669
        %v3371 = vmul.f32 %v3298, 0.17677669
        %v3372 = vmul.f32 %v3302, 0.17677669
        %v3373 = vmul.f32 %v3304, 0.17677669
        %v3374 = vmul.f32 %v3308, 0.17677669
        %v3375 = vmul.f32 %v3310, 0.17677669
        %v3376 = vmul.f32 %v3314, 0.17677669
        %v3377 = vmul.f32 %v3316, 0.17677669
        %v3378 = vmul.f32 %v3320, 0.17677669
        %v3379 = vmul.f32 %v3322, 0.17677669
        %v3380 = vmul.f32 %v3326, 0.17677669
        %v3381 = vmul.f32 %v3328, 0.17677669
        %v3382 = vmul.f32 %v3332, 0.17677669
        %v3383 = vmul.f32 %v3334, 0.17677669
        %v3384 = vmul.f32 %v3338, 0.17677669
        %v3385 = vmul.f32 %v3340, 0.17677669
        %v3386 = vmul.f32 %v3344, 0.17677669
        %v3387 = vmul.f32 %v3346, 0.17677669
        %v3388 = vmul.f32 %v3350, 0.17677669
        %v3389 = vmul.f32 %v3352, 0.17677669
        %v3390 = vmul.f32 %v3356, 0.17677669
        %v3391 = vmul.f32 %v3358, 0.17677669
        %v3392 = vmax.f32 %v3360, %v3361
        %3393 = vmax.xlane.f32.xlu0 %v3392
        %v3394 = vpop.xlane.xlu0 %3393
        %v3395 = vmax.f32 %v3362, %v3363
        %3396 = vmax.xlane.f32.xlu0 %v3395
        %v3397 = vpop.xlane.xlu0 %3396
        %v3398 = vmax.f32 %v3364, %v3365
        %3399 = vmax.xlane.f32.xlu0 %v3398
        %v3400 = vpop.xlane.xlu0 %3399
        %v3401 = vmax.f32 %v3366, %v3367
        %3402 = vmax.xlane.f32.xlu0 %v3401
        %v3403 = vpop.xlane.xlu0 %3402
        %v3404 = vmax.f32 %v3368, %v3369
        %3405 = vmax.xlane.f32.xlu0 %v3404
        %v3406 = vpop.xlane.xlu0 %3405
        %v3407 = vmax.f32 %v3370, %v3371
        %3408 = vmax.xlane.f32.xlu0 %v3407
        %v3409 = vpop.xlane.xlu0 %3408
        %v3410 = vmax.f32 %v3372, %v3373
        %3411 = vmax.xlane.f32.xlu0 %v3410
        %v3412 = vpop.xlane.xlu0 %3411
        %v3413 = vmax.f32 %v3374, %v3375
        %3414 = vmax.xlane.f32.xlu0 %v3413
        %v3415 = vpop.xlane.xlu0 %3414
        %v3416 = vmax.f32 %v3376, %v3377
        %3417 = vmax.xlane.f32.xlu0 %v3416
        %v3418 = vpop.xlane.xlu0 %3417
        %v3419 = vmax.f32 %v3378, %v3379
        %3420 = vmax.xlane.f32.xlu0 %v3419
        %v3421 = vpop.xlane.xlu0 %3420
        %v3422 = vmax.f32 %v3380, %v3381
        %3423 = vmax.xlane.f32.xlu0 %v3422
        %v3424 = vpop.xlane.xlu0 %3423
        %v3425 = vmax.f32 %v3382, %v3383
        %3426 = vmax.xlane.f32.xlu0 %v3425
        %v3427 = vpop.xlane.xlu0 %3426
        %v3428 = vmax.f32 %v3384, %v3385
        %3429 = vmax.xlane.f32.xlu0 %v3428
        %v3430 = vpop.xlane.xlu0 %3429
        %v3431 = vmax.f32 %v3386, %v3387
        %3432 = vmax.xlane.f32.xlu0 %v3431
        %v3433 = vpop.xlane.xlu0 %3432
        %v3434 = vmax.f32 %v3388, %v3389
        %3435 = vmax.xlane.f32.xlu0 %v3434
        %v3436 = vpop.xlane.xlu0 %3435
        %v3437 = vmax.f32 %v3390, %v3391
        %3438 = vmax.xlane.f32.xlu0 %v3437
        %v3439 = vpop.xlane.xlu0 %3438
        %v3440 = vsub.f32 %v3360, %v3394
        %v3441 = vsub.f32 %v3361, %v3394
        %v3442 = vsub.f32 %v3362, %v3397
        %v3443 = vsub.f32 %v3363, %v3397
        %v3444 = vsub.f32 %v3364, %v3400
        %v3445 = vsub.f32 %v3365, %v3400
        %v3446 = vsub.f32 %v3366, %v3403
        %v3447 = vsub.f32 %v3367, %v3403
        %v3448 = vsub.f32 %v3368, %v3406
        %v3449 = vsub.f32 %v3369, %v3406
        %v3450 = vsub.f32 %v3370, %v3409
        %v3451 = vsub.f32 %v3371, %v3409
        %v3452 = vsub.f32 %v3372, %v3412
        %v3453 = vsub.f32 %v3373, %v3412
        %v3454 = vsub.f32 %v3374, %v3415
        %v3455 = vsub.f32 %v3375, %v3415
        %v3456 = vsub.f32 %v3376, %v3418
        %v3457 = vsub.f32 %v3377, %v3418
        %v3458 = vsub.f32 %v3378, %v3421
        %v3459 = vsub.f32 %v3379, %v3421
        %v3460 = vsub.f32 %v3380, %v3424
        %v3461 = vsub.f32 %v3381, %v3424
        %v3462 = vsub.f32 %v3382, %v3427
        %v3463 = vsub.f32 %v3383, %v3427
        %v3464 = vsub.f32 %v3384, %v3430
        %v3465 = vsub.f32 %v3385, %v3430
        %v3466 = vsub.f32 %v3386, %v3433
        %v3467 = vsub.f32 %v3387, %v3433
        %v3468 = vsub.f32 %v3388, %v3436
        %v3469 = vsub.f32 %v3389, %v3436
        %v3470 = vsub.f32 %v3390, %v3439
        %v3471 = vsub.f32 %v3391, %v3439
        %v3472 = vmul.f32 %v3440, 1.442695
        %v3473 = vpow.pop %v3472
        %v3474 = vmul.f32 %v3441, 1.442695
        %v3475 = vpow.pop %v3474
        %v3476 = vmul.f32 %v3442, 1.442695
        %v3477 = vpow.pop %v3476
        %v3478 = vmul.f32 %v3443, 1.442695
        %v3479 = vpow.pop %v3478
        %v3480 = vmul.f32 %v3444, 1.442695
        %v3481 = vpow.pop %v3480
        %v3482 = vmul.f32 %v3445, 1.442695
        %v3483 = vpow.pop %v3482
        %v3484 = vmul.f32 %v3446, 1.442695
        %v3485 = vpow.pop %v3484
        %v3486 = vmul.f32 %v3447, 1.442695
        %v3487 = vpow.pop %v3486
        %v3488 = vmul.f32 %v3448, 1.442695
        %v3489 = vpow.pop %v3488
        %v3490 = vmul.f32 %v3449, 1.442695
        %v3491 = vpow.pop %v3490
        %v3492 = vmul.f32 %v3450, 1.442695
        %v3493 = vpow.pop %v3492
        %v3494 = vmul.f32 %v3451, 1.442695
        %v3495 = vpow.pop %v3494
        %v3496 = vmul.f32 %v3452, 1.442695
        %v3497 = vpow.pop %v3496
        %v3498 = vmul.f32 %v3453, 1.442695
        %v3499 = vpow.pop %v3498
        %v3500 = vmul.f32 %v3454, 1.442695
        %v3501 = vpow.pop %v3500
        %v3502 = vmul.f32 %v3455, 1.442695
        %v3503 = vpow.pop %v3502
        %v3504 = vmul.f32 %v3456, 1.442695
        %v3505 = vpow.pop %v3504
        %v3506 = vmul.f32 %v3457, 1.442695
        %v3507 = vpow.pop %v3506
        %v3508 = vmul.f32 %v3458, 1.442695
        %v3509 = vpow.pop %v3508
        %v3510 = vmul.f32 %v3459, 1.442695
        %v3511 = vpow.pop %v3510
        %v3512 = vmul.f32 %v3460, 1.442695
        %v3513 = vpow.pop %v3512
        %v3514 = vmul.f32 %v3461, 1.442695
        %v3515 = vpow.pop %v3514
        %v3516 = vmul.f32 %v3462, 1.442695
        %v3517 = vpow.pop %v3516
        %v3518 = vmul.f32 %v3463, 1.442695
        %v3519 = vpow.pop %v3518
        %v3520 = vmul.f32 %v3464, 1.442695
        %v3521 = vpow.pop %v3520
        %v3522 = vmul.f32 %v3465, 1.442695
        %v3523 = vpow.pop %v3522
        %v3524 = vmul.f32 %v3466, 1.442695
        %v3525 = vpow.pop %v3524
        %v3526 = vmul.f32 %v3467, 1.442695
        %v3527 = vpow.pop %v3526
        %v3528 = vmul.f32 %v3468, 1.442695
        %v3529 = vpow.pop %v3528
        %v3530 = vmul.f32 %v3469, 1.442695
        %v3531 = vpow.pop %v3530
        %v3532 = vmul.f32 %v3470, 1.442695
        %v3533 = vpow.pop %v3532
        %v3534 = vmul.f32 %v3471, 1.442695
        %v3535 = vpow.pop %v3534
        %3536 = vmatprep.subr.mxu0 %v3535
        %3537 = vmatpush1.xpose.msra.mxu0 %v3533
        %3538 = vmatprep.subr.mxu0 %v3531
        %3539 = vmatpush1.xpose.msra.mxu0 %v3529
        %3540 = vmatprep.subr.mxu0 %v3527
        %3541 = vmatpush1.xpose.msra.mxu0 %v3525
        %3542 = vmatprep.subr.mxu0 %v3523
        %3543 = vmatpush1.xpose.msra.mxu0 %v3521
        %3544 = vmatprep.subr.mxu0 %v3519
        %3545 = vmatpush1.xpose.msra.mxu0 %v3517
        %3546 = vmatprep.subr.mxu0 %v3515
        %3547 = vmatpush1.xpose.msra.mxu0 %v3513
        %3548 = vmatprep.subr.mxu0 %v3511
        %3549 = vmatpush1.xpose.msra.mxu0 %v3509
        %3550 = vmatprep.subr.mxu0 %v3507
        %3551 = vmatpush1.xpose.msra.mxu0 %v3505
        %3552 = vmatprep.subr.mxu0 %v3503
        %3553 = vmatpush1.xpose.msra.mxu0 %v3501
        %3554 = vmatprep.subr.mxu0 %v3499
        %3555 = vmatpush1.xpose.msra.mxu0 %v3497
        %3556 = vmatprep.subr.mxu0 %v3495
        %3557 = vmatpush1.xpose.msra.mxu0 %v3493
        %3558 = vmatprep.subr.mxu0 %v3491
        %3559 = vmatpush1.xpose.msra.mxu0 %v3489
        %3560 = vmatprep.subr.mxu0 %v3487
        %3561 = vmatpush1.xpose.msra.mxu0 %v3485
        %3562 = vmatprep.subr.mxu0 %v3483
        %3563 = vmatpush1.xpose.msra.mxu0 %v3481
        %3564 = vmatprep.subr.mxu0 %v3479
        %3565 = vmatpush1.xpose.msra.mxu0 %v3477
        %3566 = vmatprep.subr.mxu0 %v3475
        %3567 = vmatpush1.xpose.msra.mxu0 %v3473
        %3568 = vmatprep.subr.mxu0 0.0
        %3569 = vmatpush2.xpose.msra.mxu0 0.0
        %3570 = vmatprep.subr.mxu0 0.0
        %3571 = vmatpush2.xpose.msra.mxu0 0.0
        %3572 = vmatprep.subr.mxu0 0.0
        %3573 = vmatpush2.xpose.msra.mxu0 0.0
        %3574 = vmatprep.subr.mxu0 0.0
        %3575 = vmatpush2.xpose.msra.mxu0 0.0
        %3576 = vmatprep.subr.mxu0 0.0
        %3577 = vmatpush2.xpose.msra.mxu0 0.0
        %3578 = vmatprep.subr.mxu0 0.0
        %3579 = vmatpush2.xpose.msra.mxu0 0.0
        %3580 = vmatprep.subr.mxu0 0.0
        %3581 = vmatpush2.xpose.msra.mxu0 0.0
        %3582 = vmatprep.subr.mxu0 0.0
        %3583 = vmatpush2.xpose.msra.mxu0 0.0
        %3584 = vmatprep.subr.mxu0 0.0
        %3585 = vmatpush2.xpose.msra.mxu0 0.0
        %3586 = vmatprep.subr.mxu0 0.0
        %3587 = vmatpush2.xpose.msra.mxu0 0.0
        %3588 = vmatprep.subr.mxu0 0.0
        %3589 = vmatpush2.xpose.msra.mxu0 0.0
        %3590 = vmatprep.subr.mxu0 0.0
        %3591 = vmatpush2.xpose.msra.mxu0 0.0
        %3592 = vmatprep.subr.mxu0 0.0
        %3593 = vmatpush2.xpose.msra.mxu0 0.0
        %3594 = vmatprep.subr.mxu0 0.0
        %3595 = vmatpush2.xpose.msra.mxu0 0.0
        %3596 = vmatprep.subr.mxu0 0.0
        %3597 = vmatpush2.xpose.msra.mxu0 0.0
        %3598 = vmatprep.subr.mxu0 0.0
        %3599 = vmatpush2.xpose.msra.mxu0 0.0
        %3600 = vmatprep.mubr.f32.mxu0 %v3136
        %3601 = vmatmul.mubr.f32.gmra.mxu0 %v3135
        %v3602 = vpop.f32.mrf.mxu0
        %v3603 = vadd.f32 0.0, %v3602
        %v3604 = vpop.f32.mrf.mxu0
        %3605 = vmatprep.mubr.f32.mxu0 %v3138
        %3606 = vmatmul.mubr.f32.gmra.mxu0 %v3137
        %v3607 = vpop.f32.mrf.mxu0
        %v3608 = vadd.f32 0.0, %v3607
        %v3609 = vpop.f32.mrf.mxu0
        %3610 = vmatprep.mubr.f32.mxu0 %v3140
        %3611 = vmatmul.mubr.f32.gmra.mxu0 %v3139
        %v3612 = vpop.f32.mrf.mxu0
        %v3613 = vadd.f32 0.0, %v3612
        %v3614 = vpop.f32.mrf.mxu0
        %3615 = vmatprep.mubr.f32.mxu0 %v3142
        %3616 = vmatmul.mubr.f32.gmra.mxu0 %v3141
        %v3617 = vpop.f32.mrf.mxu0
        %v3618 = vadd.f32 0.0, %v3617
        %v3619 = vpop.f32.mrf.mxu0
        %3620 = vmatprep.mubr.f32.mxu0 %v3144
        %3621 = vmatmul.mubr.f32.gmra.mxu0 %v3143
        %v3622 = vpop.f32.mrf.mxu0
        %v3623 = vadd.f32 0.0, %v3622
        %v3624 = vpop.f32.mrf.mxu0
        %3625 = vmatprep.mubr.f32.mxu0 %v3146
        %3626 = vmatmul.mubr.f32.gmra.mxu0 %v3145
        %v3627 = vpop.f32.mrf.mxu0
        %v3628 = vadd.f32 0.0, %v3627
        %v3629 = vpop.f32.mrf.mxu0
        %3630 = vmatprep.mubr.f32.mxu0 %v3148
        %3631 = vmatmul.mubr.f32.gmra.mxu0 %v3147
        %v3632 = vpop.f32.mrf.mxu0
        %v3633 = vadd.f32 0.0, %v3632
        %v3634 = vpop.f32.mrf.mxu0
        %3635 = vmatprep.mubr.f32.mxu0 %v3150
        %3636 = vmatmul.mubr.f32.gmra.mxu0 %v3149
        %v3637 = vpop.f32.mrf.mxu0
        %v3638 = vadd.f32 0.0, %v3637
        %v3639 = vpop.f32.mrf.mxu0
        %3640 = vdwg.mxu0
        %3641 = vmatprep.subr.mxu0 %v3535
        %3642 = vmatpush1.xpose.msra.mxu0 %v3533
        %3643 = vmatprep.subr.mxu0 %v3531
        %3644 = vmatpush1.xpose.msra.mxu0 %v3529
        %3645 = vmatprep.subr.mxu0 %v3527
        %3646 = vmatpush1.xpose.msra.mxu0 %v3525
        %3647 = vmatprep.subr.mxu0 %v3523
        %3648 = vmatpush1.xpose.msra.mxu0 %v3521
        %3649 = vmatprep.subr.mxu0 %v3519
        %3650 = vmatpush1.xpose.msra.mxu0 %v3517
        %3651 = vmatprep.subr.mxu0 %v3515
        %3652 = vmatpush1.xpose.msra.mxu0 %v3513
        %3653 = vmatprep.subr.mxu0 %v3511
        %3654 = vmatpush1.xpose.msra.mxu0 %v3509
        %3655 = vmatprep.subr.mxu0 %v3507
        %3656 = vmatpush1.xpose.msra.mxu0 %v3505
        %3657 = vmatprep.subr.mxu0 %v3503
        %3658 = vmatpush1.xpose.msra.mxu0 %v3501
        %3659 = vmatprep.subr.mxu0 %v3499
        %3660 = vmatpush1.xpose.msra.mxu0 %v3497
        %3661 = vmatprep.subr.mxu0 %v3495
        %3662 = vmatpush1.xpose.msra.mxu0 %v3493
        %3663 = vmatprep.subr.mxu0 %v3491
        %3664 = vmatpush1.xpose.msra.mxu0 %v3489
        %3665 = vmatprep.subr.mxu0 %v3487
        %3666 = vmatpush1.xpose.msra.mxu0 %v3485
        %3667 = vmatprep.subr.mxu0 %v3483
        %3668 = vmatpush1.xpose.msra.mxu0 %v3481
        %3669 = vmatprep.subr.mxu0 %v3479
        %3670 = vmatpush1.xpose.msra.mxu0 %v3477
        %3671 = vmatprep.subr.mxu0 %v3475
        %3672 = vmatpush1.xpose.msra.mxu0 %v3473
        %3673 = vmatprep.subr.mxu0 0.0
        %3674 = vmatpush2.xpose.msra.mxu0 0.0
        %3675 = vmatprep.subr.mxu0 0.0
        %3676 = vmatpush2.xpose.msra.mxu0 0.0
        %3677 = vmatprep.subr.mxu0 0.0
        %3678 = vmatpush2.xpose.msra.mxu0 0.0
        %3679 = vmatprep.subr.mxu0 0.0
        %3680 = vmatpush2.xpose.msra.mxu0 0.0
        %3681 = vmatprep.subr.mxu0 0.0
        %3682 = vmatpush2.xpose.msra.mxu0 0.0
        %3683 = vmatprep.subr.mxu0 0.0
        %3684 = vmatpush2.xpose.msra.mxu0 0.0
        %3685 = vmatprep.subr.mxu0 0.0
        %3686 = vmatpush2.xpose.msra.mxu0 0.0
        %3687 = vmatprep.subr.mxu0 0.0
        %3688 = vmatpush2.xpose.msra.mxu0 0.0
        %3689 = vmatprep.subr.mxu0 0.0
        %3690 = vmatpush2.xpose.msra.mxu0 0.0
        %3691 = vmatprep.subr.mxu0 0.0
        %3692 = vmatpush2.xpose.msra.mxu0 0.0
        %3693 = vmatprep.subr.mxu0 0.0
        %3694 = vmatpush2.xpose.msra.mxu0 0.0
        %3695 = vmatprep.subr.mxu0 0.0
        %3696 = vmatpush2.xpose.msra.mxu0 0.0
        %3697 = vmatprep.subr.mxu0 0.0
        %3698 = vmatpush2.xpose.msra.mxu0 0.0
        %3699 = vmatprep.subr.mxu0 0.0
        %3700 = vmatpush2.xpose.msra.mxu0 0.0
        %3701 = vmatprep.subr.mxu0 0.0
        %3702 = vmatpush2.xpose.msra.mxu0 0.0
        %3703 = vmatprep.subr.mxu0 0.0
        %3704 = vmatpush2.xpose.msra.mxu0 0.0
        %3705 = vmatprep.mubr.f32.mxu0 1.0
        %3706 = vmatmul.mubr.f32.gmra.mxu0 1.0
        %v3707 = vpop.f32.mrf.mxu0
        %v3708 = vadd.f32 0.0, %v3707
        %v3709 = vpop.f32.mrf.mxu0
        %3710 = vdwg.mxu0
        %v3711 = vrcp.pop %v3708
        %v3712 = vlaneseq
        %v3713 = vshrl.u32 %v3712, 7
        %v3714 = vsub.s32 0, %v3713
        %v3715 = vrot.slane %v3711, %v3714
        %v3716 = vmul.f32 %v3603, %v3715
        %v3717 = vmul.f32 %v3608, %v3715
        %v3718 = vmul.f32 %v3613, %v3715
        %v3719 = vmul.f32 %v3618, %v3715
        %v3720 = vmul.f32 %v3623, %v3715
        %v3721 = vmul.f32 %v3628, %v3715
        %v3722 = vmul.f32 %v3633, %v3715
        %v3723 = vmul.f32 %v3638, %v3715
        %s3724 = scalar_lea.vmem [#allocation5], %s3098
        %3725 = vst [vmem:[%s3724] sm:$0xff] %v3716
        %3726 = vst [vmem:[%s3724 + $0x8] sm:$0xff] %v3717
        %3727 = vst [vmem:[%s3724 + $0x10] sm:$0xff] %v3718
        %3728 = vst [vmem:[%s3724 + $0x18] sm:$0xff] %v3719
        %3729 = vst [vmem:[%s3724 + $0x20] sm:$0xff] %v3720
        %3730 = vst [vmem:[%s3724 + $0x28] sm:$0xff] %v3721
        %3731 = vst [vmem:[%s3724 + $0x30] sm:$0xff] %v3722
        %3732 = vst [vmem:[%s3724 + $0x38] sm:$0xff] %v3723
      $region81: #{simple_transformer_block.1} parent=75 // loop_footer
        %s3096 = sadd.s32 1, %s3092
      $region82: #{simple_transformer_block.1} parent=75 // loop_footer_branch
        %3091 = sbr.rel target = $region78
      $region83: #{simple_transformer_block.1} parent=75 // loop_exit
        _
      %v3733 = vld [vmem:[#allocation5] sm:$0xff]
      %v3734 = vld [vmem:[#allocation5 + $0x8] sm:$0xff]
      %v3735 = vld [vmem:[#allocation5 + $0x10] sm:$0xff]
      %v3736 = vld [vmem:[#allocation5 + $0x18] sm:$0xff]
      %v3737 = vld [vmem:[#allocation5 + $0x20] sm:$0xff]
      %v3738 = vld [vmem:[#allocation5 + $0x28] sm:$0xff]
      %v3739 = vld [vmem:[#allocation5 + $0x30] sm:$0xff]
      %v3740 = vld [vmem:[#allocation5 + $0x38] sm:$0xff]
      %v3741 = vld [vmem:[#allocation5 + $0x40] sm:$0xff]
      %v3742 = vld [vmem:[#allocation5 + $0x48] sm:$0xff]
      %v3743 = vld [vmem:[#allocation5 + $0x50] sm:$0xff]
      %v3744 = vld [vmem:[#allocation5 + $0x58] sm:$0xff]
      %v3745 = vld [vmem:[#allocation5 + $0x60] sm:$0xff]
      %v3746 = vld [vmem:[#allocation5 + $0x68] sm:$0xff]
      %v3747 = vld [vmem:[#allocation5 + $0x70] sm:$0xff]
      %v3748 = vld [vmem:[#allocation5 + $0x78] sm:$0xff]
      %v3749 = vld [vmem:[#allocation5 + $0x80] sm:$0xff]
      %v3750 = vld [vmem:[#allocation5 + $0x88] sm:$0xff]
      %v3751 = vld [vmem:[#allocation5 + $0x90] sm:$0xff]
      %v3752 = vld [vmem:[#allocation5 + $0x98] sm:$0xff]
      %v3753 = vld [vmem:[#allocation5 + $0xa0] sm:$0xff]
      %v3754 = vld [vmem:[#allocation5 + $0xa8] sm:$0xff]
      %v3755 = vld [vmem:[#allocation5 + $0xb0] sm:$0xff]
      %v3756 = vld [vmem:[#allocation5 + $0xb8] sm:$0xff]
      %v3757 = vld [vmem:[#allocation5 + $0xc0] sm:$0xff]
      %v3758 = vld [vmem:[#allocation5 + $0xc8] sm:$0xff]
      %v3759 = vld [vmem:[#allocation5 + $0xd0] sm:$0xff]
      %v3760 = vld [vmem:[#allocation5 + $0xd8] sm:$0xff]
      %v3761 = vld [vmem:[#allocation5 + $0xe0] sm:$0xff]
      %v3762 = vld [vmem:[#allocation5 + $0xe8] sm:$0xff]
      %v3763 = vld [vmem:[#allocation5 + $0xf0] sm:$0xff]
      %v3764 = vld [vmem:[#allocation5 + $0xf8] sm:$0xff]
      %v3765 = vld [vmem:[#allocation5 + $0x100] sm:$0xff]
      %v3766 = vld [vmem:[#allocation5 + $0x108] sm:$0xff]
      %v3767 = vld [vmem:[#allocation5 + $0x110] sm:$0xff]
      %v3768 = vld [vmem:[#allocation5 + $0x118] sm:$0xff]
      %v3769 = vld [vmem:[#allocation5 + $0x120] sm:$0xff]
      %v3770 = vld [vmem:[#allocation5 + $0x128] sm:$0xff]
      %v3771 = vld [vmem:[#allocation5 + $0x130] sm:$0xff]
      %v3772 = vld [vmem:[#allocation5 + $0x138] sm:$0xff]
      %v3773 = vld [vmem:[#allocation5 + $0x140] sm:$0xff]
      %v3774 = vld [vmem:[#allocation5 + $0x148] sm:$0xff]
      %v3775 = vld [vmem:[#allocation5 + $0x150] sm:$0xff]
      %v3776 = vld [vmem:[#allocation5 + $0x158] sm:$0xff]
      %v3777 = vld [vmem:[#allocation5 + $0x160] sm:$0xff]
      %v3778 = vld [vmem:[#allocation5 + $0x168] sm:$0xff]
      %v3779 = vld [vmem:[#allocation5 + $0x170] sm:$0xff]
      %v3780 = vld [vmem:[#allocation5 + $0x178] sm:$0xff]
      %v3781 = vld [vmem:[#allocation5 + $0x180] sm:$0xff]
      %v3782 = vld [vmem:[#allocation5 + $0x188] sm:$0xff]
      %v3783 = vld [vmem:[#allocation5 + $0x190] sm:$0xff]
      %v3784 = vld [vmem:[#allocation5 + $0x198] sm:$0xff]
      %v3785 = vld [vmem:[#allocation5 + $0x1a0] sm:$0xff]
      %v3786 = vld [vmem:[#allocation5 + $0x1a8] sm:$0xff]
      %v3787 = vld [vmem:[#allocation5 + $0x1b0] sm:$0xff]
      %v3788 = vld [vmem:[#allocation5 + $0x1b8] sm:$0xff]
      %v3789 = vld [vmem:[#allocation5 + $0x1c0] sm:$0xff]
      %v3790 = vld [vmem:[#allocation5 + $0x1c8] sm:$0xff]
      %v3791 = vld [vmem:[#allocation5 + $0x1d0] sm:$0xff]
      %v3792 = vld [vmem:[#allocation5 + $0x1d8] sm:$0xff]
      %v3793 = vld [vmem:[#allocation5 + $0x1e0] sm:$0xff]
      %v3794 = vld [vmem:[#allocation5 + $0x1e8] sm:$0xff]
      %v3795 = vld [vmem:[#allocation5 + $0x1f0] sm:$0xff]
      %v3796 = vld [vmem:[#allocation5 + $0x1f8] sm:$0xff]
      %v3797 = vld [vmem:[%s8] sm:$0xff]
      %v3798 = vld [vmem:[%s8 + $0x8] sm:$0xff]
      %v3799 = vld [vmem:[%s8 + $0x10] sm:$0xff]
      %v3800 = vld [vmem:[%s8 + $0x18] sm:$0xff]
      %v3801 = vld [vmem:[%s9] sm:$0xff]
      %3803 = vset.pattern.permute.xlu0 0
      %3804 = vperm.xlu0 %3803, %v3801
      %v3805 = vpop.permute.xlu0 %3804
      %3807 = vmatprep.subr.mxu0 0.0
      %3808 = vmatpush1.msra.mxu0 %v3748
      %3809 = vmatprep.subr.mxu0 0.0
      %3810 = vmatpush1.msra.mxu0 %v3747
      %3811 = vmatprep.subr.mxu0 0.0
      %3812 = vmatpush1.msra.mxu0 %v3746
      %3813 = vmatprep.subr.mxu0 0.0
      %3814 = vmatpush1.msra.mxu0 %v3745
      %3815 = vmatprep.subr.mxu0 0.0
      %3816 = vmatpush1.msra.mxu0 %v3744
      %3817 = vmatprep.subr.mxu0 0.0
      %3818 = vmatpush1.msra.mxu0 %v3743
      %3819 = vmatprep.subr.mxu0 0.0
      %3820 = vmatpush1.msra.mxu0 %v3742
      %3821 = vmatprep.subr.mxu0 0.0
      %3822 = vmatpush1.msra.mxu0 %v3741
      %3823 = vmatprep.subr.mxu0 0.0
      %3824 = vmatpush1.msra.mxu0 %v3740
      %3825 = vmatprep.subr.mxu0 0.0
      %3826 = vmatpush1.msra.mxu0 %v3739
      %3827 = vmatprep.subr.mxu0 0.0
      %3828 = vmatpush1.msra.mxu0 %v3738
      %3829 = vmatprep.subr.mxu0 0.0
      %3830 = vmatpush1.msra.mxu0 %v3737
      %3831 = vmatprep.subr.mxu0 0.0
      %3832 = vmatpush1.msra.mxu0 %v3736
      %3833 = vmatprep.subr.mxu0 0.0
      %3834 = vmatpush1.msra.mxu0 %v3735
      %3835 = vmatprep.subr.mxu0 0.0
      %3836 = vmatpush1.msra.mxu0 %v3734
      %3837 = vmatprep.subr.mxu0 0.0
      %3838 = vmatpush1.msra.mxu0 %v3733
      %3839 = vmatprep.subr.mxu0 0.0
      %3840 = vmatpush2.msra.mxu0 %v3764
      %3841 = vmatprep.subr.mxu0 0.0
      %3842 = vmatpush2.msra.mxu0 %v3763
      %3843 = vmatprep.subr.mxu0 0.0
      %3844 = vmatpush2.msra.mxu0 %v3762
      %3845 = vmatprep.subr.mxu0 0.0
      %3846 = vmatpush2.msra.mxu0 %v3761
      %3847 = vmatprep.subr.mxu0 0.0
      %3848 = vmatpush2.msra.mxu0 %v3760
      %3849 = vmatprep.subr.mxu0 0.0
      %3850 = vmatpush2.msra.mxu0 %v3759
      %3851 = vmatprep.subr.mxu0 0.0
      %3852 = vmatpush2.msra.mxu0 %v3758
      %3853 = vmatprep.subr.mxu0 0.0
      %3854 = vmatpush2.msra.mxu0 %v3757
      %3855 = vmatprep.subr.mxu0 0.0
      %3856 = vmatpush2.msra.mxu0 %v3756
      %3857 = vmatprep.subr.mxu0 0.0
      %3858 = vmatpush2.msra.mxu0 %v3755
      %3859 = vmatprep.subr.mxu0 0.0
      %3860 = vmatpush2.msra.mxu0 %v3754
      %3861 = vmatprep.subr.mxu0 0.0
      %3862 = vmatpush2.msra.mxu0 %v3753
      %3863 = vmatprep.subr.mxu0 0.0
      %3864 = vmatpush2.msra.mxu0 %v3752
      %3865 = vmatprep.subr.mxu0 0.0
      %3866 = vmatpush2.msra.mxu0 %v3751
      %3867 = vmatprep.subr.mxu0 0.0
      %3868 = vmatpush2.msra.mxu0 %v3750
      %3869 = vmatprep.subr.mxu0 0.0
      %3870 = vmatpush2.msra.mxu0 %v3749
      %3871 = vmatprep.mubr.f32.mxu0 %v3798
      %3872 = vmatmul.mubr.f32.gmra.mxu0 %v3797
      %v3873 = vpop.f32.mrf.mxu0
      %v3874 = vadd.f32 %v3805, %v3873
      %v3875 = vpop.f32.mrf.mxu0
      %3876 = vdwg.mxu0
      %3877 = vmatprep.subr.mxu0 0.0
      %3878 = vmatpush1.msra.mxu0 %v3780
      %3879 = vmatprep.subr.mxu0 0.0
      %3880 = vmatpush1.msra.mxu0 %v3779
      %3881 = vmatprep.subr.mxu0 0.0
      %3882 = vmatpush1.msra.mxu0 %v3778
      %3883 = vmatprep.subr.mxu0 0.0
      %3884 = vmatpush1.msra.mxu0 %v3777
      %3885 = vmatprep.subr.mxu0 0.0
      %3886 = vmatpush1.msra.mxu0 %v3776
      %3887 = vmatprep.subr.mxu0 0.0
      %3888 = vmatpush1.msra.mxu0 %v3775
      %3889 = vmatprep.subr.mxu0 0.0
      %3890 = vmatpush1.msra.mxu0 %v3774
      %3891 = vmatprep.subr.mxu0 0.0
      %3892 = vmatpush1.msra.mxu0 %v3773
      %3893 = vmatprep.subr.mxu0 0.0
      %3894 = vmatpush1.msra.mxu0 %v3772
      %3895 = vmatprep.subr.mxu0 0.0
      %3896 = vmatpush1.msra.mxu0 %v3771
      %3897 = vmatprep.subr.mxu0 0.0
      %3898 = vmatpush1.msra.mxu0 %v3770
      %3899 = vmatprep.subr.mxu0 0.0
      %3900 = vmatpush1.msra.mxu0 %v3769
      %3901 = vmatprep.subr.mxu0 0.0
      %3902 = vmatpush1.msra.mxu0 %v3768
      %3903 = vmatprep.subr.mxu0 0.0
      %3904 = vmatpush1.msra.mxu0 %v3767
      %3905 = vmatprep.subr.mxu0 0.0
      %3906 = vmatpush1.msra.mxu0 %v3766
      %3907 = vmatprep.subr.mxu0 0.0
      %3908 = vmatpush1.msra.mxu0 %v3765
      %3909 = vmatprep.subr.mxu0 0.0
      %3910 = vmatpush2.msra.mxu0 %v3796
      %3911 = vmatprep.subr.mxu0 0.0
      %3912 = vmatpush2.msra.mxu0 %v3795
      %3913 = vmatprep.subr.mxu0 0.0
      %3914 = vmatpush2.msra.mxu0 %v3794
      %3915 = vmatprep.subr.mxu0 0.0
      %3916 = vmatpush2.msra.mxu0 %v3793
      %3917 = vmatprep.subr.mxu0 0.0
      %3918 = vmatpush2.msra.mxu0 %v3792
      %3919 = vmatprep.subr.mxu0 0.0
      %3920 = vmatpush2.msra.mxu0 %v3791
      %3921 = vmatprep.subr.mxu0 0.0
      %3922 = vmatpush2.msra.mxu0 %v3790
      %3923 = vmatprep.subr.mxu0 0.0
      %3924 = vmatpush2.msra.mxu0 %v3789
      %3925 = vmatprep.subr.mxu0 0.0
      %3926 = vmatpush2.msra.mxu0 %v3788
      %3927 = vmatprep.subr.mxu0 0.0
      %3928 = vmatpush2.msra.mxu0 %v3787
      %3929 = vmatprep.subr.mxu0 0.0
      %3930 = vmatpush2.msra.mxu0 %v3786
      %3931 = vmatprep.subr.mxu0 0.0
      %3932 = vmatpush2.msra.mxu0 %v3785
      %3933 = vmatprep.subr.mxu0 0.0
      %3934 = vmatpush2.msra.mxu0 %v3784
      %3935 = vmatprep.subr.mxu0 0.0
      %3936 = vmatpush2.msra.mxu0 %v3783
      %3937 = vmatprep.subr.mxu0 0.0
      %3938 = vmatpush2.msra.mxu0 %v3782
      %3939 = vmatprep.subr.mxu0 0.0
      %3940 = vmatpush2.msra.mxu0 %v3781
      %3941 = vmatprep.mubr.f32.mxu0 %v3800
      %3942 = vmatmul.mubr.f32.gmra.mxu0 %v3799
      %v3943 = vpop.f32.mrf.mxu0
      %v3944 = vadd.f32 %v3874, %v3943
      %v3945 = vpop.f32.mrf.mxu0
      %3946 = vdwg.mxu0
      %v3947 = vld [vmem:[%s10] sm:$0xff]
      %v3948 = vld [vmem:[%s10 + $0x8] sm:$0xff]
      %v3949 = vld [vmem:[%s10 + $0x10] sm:$0xff]
      %v3950 = vld [vmem:[%s10 + $0x18] sm:$0xff]
      %v3951 = vld [vmem:[%s11] sm:$0xff]
      %v3952 = vld [vmem:[%s11 + $0x8] sm:$0xff]
      %v3953 = vld [vmem:[%s11 + $0x10] sm:$0xff]
      %v3954 = vld [vmem:[%s11 + $0x18] sm:$0xff]
      %3956 = vset.pattern.permute.xlu0 0
      %3957 = vperm.xlu0 %3956, %v3951
      %v3958 = vpop.permute.xlu0 %3957
      %3961 = vset.pattern.permute.xlu0 0
      %3962 = vperm.xlu0 %3961, %v3952
      %v3963 = vpop.permute.xlu0 %3962
      %3966 = vset.pattern.permute.xlu0 0
      %3967 = vperm.xlu0 %3966, %v3953
      %v3968 = vpop.permute.xlu0 %3967
      %3971 = vset.pattern.permute.xlu0 0
      %3972 = vperm.xlu0 %3971, %v3954
      %v3973 = vpop.permute.xlu0 %3972
      %vm3975 = vcmask 64512
      %v3977 = vsel %vm3975, %v3947, 0
      %v3980 = vsel %vm3975, %v3948, 0
      %v3983 = vsel %vm3975, %v3949, 0
      %v3986 = vsel %vm3975, %v3950, 0
      %3988 = vmatprep.subr.mxu0 0.0
      %3989 = vmatpush1.msra.mxu0 0.0
      %3990 = vmatprep.subr.mxu0 0.0
      %3991 = vmatpush1.msra.mxu0 0.0
      %3992 = vmatprep.subr.mxu0 0.0
      %3993 = vmatpush1.msra.mxu0 0.0
      %3994 = vmatprep.subr.mxu0 0.0
      %3995 = vmatpush1.msra.mxu0 0.0
      %3996 = vmatprep.subr.mxu0 0.0
      %3997 = vmatpush1.msra.mxu0 0.0
      %3998 = vmatprep.subr.mxu0 0.0
      %3999 = vmatpush1.msra.mxu0 0.0
      %4000 = vmatprep.subr.mxu0 0.0
      %4001 = vmatpush1.msra.mxu0 0.0
      %4002 = vmatprep.subr.mxu0 0.0
      %4003 = vmatpush1.msra.mxu0 0.0
      %4004 = vmatprep.subr.mxu0 0.0
      %4005 = vmatpush1.msra.mxu0 0.0
      %4006 = vmatprep.subr.mxu0 0.0
      %4007 = vmatpush1.msra.mxu0 0.0
      %4008 = vmatprep.subr.mxu0 0.0
      %4009 = vmatpush1.msra.mxu0 0.0
      %4010 = vmatprep.subr.mxu0 0.0
      %4011 = vmatpush1.msra.mxu0 0.0
      %4012 = vmatprep.subr.mxu0 0.0
      %4013 = vmatpush1.msra.mxu0 0.0
      %4014 = vmatprep.subr.mxu0 0.0
      %4015 = vmatpush1.msra.mxu0 0.0
      %4016 = vmatprep.subr.mxu0 0.0
      %4017 = vmatpush1.msra.mxu0 0.0
      %4018 = vmatprep.subr.mxu0 0.0
      %4019 = vmatpush1.msra.mxu0 %v3944
      %4020 = vmatprep.subr.mxu0 0.0
      %4021 = vmatpush2.msra.mxu0 0.0
      %4022 = vmatprep.subr.mxu0 0.0
      %4023 = vmatpush2.msra.mxu0 0.0
      %4024 = vmatprep.subr.mxu0 0.0
      %4025 = vmatpush2.msra.mxu0 0.0
      %4026 = vmatprep.subr.mxu0 0.0
      %4027 = vmatpush2.msra.mxu0 0.0
      %4028 = vmatprep.subr.mxu0 0.0
      %4029 = vmatpush2.msra.mxu0 0.0
      %4030 = vmatprep.subr.mxu0 0.0
      %4031 = vmatpush2.msra.mxu0 0.0
      %4032 = vmatprep.subr.mxu0 0.0
      %4033 = vmatpush2.msra.mxu0 0.0
      %4034 = vmatprep.subr.mxu0 0.0
      %4035 = vmatpush2.msra.mxu0 0.0
      %4036 = vmatprep.subr.mxu0 0.0
      %4037 = vmatpush2.msra.mxu0 0.0
      %4038 = vmatprep.subr.mxu0 0.0
      %4039 = vmatpush2.msra.mxu0 0.0
      %4040 = vmatprep.subr.mxu0 0.0
      %4041 = vmatpush2.msra.mxu0 0.0
      %4042 = vmatprep.subr.mxu0 0.0
      %4043 = vmatpush2.msra.mxu0 0.0
      %4044 = vmatprep.subr.mxu0 0.0
      %4045 = vmatpush2.msra.mxu0 0.0
      %4046 = vmatprep.subr.mxu0 0.0
      %4047 = vmatpush2.msra.mxu0 0.0
      %4048 = vmatprep.subr.mxu0 0.0
      %4049 = vmatpush2.msra.mxu0 0.0
      %4050 = vmatprep.subr.mxu0 0.0
      %4051 = vmatpush2.msra.mxu0 0.0
      %4052 = vmatprep.mubr.f32.mxu0 0.0
      %4053 = vmatmul.mubr.f32.gmra.mxu0 %v3977
      %v4054 = vpop.f32.mrf.mxu0
      %v4055 = vadd.f32 %v3958, %v4054
      %v4056 = vpop.f32.mrf.mxu0
      %4057 = vmatprep.mubr.f32.mxu0 0.0
      %4058 = vmatmul.mubr.f32.gmra.mxu0 %v3980
      %v4059 = vpop.f32.mrf.mxu0
      %v4060 = vadd.f32 %v3963, %v4059
      %v4061 = vpop.f32.mrf.mxu0
      %4062 = vmatprep.mubr.f32.mxu0 0.0
      %4063 = vmatmul.mubr.f32.gmra.mxu0 %v3983
      %v4064 = vpop.f32.mrf.mxu0
      %v4065 = vadd.f32 %v3968, %v4064
      %v4066 = vpop.f32.mrf.mxu0
      %4067 = vmatprep.mubr.f32.mxu0 0.0
      %4068 = vmatmul.mubr.f32.gmra.mxu0 %v3986
      %v4069 = vpop.f32.mrf.mxu0
      %v4070 = vadd.f32 %v3973, %v4069
      %v4071 = vpop.f32.mrf.mxu0
      %4072 = vdwg.mxu0
      %v4073 = vmul.f32 %v4055, 0.5
      %v4074 = vmul.f32 %v4060, 0.5
      %v4075 = vmul.f32 %v4065, 0.5
      %v4076 = vmul.f32 %v4070, 0.5
      %v4077 = vmul.f32 %v4055, 0.70710677
      %v4078 = vmul.f32 %v4060, 0.70710677
      %v4079 = vmul.f32 %v4065, 0.70710677
      %v4080 = vmul.f32 %v4070, 0.70710677
      %v4081 = verf.f32.pop %v4077
      %v4082 = verf.f32.pop %v4078
      %v4083 = verf.f32.pop %v4079
      %v4084 = verf.f32.pop %v4080
      %v4085 = vadd.f32 %v4081, 1.0
      %v4086 = vadd.f32 %v4082, 1.0
      %v4087 = vadd.f32 %v4083, 1.0
      %v4088 = vadd.f32 %v4084, 1.0
      %v4089 = vmul.f32 %v4073, %v4085
      %v4090 = vmul.f32 %v4074, %v4086
      %v4091 = vmul.f32 %v4075, %v4087
      %v4092 = vmul.f32 %v4076, %v4088
      %v4093 = vld [vmem:[%s12] sm:$0xff]
      %v4094 = vld [vmem:[%s13] sm:$0xff]
      %4096 = vset.pattern.permute.xlu0 0
      %4097 = vperm.xlu0 %4096, %v4094
      %v4098 = vpop.permute.xlu0 %4097
      %v4101 = vsel %vm2635, %v4093, 0
      %4103 = vmatprep.subr.mxu0 0.0
      %4104 = vmatpush1.msra.mxu0 0.0
      %4105 = vmatprep.subr.mxu0 0.0
      %4106 = vmatpush1.msra.mxu0 0.0
      %4107 = vmatprep.subr.mxu0 0.0
      %4108 = vmatpush1.msra.mxu0 0.0
      %4109 = vmatprep.subr.mxu0 0.0
      %4110 = vmatpush1.msra.mxu0 0.0
      %4111 = vmatprep.subr.mxu0 0.0
      %4112 = vmatpush1.msra.mxu0 0.0
      %4113 = vmatprep.subr.mxu0 0.0
      %4114 = vmatpush1.msra.mxu0 0.0
      %4115 = vmatprep.subr.mxu0 0.0
      %4116 = vmatpush1.msra.mxu0 0.0
      %4117 = vmatprep.subr.mxu0 0.0
      %4118 = vmatpush1.msra.mxu0 0.0
      %4119 = vmatprep.subr.mxu0 0.0
      %4120 = vmatpush1.msra.mxu0 0.0
      %4121 = vmatprep.subr.mxu0 0.0
      %4122 = vmatpush1.msra.mxu0 0.0
      %4123 = vmatprep.subr.mxu0 0.0
      %4124 = vmatpush1.msra.mxu0 0.0
      %4125 = vmatprep.subr.mxu0 0.0
      %4126 = vmatpush1.msra.mxu0 0.0
      %4127 = vmatprep.subr.mxu0 0.0
      %4128 = vmatpush1.msra.mxu0 %v4092
      %4129 = vmatprep.subr.mxu0 0.0
      %4130 = vmatpush1.msra.mxu0 %v4091
      %4131 = vmatprep.subr.mxu0 0.0
      %4132 = vmatpush1.msra.mxu0 %v4090
      %4133 = vmatprep.subr.mxu0 0.0
      %4134 = vmatpush1.msra.mxu0 %v4089
      %4135 = vmatprep.subr.mxu0 0.0
      %4136 = vmatpush2.msra.mxu0 0.0
      %4137 = vmatprep.subr.mxu0 0.0
      %4138 = vmatpush2.msra.mxu0 0.0
      %4139 = vmatprep.subr.mxu0 0.0
      %4140 = vmatpush2.msra.mxu0 0.0
      %4141 = vmatprep.subr.mxu0 0.0
      %4142 = vmatpush2.msra.mxu0 0.0
      %4143 = vmatprep.subr.mxu0 0.0
      %4144 = vmatpush2.msra.mxu0 0.0
      %4145 = vmatprep.subr.mxu0 0.0
      %4146 = vmatpush2.msra.mxu0 0.0
      %4147 = vmatprep.subr.mxu0 0.0
      %4148 = vmatpush2.msra.mxu0 0.0
      %4149 = vmatprep.subr.mxu0 0.0
      %4150 = vmatpush2.msra.mxu0 0.0
      %4151 = vmatprep.subr.mxu0 0.0
      %4152 = vmatpush2.msra.mxu0 0.0
      %4153 = vmatprep.subr.mxu0 0.0
      %4154 = vmatpush2.msra.mxu0 0.0
      %4155 = vmatprep.subr.mxu0 0.0
      %4156 = vmatpush2.msra.mxu0 0.0
      %4157 = vmatprep.subr.mxu0 0.0
      %4158 = vmatpush2.msra.mxu0 0.0
      %4159 = vmatprep.subr.mxu0 0.0
      %4160 = vmatpush2.msra.mxu0 0.0
      %4161 = vmatprep.subr.mxu0 0.0
      %4162 = vmatpush2.msra.mxu0 0.0
      %4163 = vmatprep.subr.mxu0 0.0
      %4164 = vmatpush2.msra.mxu0 0.0
      %4165 = vmatprep.subr.mxu0 0.0
      %4166 = vmatpush2.msra.mxu0 0.0
      %4167 = vmatprep.mubr.f32.mxu0 0.0
      %4168 = vmatmul.mubr.f32.gmra.mxu0 %v4101
      %v4169 = vpop.f32.mrf.mxu0
      %v4170 = vadd.f32 %v4098, %v4169
      %v4171 = vpop.f32.mrf.mxu0
      %4172 = vdwg.mxu0
      %4173 = vst [vmem:[%s523] sm:$0xff] %v4170
      %p4174 = scmp.lt.s32.totalorder %s29, 1
      %s4175 = scalar_select %p4174, %s29, 1
      %p4176 = scmp.lt.s32.totalorder %s30, 1
      %s4177 = scalar_select %p4176, %s30, 1
      %s4178 = smul.addr %s4175, 2
      %s4179 = sadd.s32 %s4177, %s4178
      %s4180 = smul.addr %s4179, 8
      %s4181 = scalar_lea.vmem %s14, %s4180
      // Predicated region
      $region84: #{simple_transformer_block.1} parent=75 // pred_check
        %p4182 = pneg %p363
      $region85: #{simple_transformer_block.1} parent=75 // pred_check_branch
        %4184 = sbr.rel (%p4182) target = $region87
      $region86: #{simple_transformer_block.1} parent=75 // pred_region
        _
      $region87: #{simple_transformer_block.1} parent=75 // pred_fallthru
        _
    $region76: #{simple_transformer_block.1} parent=5 // pred_fallthru
      _
    %p4185 = scmp.le.s32.totalorder 2, %s20
    // Predicated region
    $region88: #{simple_transformer_block.1} parent=5 // pred_check
      %p4186 = pneg %p4185
    $region89: #{simple_transformer_block.1} parent=5 // pred_check_branch
      %4188 = sbr.rel (%p4186) target = $region91
    $region90: #{simple_transformer_block.1} parent=5 // pred_region
      %s4189 = ssub.s32 %s20, 2
      // Predicated region
      $region92: #{simple_transformer_block.1} parent=90 // pred_check
        %p4190 = pneg %p369
      $region93: #{simple_transformer_block.1} parent=90 // pred_check_branch
        %4192 = sbr.rel (%p4190) target = $region95
      $region94: #{simple_transformer_block.1} parent=90 // pred_region
        %p4193 = scmp.lt.s32.totalorder %s31, 1
        %s4194 = scalar_select %p4193, %s31, 1
        %p4195 = scmp.lt.s32.totalorder %s32, 1
        %s4196 = scalar_select %p4195, %s32, 1
        %s4197 = smul.addr %s4194, 2
        %s4198 = sadd.s32 %s4196, %s4197
        %s4199 = smul.addr %s4198, 8
        %s4200 = scalar_lea.vmem %s14, %s4199
      $region95: #{simple_transformer_block.1} parent=90 // pred_fallthru
        _
    $region91: #{simple_transformer_block.1} parent=5 // pred_fallthru
      _
  $region6: #{simple_transformer_block.1} parent=0 // loop_footer
    %s24 = sadd.s32 1, %s20
  $region7: #{simple_transformer_block.1} parent=0 // loop_footer_branch
    %19 = sbr.rel target = $region3
  $region8: #{simple_transformer_block.1} parent=0 // loop_exit
    _

</llo_original>
